<compile_context>
chip_gen: v7x
topology: tpu7x:2x2x1
jax: 0.10.0
libtpu: 0.0.40
codegen_flags: <defaults>
</compile_context>

<pallas_src>
import jax
import jax.numpy as jnp
from jax import lax
from jax.experimental import pallas as pl
from jax.experimental.pallas import tpu as pltpu

# ----------------- small config, consistent with the module -----------------
BATCH       = 8
N_FEATURES  = 16
VOCAB       = 16          # vocab_size; channel's erased symbol id == VOCAB
EMBED       = 16
HIDDEN      = 32
MAX_LEN     = 6
T_STEPS     = MAX_LEN + 1  # sender appends a forced EOS step
TEMPERATURE = 1.0
LENGTH_COST = 0.01
ERASURE_PR  = 0.1

H3          = 3 * HIDDEN               # 96 (fused gate columns r|z|n)
STEP_LANES  = 64                        # per-step packed output block width
OUT_LANES   = STEP_LANES * (T_STEPS + 1)  # 512 (7 step blocks + 1 stats block)

VMEM_SPEC = pl.BlockSpec(memory_space=pltpu.MemorySpace.VMEM)


def _gru_combine(xg, hg, h):
    """nn.GRUCell combine given precomputed gate pre-activations.

    xg, hg: (B, >=96) f32, lanes [0:H)=r, [H:2H)=z, [2H:3H)=n, biases included
    (bi in xg, bh in hg so that n = tanh(xg_n + r * hg_n) keeps bh_n inside r*(...)).
    """
    H = HIDDEN
    r = jax.nn.sigmoid(xg[:, 0:H] + hg[:, 0:H])
    z = jax.nn.sigmoid(xg[:, H:2 * H] + hg[:, H:2 * H])
    n = jnp.tanh(xg[:, 2 * H:3 * H] + r * hg[:, 2 * H:3 * H])
    return (1.0 - z) * n + z * h


# ------------------- fused sender + channel + receiver + loss ----------------
def game_kernel(x_ref, eflag_ref, w_ref, b_ref, slab_ref):
    B = x_ref.shape[0]
    x = x_ref[...]                               # (B, F) f32
    eflag = eflag_ref[...]                       # (B, T) 0/1 erasure draws

    # ---- static slices of the two packed parameter slabs ----
    # bf16 weight slab (112, 128): rows are contraction dims, cols zero-padded to 128
    w_sa     = w_ref[0:16, :]     # sender agent  Linear(F -> H)      (cols 0:32)
    w_hext_s = w_ref[16:48, :]    # sender  [Wh(96) | Wout(16)]       (cols 0:112)
    w_xsym_s = w_ref[48:64, :]    # sender  s_emb @ s_wi  (V -> 3H)   (cols 0:96)
    w_hext_r = w_ref[64:96, :]    # receiver [Wh(96) | Wout(16)]      (cols 0:112)
    w_xsym_r = w_ref[96:112, :]   # receiver r_emb_v @ r_wi (V -> 3H) (cols 0:96)

    bias = b_ref[...]             # (8, 128) f32
    b_sa     = jnp.broadcast_to(bias[0:1, :], (B, 128))   # sender agent bias
    b_hext_s = jnp.broadcast_to(bias[1:2, :], (B, 128))   # [s_bh | s_bout]
    xg_sos   = jnp.broadcast_to(bias[2:3, :], (B, 128))   # sos @ s_wi + s_bi
    b_xi_s   = jnp.broadcast_to(bias[3:4, :], (B, 128))   # s_bi
    b_hext_r = jnp.broadcast_to(bias[4:5, :], (B, 128))   # [r_bh | r_bout]
    b_xi_r   = jnp.broadcast_to(bias[5:6, :], (B, 128))   # r_bi
    w_xerase = jnp.broadcast_to(bias[6:7, :], (B, 128))   # r_emb_x @ r_wi

    def mm(a, w):  # bf16 MXU operands, f32 accumulation
        return jnp.dot(a.astype(jnp.bfloat16), w, preferred_element_type=jnp.float32)

    # ---------------- sender: GRU unroll -> relaxed message -----------------
    hs = (mm(x, w_sa) + b_sa)[:, 0:HIDDEN]               # agent(x): initial hidden
    hg = mm(hs, w_hext_s) + b_hext_s                     # h-gates for step 0 (head lanes unused)
    xg = xg_sos                                          # x-gates from the sos embedding
    inv_tau = 1.0 / TEMPERATURE
    syms = []
    for t in range(MAX_LEN):
        hs = _gru_combine(xg, hg, hs)                    # GRU step t
        hext = mm(hs, w_hext_s) + b_hext_s               # fused: next h-gates + head logits
        hg = hext
        logits = hext[:, H3:H3 + VOCAB] * inv_tau
        # TODO(synk): Gumbel noise of gumbel_softmax omitted for determinism;
        # this is the tau-softmax relaxation of the sender.
        m = jnp.max(logits, axis=-1, keepdims=True)
        p = jnp.exp(logits - m)
        sym = p * pl.reciprocal(jnp.sum(p, axis=-1, keepdims=True), approx=True)
        syms.append(sym)
        if t + 1 < MAX_LEN:
            xg = mm(sym, w_xsym_s) + b_xi_s              # folded embedding + x-gates
    # forced EOS one-hot at symbol 0 (RnnSenderGS appends it)
    col = lax.broadcasted_iota(jnp.int32, (B, VOCAB), 1)
    syms.append((col == 0).astype(jnp.float32))

    # -------- erasure channel + receiver GRU + per-step game loss -----------
    hr = jnp.zeros((B, HIDDEN), jnp.float32)
    hg_r = b_hext_r                                      # hr == 0  =>  h-gates == bh
    not_eosed = jnp.ones((B, 1), jnp.float32)
    loss_acc = jnp.zeros((B, 1), jnp.float32)
    exp_len = jnp.zeros((B, 1), jnp.float32)
    zmass = jnp.zeros((B, 1), jnp.float32)
    step_loss = jnp.zeros((B, 1), jnp.float32)
    pad_step = jnp.zeros((B, STEP_LANES - (VOCAB + 1 + N_FEATURES)), jnp.float32)

    for t in range(T_STEPS):
        sym = syms[t]
        # channel: with prob p (and when not an exact EOS one-hot) replace the
        # symbol with the one-hot "erased" symbol (extra vocab column V).
        c = eflag[:, t:t + 1] * jnp.where(sym[:, 0:1] != 1.0, 1.0, 0.0)
        ch_v = sym * (1.0 - c)                           # first V columns of channel msg
        # receiver x-gates with the (V+1)-wide embedding folded into r_wi
        xg_r = mm(ch_v, w_xsym_r) + c * w_xerase + b_xi_r
        hr = _gru_combine(xg_r, hg_r, hr)
        hext = mm(hr, w_hext_r) + b_hext_r               # fused: next h-gates + agent head
        hg_r = hext
        out = hext[:, H3:H3 + N_FEATURES]                # receiver reconstruction

        # loss = MSE over features, accumulated at the first EOS step
        step_loss = jnp.sum((x - out) ** 2, axis=-1, keepdims=True) * (1.0 / N_FEATURES)
        eos_mask = ch_v[:, 0:1]                          # == channel message[:, t, 0]
        add_mask = eos_mask * not_eosed
        zmass = zmass + add_mask
        loss_acc = loss_acc + (step_loss + LENGTH_COST * (1.0 + t)) * add_mask
        exp_len = exp_len + add_mask * (1.0 + t)
        not_eosed = not_eosed * (1.0 - eos_mask)

        # lane-dense packed per-step block: [ch_v(16) | c(1) | out(16) | pad]
        blk = jnp.concatenate([ch_v, c, out, pad_step], axis=-1)        # (B, 64)
        slab_ref[:, t * STEP_LANES:(t + 1) * STEP_LANES] = blk

    # tail term (torch code's `step` == T-1 after the python loop)
    loss_acc = loss_acc + (step_loss + LENGTH_COST * float(T_STEPS)) * not_eosed
    exp_len = exp_len + float(T_STEPS) * not_eosed
    zmass = zmass + not_eosed

    pad_stats = jnp.zeros((B, STEP_LANES - 3), jnp.float32)
    slab_ref[:, T_STEPS * STEP_LANES:(T_STEPS + 1) * STEP_LANES] = jnp.concatenate(
        [loss_acc, exp_len, zmass, pad_stats], axis=-1)


def run_game_kernel(packed, x, erase_flag):
    B = x.shape[0]
    return pl.pallas_call(
        game_kernel,
        out_shape=jax.ShapeDtypeStruct((B, OUT_LANES), jnp.float32),
        in_specs=[VMEM_SPEC] * 4,
        out_specs=VMEM_SPEC,
        # No grid: single TensorCore is optimal at this size (see review).
    )(x, erase_flag, packed["wslab"], packed["bslab"])


# ------------------------------ full forward ---------------------------------
def game_forward(packed, sender_input, channel_key, apply_noise=True):
    B = sender_input.shape[0]
    if ERASURE_PR != 0.0 and apply_noise:
        erase_flag = (jax.random.uniform(channel_key, (B, T_STEPS))
                      < ERASURE_PR).astype(jnp.float32)
    else:
        erase_flag = jnp.zeros((B, T_STEPS), jnp.float32)

    slab = run_game_kernel(packed, sender_input, erase_flag)     # (B, 512)

    # pure reshape + static slices: no transpose / concat launches
    blocks = slab.reshape(B, T_STEPS + 1, STEP_LANES)
    message = blocks[:, :T_STEPS, 0:VOCAB + 1]                   # (B, T, V+1)
    receiver_output = blocks[:, :T_STEPS, VOCAB + 1:VOCAB + 1 + N_FEATURES]
    loss_b = blocks[:, T_STEPS, 0]
    exp_len = blocks[:, T_STEPS, 1]
    zmass = blocks[:, T_STEPS, 2]

    loss = jnp.mean(loss_b)
    # RnnReceiverReinforce: agent returns (sample, logits, entropy).  The
    # reconstruction agent here is deterministic.
    # TODO(synk): REINFORCE sampling / log-prob / entropy not implemented.
    interaction = {
        "sender_input": sender_input,
        "message": message,
        "receiver_output": receiver_output,
        "receiver_sample": receiver_output,
        "receiver_logits": jnp.zeros((B,), jnp.float32),
        "receiver_entropy": jnp.zeros((B,), jnp.float32),
        "message_length": exp_len,
        "length": exp_len,
        "z": zmass,
    }
    return loss, interaction


# ------------------------- deterministic parameters --------------------------
def init_params(key):
    ks = jax.random.split(key, 16)
    s = 0.1
    p = {
        # sender: agent Linear(F->H), sos embedding, GRUCell(E,H) with fused
        # gate weights (columns [0:H]=r, [H:2H]=z, [2H:3H]=n), hidden->vocab,
        # vocab->embed
        "s_wa":   s * jax.random.normal(ks[0], (N_FEATURES, HIDDEN), jnp.float32),
        "s_ba":   jnp.zeros((1, HIDDEN), jnp.float32),
        "s_sos":  s * jax.random.normal(ks[1], (1, EMBED), jnp.float32),
        "s_wi":   s * jax.random.normal(ks[2], (EMBED, H3), jnp.float32),
        "s_wh":   s * jax.random.normal(ks[3], (HIDDEN, H3), jnp.float32),
        "s_bi":   jnp.zeros((1, H3), jnp.float32),
        "s_bh":   jnp.zeros((1, H3), jnp.float32),
        "s_wout": s * jax.random.normal(ks[4], (HIDDEN, VOCAB), jnp.float32),
        "s_bout": jnp.zeros((1, VOCAB), jnp.float32),
        "s_emb":  s * jax.random.normal(ks[5], (VOCAB, EMBED), jnp.float32),
        # receiver: embedding Linear(V+1 -> E) split into V "real" rows and the
        # erased-symbol row, GRUCell(E,H) with fused gates, agent Linear(H->F)
        "r_emb_v": s * jax.random.normal(ks[6], (VOCAB, EMBED), jnp.float32),
        "r_emb_x": s * jax.random.normal(ks[10], (1, EMBED), jnp.float32),
        "r_wi":   s * jax.random.normal(ks[7], (EMBED, H3), jnp.float32),
        "r_wh":   s * jax.random.normal(ks[8], (HIDDEN, H3), jnp.float32),
        "r_bi":   jnp.zeros((1, H3), jnp.float32),
        "r_bh":   jnp.zeros((1, H3), jnp.float32),
        "r_wout": s * jax.random.normal(ks[9], (HIDDEN, N_FEATURES), jnp.float32),
        "r_bout": jnp.zeros((1, N_FEATURES), jnp.float32),
    }
    return p


def pack_params(p):
    """Algebraic folds + packing into 2 kernel slabs (done once, outside jit)."""
    # fold output-embedding into the x-gate weights (sender) and the receiver
    # (V+1)-wide embedding into its x-gate weights
    s_wsym = p["s_emb"] @ p["s_wi"]                                   # (V, 3H)
    xg0    = p["s_sos"] @ p["s_wi"] + p["s_bi"]                       # (1, 3H)
    r_wsym = p["r_emb_v"] @ p["r_wi"]                                 # (V, 3H)
    r_wx   = p["r_emb_x"] @ p["r_wi"]                                 # (1, 3H)
    # fuse head with h-gate weights (shared LHS = new hidden state)
    w_hext_s = jnp.concatenate([p["s_wh"], p["s_wout"]], axis=1)      # (H, 112)
    w_hext_r = jnp.concatenate([p["r_wh"], p["r_wout"]], axis=1)      # (H, 112)
    b_hext_s = jnp.concatenate([p["s_bh"], p["s_bout"]], axis=1)      # (1, 112)
    b_hext_r = jnp.concatenate([p["r_bh"], p["r_bout"]], axis=1)      # (1, 112)

    def pad128(a):
        return jnp.pad(a, ((0, 0), (0, 128 - a.shape[1])))

    wslab = jnp.concatenate([
        pad128(p["s_wa"]),      # rows   0:16
        pad128(w_hext_s),       # rows  16:48
        pad128(s_wsym),         # rows  48:64
        pad128(w_hext_r),       # rows  64:96
        pad128(r_wsym),         # rows  96:112
    ], axis=0).astype(jnp.bfloat16)                                   # (112, 128)

    bslab = jnp.concatenate([
        pad128(p["s_ba"]),                                            # row 0
        pad128(b_hext_s),                                             # row 1
        pad128(xg0),                                                  # row 2
        pad128(p["s_bi"]),                                            # row 3
        pad128(b_hext_r),                                             # row 4
        pad128(p["r_bi"]),                                            # row 5
        pad128(r_wx),                                                 # row 6
        jnp.zeros((1, 128), jnp.float32),                             # row 7
    ], axis=0).astype(jnp.float32)                                    # (8, 128)

    return {"wslab": wslab, "bslab": bslab}


if __name__ == "__main__":
    root = jax.random.PRNGKey(0)
    k_params, k_x, k_channel = jax.random.split(root, 3)
    params = init_params(k_params)
    packed = pack_params(params)
    sender_input = jax.random.normal(k_x, (BATCH, N_FEATURES), jnp.float32)

    loss, interaction = jax.jit(game_forward)(packed, sender_input, k_channel)
    loss = jax.block_until_ready(loss)
    interaction = jax.block_until_ready(interaction)

    # mirrors the torch assert: no probability mass lost
    assert bool(jnp.allclose(interaction["z"], jnp.ones_like(interaction["z"]), atol=1e-5)), (
        f"lost probability mass: {interaction['z']}")
    assert loss.shape == () and bool(jnp.isfinite(loss))
    assert interaction["receiver_output"].shape == (BATCH, T_STEPS, N_FEATURES)
    assert interaction["message"].shape == (BATCH, T_STEPS, VOCAB + 1)

    print("KERNEL_OK")
</pallas_src>

<mosaic_0001>
module attributes {stable_mosaic.version = 11 : i64} {
  func.func @game_kernel(%arg0: memref<8x16xf32, #tpu.memory_space<vmem>>, %arg1: memref<8x7xf32, #tpu.memory_space<vmem>>, %arg2: memref<112x128xbf16, #tpu.memory_space<vmem>>, %arg3: memref<8x128xf32, #tpu.memory_space<vmem>>, %arg4: memref<8x512xf32, #tpu.memory_space<vmem>>) attributes {dimension_semantics = [], scalar_prefetch = 0 : i64, scratch_operands = 0 : i64, tpu.core_type = #tpu.core_type<tc>} {
    %c0 = arith.constant 0 : index
    %c0_0 = arith.constant 0 : index
    %0 = vector.load %arg0[%c0, %c0_0] : memref<8x16xf32, #tpu.memory_space<vmem>>, vector<8x16xf32>
    %c0_1 = arith.constant 0 : index
    %c0_2 = arith.constant 0 : index
    %1 = vector.load %arg1[%c0_1, %c0_2] : memref<8x7xf32, #tpu.memory_space<vmem>>, vector<8x7xf32>
    %c0_3 = arith.constant 0 : index
    %c0_4 = arith.constant 0 : index
    %2 = vector.load %arg2[%c0_3, %c0_4] : memref<112x128xbf16, #tpu.memory_space<vmem>>, vector<16x128xbf16>
    %c16 = arith.constant 16 : index
    %c0_5 = arith.constant 0 : index
    %3 = vector.load %arg2[%c16, %c0_5] : memref<112x128xbf16, #tpu.memory_space<vmem>>, vector<32x128xbf16>
    %c48 = arith.constant 48 : index
    %c0_6 = arith.constant 0 : index
    %4 = vector.load %arg2[%c48, %c0_6] : memref<112x128xbf16, #tpu.memory_space<vmem>>, vector<16x128xbf16>
    %c64 = arith.constant 64 : index
    %c0_7 = arith.constant 0 : index
    %5 = vector.load %arg2[%c64, %c0_7] : memref<112x128xbf16, #tpu.memory_space<vmem>>, vector<32x128xbf16>
    %c96 = arith.constant 96 : index
    %c0_8 = arith.constant 0 : index
    %6 = vector.load %arg2[%c96, %c0_8] : memref<112x128xbf16, #tpu.memory_space<vmem>>, vector<16x128xbf16>
    %c0_9 = arith.constant 0 : index
    %c0_10 = arith.constant 0 : index
    %7 = vector.load %arg3[%c0_9, %c0_10] : memref<8x128xf32, #tpu.memory_space<vmem>>, vector<8x128xf32>
    %8 = vector.extract_strided_slice %7 {offsets = [0, 0], sizes = [1, 128], strides = [1, 1]} : vector<8x128xf32> to vector<1x128xf32>
    %9 = vector.shape_cast %8 : vector<1x128xf32> to vector<1x128xf32>
    %10 = vector.broadcast %9 : vector<1x128xf32> to vector<8x128xf32>
    %11 = vector.extract_strided_slice %7 {offsets = [1, 0], sizes = [1, 128], strides = [1, 1]} : vector<8x128xf32> to vector<1x128xf32>
    %12 = vector.shape_cast %11 : vector<1x128xf32> to vector<1x128xf32>
    %13 = vector.broadcast %12 : vector<1x128xf32> to vector<8x128xf32>
    %14 = vector.extract_strided_slice %7 {offsets = [2, 0], sizes = [1, 128], strides = [1, 1]} : vector<8x128xf32> to vector<1x128xf32>
    %15 = vector.shape_cast %14 : vector<1x128xf32> to vector<1x128xf32>
    %16 = vector.broadcast %15 : vector<1x128xf32> to vector<8x128xf32>
    %17 = vector.extract_strided_slice %7 {offsets = [3, 0], sizes = [1, 128], strides = [1, 1]} : vector<8x128xf32> to vector<1x128xf32>
    %18 = vector.shape_cast %17 : vector<1x128xf32> to vector<1x128xf32>
    %19 = vector.broadcast %18 : vector<1x128xf32> to vector<8x128xf32>
    %20 = vector.extract_strided_slice %7 {offsets = [4, 0], sizes = [1, 128], strides = [1, 1]} : vector<8x128xf32> to vector<1x128xf32>
    %21 = vector.shape_cast %20 : vector<1x128xf32> to vector<1x128xf32>
    %22 = vector.broadcast %21 : vector<1x128xf32> to vector<8x128xf32>
    %23 = vector.extract_strided_slice %7 {offsets = [5, 0], sizes = [1, 128], strides = [1, 1]} : vector<8x128xf32> to vector<1x128xf32>
    %24 = vector.shape_cast %23 : vector<1x128xf32> to vector<1x128xf32>
    %25 = vector.broadcast %24 : vector<1x128xf32> to vector<8x128xf32>
    %26 = vector.extract_strided_slice %7 {offsets = [6, 0], sizes = [1, 128], strides = [1, 1]} : vector<8x128xf32> to vector<1x128xf32>
    %27 = vector.shape_cast %26 : vector<1x128xf32> to vector<1x128xf32>
    %28 = vector.broadcast %27 : vector<1x128xf32> to vector<8x128xf32>
    %29 = arith.truncf %0 : vector<8x16xf32> to vector<8x16xbf16>
    %cst = arith.constant dense<0.000000e+00> : vector<8x128xf32>
    %30 = tpu.matmul %29, %2, %cst {dimension_numbers = #tpu.dot_dimension_numbers<[1], [0], [0], [1], [0, 0, 1, 1], [], []>} : vector<8x16xbf16>, vector<16x128xbf16>, vector<8x128xf32> -> vector<8x128xf32>
    %31 = arith.addf %30, %10 : vector<8x128xf32>
    %32 = vector.extract_strided_slice %31 {offsets = [0, 0], sizes = [8, 32], strides = [1, 1]} : vector<8x128xf32> to vector<8x32xf32>
    %33 = arith.truncf %32 : vector<8x32xf32> to vector<8x32xbf16>
    %cst_11 = arith.constant dense<0.000000e+00> : vector<8x128xf32>
    %34 = tpu.matmul %33, %3, %cst_11 {dimension_numbers = #tpu.dot_dimension_numbers<[1], [0], [0], [1], [0, 0, 1, 1], [], []>} : vector<8x32xbf16>, vector<32x128xbf16>, vector<8x128xf32> -> vector<8x128xf32>
    %35 = arith.addf %34, %13 : vector<8x128xf32>
    %36 = vector.extract_strided_slice %16 {offsets = [0, 0], sizes = [8, 32], strides = [1, 1]} : vector<8x128xf32> to vector<8x32xf32>
    %37 = vector.extract_strided_slice %35 {offsets = [0, 0], sizes = [8, 32], strides = [1, 1]} : vector<8x128xf32> to vector<8x32xf32>
    %38 = arith.addf %36, %37 : vector<8x32xf32>
    %39 = arith.negf %38 : vector<8x32xf32>
    %40 = math.exp %39 : vector<8x32xf32>
    %cst_12 = arith.constant 1.000000e+00 : f32
    %41 = vector.broadcast %cst_12 : f32 to vector<8x32xf32>
    %42 = arith.addf %41, %40 : vector<8x32xf32>
    %43 = arith.divf %41, %42 : vector<8x32xf32>
    %44 = vector.extract_strided_slice %16 {offsets = [0, 32], sizes = [8, 32], strides = [1, 1]} : vector<8x128xf32> to vector<8x32xf32>
    %45 = vector.extract_strided_slice %35 {offsets = [0, 32], sizes = [8, 32], strides = [1, 1]} : vector<8x128xf32> to vector<8x32xf32>
    %46 = arith.addf %44, %45 : vector<8x32xf32>
    %47 = arith.negf %46 : vector<8x32xf32>
    %48 = math.exp %47 : vector<8x32xf32>
    %cst_13 = arith.constant 1.000000e+00 : f32
    %49 = vector.broadcast %cst_13 : f32 to vector<8x32xf32>
    %50 = arith.addf %49, %48 : vector<8x32xf32>
    %51 = arith.divf %49, %50 : vector<8x32xf32>
    %52 = vector.extract_strided_slice %16 {offsets = [0, 64], sizes = [8, 32], strides = [1, 1]} : vector<8x128xf32> to vector<8x32xf32>
    %53 = vector.extract_strided_slice %35 {offsets = [0, 64], sizes = [8, 32], strides = [1, 1]} : vector<8x128xf32> to vector<8x32xf32>
    %54 = arith.mulf %43, %53 : vector<8x32xf32>
    %55 = arith.addf %52, %54 : vector<8x32xf32>
    %56 = math.tanh %55 : vector<8x32xf32>
    %cst_14 = arith.constant 1.000000e+00 : f32
    %57 = vector.broadcast %cst_14 : f32 to vector<8x32xf32>
    %58 = arith.subf %57, %51 : vector<8x32xf32>
    %59 = arith.mulf %58, %56 : vector<8x32xf32>
    %60 = arith.mulf %51, %32 : vector<8x32xf32>
    %61 = arith.addf %59, %60 : vector<8x32xf32>
    %62 = arith.truncf %61 : vector<8x32xf32> to vector<8x32xbf16>
    %cst_15 = arith.constant dense<0.000000e+00> : vector<8x128xf32>
    %63 = tpu.matmul %62, %3, %cst_15 {dimension_numbers = #tpu.dot_dimension_numbers<[1], [0], [0], [1], [0, 0, 1, 1], [], []>} : vector<8x32xbf16>, vector<32x128xbf16>, vector<8x128xf32> -> vector<8x128xf32>
    %64 = arith.addf %63, %13 : vector<8x128xf32>
    %65 = vector.extract_strided_slice %64 {offsets = [0, 96], sizes = [8, 16], strides = [1, 1]} : vector<8x128xf32> to vector<8x16xf32>
    %cst_16 = arith.constant 1.000000e+00 : f32
    %66 = vector.broadcast %cst_16 : f32 to vector<8x16xf32>
    %67 = arith.mulf %65, %66 : vector<8x16xf32>
    %cst_17 = arith.constant dense<0xFF800000> : vector<8xf32>
    %68 = vector.multi_reduction <maximumf>, %67, %cst_17 [1] : vector<8x16xf32> to vector<8xf32>
    %69 = vector.shape_cast %68 : vector<8xf32> to vector<8x1xf32>
    %70 = vector.broadcast %69 : vector<8x1xf32> to vector<8x16xf32>
    %71 = arith.subf %67, %70 : vector<8x16xf32>
    %72 = math.exp %71 : vector<8x16xf32>
    %cst_18 = arith.constant dense<0.000000e+00> : vector<8xf32>
    %73 = vector.multi_reduction <add>, %72, %cst_18 [1] : vector<8x16xf32> to vector<8xf32>
    %74 = vector.shape_cast %73 : vector<8xf32> to vector<8x1xf32>
    %75 = tpu.reciprocal %74 {approx = true} : vector<8x1xf32> -> vector<8x1xf32>
    %76 = vector.broadcast %75 : vector<8x1xf32> to vector<8x16xf32>
    %77 = arith.mulf %72, %76 : vector<8x16xf32>
    %78 = arith.truncf %77 : vector<8x16xf32> to vector<8x16xbf16>
    %cst_19 = arith.constant dense<0.000000e+00> : vector<8x128xf32>
    %79 = tpu.matmul %78, %4, %cst_19 {dimension_numbers = #tpu.dot_dimension_numbers<[1], [0], [0], [1], [0, 0, 1, 1], [], []>} : vector<8x16xbf16>, vector<16x128xbf16>, vector<8x128xf32> -> vector<8x128xf32>
    %80 = arith.addf %79, %19 : vector<8x128xf32>
    %81 = vector.extract_strided_slice %80 {offsets = [0, 0], sizes = [8, 32], strides = [1, 1]} : vector<8x128xf32> to vector<8x32xf32>
    %82 = vector.extract_strided_slice %64 {offsets = [0, 0], sizes = [8, 32], strides = [1, 1]} : vector<8x128xf32> to vector<8x32xf32>
    %83 = arith.addf %81, %82 : vector<8x32xf32>
    %84 = arith.negf %83 : vector<8x32xf32>
    %85 = math.exp %84 : vector<8x32xf32>
    %cst_20 = arith.constant 1.000000e+00 : f32
    %86 = vector.broadcast %cst_20 : f32 to vector<8x32xf32>
    %87 = arith.addf %86, %85 : vector<8x32xf32>
    %88 = arith.divf %86, %87 : vector<8x32xf32>
    %89 = vector.extract_strided_slice %80 {offsets = [0, 32], sizes = [8, 32], strides = [1, 1]} : vector<8x128xf32> to vector<8x32xf32>
    %90 = vector.extract_strided_slice %64 {offsets = [0, 32], sizes = [8, 32], strides = [1, 1]} : vector<8x128xf32> to vector<8x32xf32>
    %91 = arith.addf %89, %90 : vector<8x32xf32>
    %92 = arith.negf %91 : vector<8x32xf32>
    %93 = math.exp %92 : vector<8x32xf32>
    %cst_21 = arith.constant 1.000000e+00 : f32
    %94 = vector.broadcast %cst_21 : f32 to vector<8x32xf32>
    %95 = arith.addf %94, %93 : vector<8x32xf32>
    %96 = arith.divf %94, %95 : vector<8x32xf32>
    %97 = vector.extract_strided_slice %80 {offsets = [0, 64], sizes = [8, 32], strides = [1, 1]} : vector<8x128xf32> to vector<8x32xf32>
    %98 = vector.extract_strided_slice %64 {offsets = [0, 64], sizes = [8, 32], strides = [1, 1]} : vector<8x128xf32> to vector<8x32xf32>
    %99 = arith.mulf %88, %98 : vector<8x32xf32>
    %100 = arith.addf %97, %99 : vector<8x32xf32>
    %101 = math.tanh %100 : vector<8x32xf32>
    %cst_22 = arith.constant 1.000000e+00 : f32
    %102 = vector.broadcast %cst_22 : f32 to vector<8x32xf32>
    %103 = arith.subf %102, %96 : vector<8x32xf32>
    %104 = arith.mulf %103, %101 : vector<8x32xf32>
    %105 = arith.mulf %96, %61 : vector<8x32xf32>
    %106 = arith.addf %104, %105 : vector<8x32xf32>
    %107 = arith.truncf %106 : vector<8x32xf32> to vector<8x32xbf16>
    %cst_23 = arith.constant dense<0.000000e+00> : vector<8x128xf32>
    %108 = tpu.matmul %107, %3, %cst_23 {dimension_numbers = #tpu.dot_dimension_numbers<[1], [0], [0], [1], [0, 0, 1, 1], [], []>} : vector<8x32xbf16>, vector<32x128xbf16>, vector<8x128xf32> -> vector<8x128xf32>
    %109 = arith.addf %108, %13 : vector<8x128xf32>
    %110 = vector.extract_strided_slice %109 {offsets = [0, 96], sizes = [8, 16], strides = [1, 1]} : vector<8x128xf32> to vector<8x16xf32>
    %cst_24 = arith.constant 1.000000e+00 : f32
    %111 = vector.broadcast %cst_24 : f32 to vector<8x16xf32>
    %112 = arith.mulf %110, %111 : vector<8x16xf32>
    %cst_25 = arith.constant dense<0xFF800000> : vector<8xf32>
    %113 = vector.multi_reduction <maximumf>, %112, %cst_25 [1] : vector<8x16xf32> to vector<8xf32>
    %114 = vector.shape_cast %113 : vector<8xf32> to vector<8x1xf32>
    %115 = vector.broadcast %114 : vector<8x1xf32> to vector<8x16xf32>
    %116 = arith.subf %112, %115 : vector<8x16xf32>
    %117 = math.exp %116 : vector<8x16xf32>
    %cst_26 = arith.constant dense<0.000000e+00> : vector<8xf32>
    %118 = vector.multi_reduction <add>, %117, %cst_26 [1] : vector<8x16xf32> to vector<8xf32>
    %119 = vector.shape_cast %118 : vector<8xf32> to vector<8x1xf32>
    %120 = tpu.reciprocal %119 {approx = true} : vector<8x1xf32> -> vector<8x1xf32>
    %121 = vector.broadcast %120 : vector<8x1xf32> to vector<8x16xf32>
    %122 = arith.mulf %117, %121 : vector<8x16xf32>
    %123 = arith.truncf %122 : vector<8x16xf32> to vector<8x16xbf16>
    %cst_27 = arith.constant dense<0.000000e+00> : vector<8x128xf32>
    %124 = tpu.matmul %123, %4, %cst_27 {dimension_numbers = #tpu.dot_dimension_numbers<[1], [0], [0], [1], [0, 0, 1, 1], [], []>} : vector<8x16xbf16>, vector<16x128xbf16>, vector<8x128xf32> -> vector<8x128xf32>
    %125 = arith.addf %124, %19 : vector<8x128xf32>
    %126 = vector.extract_strided_slice %125 {offsets = [0, 0], sizes = [8, 32], strides = [1, 1]} : vector<8x128xf32> to vector<8x32xf32>
    %127 = vector.extract_strided_slice %109 {offsets = [0, 0], sizes = [8, 32], strides = [1, 1]} : vector<8x128xf32> to vector<8x32xf32>
    %128 = arith.addf %126, %127 : vector<8x32xf32>
    %129 = arith.negf %128 : vector<8x32xf32>
    %130 = math.exp %129 : vector<8x32xf32>
    %cst_28 = arith.constant 1.000000e+00 : f32
    %131 = vector.broadcast %cst_28 : f32 to vector<8x32xf32>
    %132 = arith.addf %131, %130 : vector<8x32xf32>
    %133 = arith.divf %131, %132 : vector<8x32xf32>
    %134 = vector.extract_strided_slice %125 {offsets = [0, 32], sizes = [8, 32], strides = [1, 1]} : vector<8x128xf32> to vector<8x32xf32>
    %135 = vector.extract_strided_slice %109 {offsets = [0, 32], sizes = [8, 32], strides = [1, 1]} : vector<8x128xf32> to vector<8x32xf32>
    %136 = arith.addf %134, %135 : vector<8x32xf32>
    %137 = arith.negf %136 : vector<8x32xf32>
    %138 = math.exp %137 : vector<8x32xf32>
    %cst_29 = arith.constant 1.000000e+00 : f32
    %139 = vector.broadcast %cst_29 : f32 to vector<8x32xf32>
    %140 = arith.addf %139, %138 : vector<8x32xf32>
    %141 = arith.divf %139, %140 : vector<8x32xf32>
    %142 = vector.extract_strided_slice %125 {offsets = [0, 64], sizes = [8, 32], strides = [1, 1]} : vector<8x128xf32> to vector<8x32xf32>
    %143 = vector.extract_strided_slice %109 {offsets = [0, 64], sizes = [8, 32], strides = [1, 1]} : vector<8x128xf32> to vector<8x32xf32>
    %144 = arith.mulf %133, %143 : vector<8x32xf32>
    %145 = arith.addf %142, %144 : vector<8x32xf32>
    %146 = math.tanh %145 : vector<8x32xf32>
    %cst_30 = arith.constant 1.000000e+00 : f32
    %147 = vector.broadcast %cst_30 : f32 to vector<8x32xf32>
    %148 = arith.subf %147, %141 : vector<8x32xf32>
    %149 = arith.mulf %148, %146 : vector<8x32xf32>
    %150 = arith.mulf %141, %106 : vector<8x32xf32>
    %151 = arith.addf %149, %150 : vector<8x32xf32>
    %152 = arith.truncf %151 : vector<8x32xf32> to vector<8x32xbf16>
    %cst_31 = arith.constant dense<0.000000e+00> : vector<8x128xf32>
    %153 = tpu.matmul %152, %3, %cst_31 {dimension_numbers = #tpu.dot_dimension_numbers<[1], [0], [0], [1], [0, 0, 1, 1], [], []>} : vector<8x32xbf16>, vector<32x128xbf16>, vector<8x128xf32> -> vector<8x128xf32>
    %154 = arith.addf %153, %13 : vector<8x128xf32>
    %155 = vector.extract_strided_slice %154 {offsets = [0, 96], sizes = [8, 16], strides = [1, 1]} : vector<8x128xf32> to vector<8x16xf32>
    %cst_32 = arith.constant 1.000000e+00 : f32
    %156 = vector.broadcast %cst_32 : f32 to vector<8x16xf32>
    %157 = arith.mulf %155, %156 : vector<8x16xf32>
    %cst_33 = arith.constant dense<0xFF800000> : vector<8xf32>
    %158 = vector.multi_reduction <maximumf>, %157, %cst_33 [1] : vector<8x16xf32> to vector<8xf32>
    %159 = vector.shape_cast %158 : vector<8xf32> to vector<8x1xf32>
    %160 = vector.broadcast %159 : vector<8x1xf32> to vector<8x16xf32>
    %161 = arith.subf %157, %160 : vector<8x16xf32>
    %162 = math.exp %161 : vector<8x16xf32>
    %cst_34 = arith.constant dense<0.000000e+00> : vector<8xf32>
    %163 = vector.multi_reduction <add>, %162, %cst_34 [1] : vector<8x16xf32> to vector<8xf32>
    %164 = vector.shape_cast %163 : vector<8xf32> to vector<8x1xf32>
    %165 = tpu.reciprocal %164 {approx = true} : vector<8x1xf32> -> vector<8x1xf32>
    %166 = vector.broadcast %165 : vector<8x1xf32> to vector<8x16xf32>
    %167 = arith.mulf %162, %166 : vector<8x16xf32>
    %168 = arith.truncf %167 : vector<8x16xf32> to vector<8x16xbf16>
    %cst_35 = arith.constant dense<0.000000e+00> : vector<8x128xf32>
    %169 = tpu.matmul %168, %4, %cst_35 {dimension_numbers = #tpu.dot_dimension_numbers<[1], [0], [0], [1], [0, 0, 1, 1], [], []>} : vector<8x16xbf16>, vector<16x128xbf16>, vector<8x128xf32> -> vector<8x128xf32>
    %170 = arith.addf %169, %19 : vector<8x128xf32>
    %171 = vector.extract_strided_slice %170 {offsets = [0, 0], sizes = [8, 32], strides = [1, 1]} : vector<8x128xf32> to vector<8x32xf32>
    %172 = vector.extract_strided_slice %154 {offsets = [0, 0], sizes = [8, 32], strides = [1, 1]} : vector<8x128xf32> to vector<8x32xf32>
    %173 = arith.addf %171, %172 : vector<8x32xf32>
    %174 = arith.negf %173 : vector<8x32xf32>
    %175 = math.exp %174 : vector<8x32xf32>
    %cst_36 = arith.constant 1.000000e+00 : f32
    %176 = vector.broadcast %cst_36 : f32 to vector<8x32xf32>
    %177 = arith.addf %176, %175 : vector<8x32xf32>
    %178 = arith.divf %176, %177 : vector<8x32xf32>
    %179 = vector.extract_strided_slice %170 {offsets = [0, 32], sizes = [8, 32], strides = [1, 1]} : vector<8x128xf32> to vector<8x32xf32>
    %180 = vector.extract_strided_slice %154 {offsets = [0, 32], sizes = [8, 32], strides = [1, 1]} : vector<8x128xf32> to vector<8x32xf32>
    %181 = arith.addf %179, %180 : vector<8x32xf32>
    %182 = arith.negf %181 : vector<8x32xf32>
    %183 = math.exp %182 : vector<8x32xf32>
    %cst_37 = arith.constant 1.000000e+00 : f32
    %184 = vector.broadcast %cst_37 : f32 to vector<8x32xf32>
    %185 = arith.addf %184, %183 : vector<8x32xf32>
    %186 = arith.divf %184, %185 : vector<8x32xf32>
    %187 = vector.extract_strided_slice %170 {offsets = [0, 64], sizes = [8, 32], strides = [1, 1]} : vector<8x128xf32> to vector<8x32xf32>
    %188 = vector.extract_strided_slice %154 {offsets = [0, 64], sizes = [8, 32], strides = [1, 1]} : vector<8x128xf32> to vector<8x32xf32>
    %189 = arith.mulf %178, %188 : vector<8x32xf32>
    %190 = arith.addf %187, %189 : vector<8x32xf32>
    %191 = math.tanh %190 : vector<8x32xf32>
    %cst_38 = arith.constant 1.000000e+00 : f32
    %192 = vector.broadcast %cst_38 : f32 to vector<8x32xf32>
    %193 = arith.subf %192, %186 : vector<8x32xf32>
    %194 = arith.mulf %193, %191 : vector<8x32xf32>
    %195 = arith.mulf %186, %151 : vector<8x32xf32>
    %196 = arith.addf %194, %195 : vector<8x32xf32>
    %197 = arith.truncf %196 : vector<8x32xf32> to vector<8x32xbf16>
    %cst_39 = arith.constant dense<0.000000e+00> : vector<8x128xf32>
    %198 = tpu.matmul %197, %3, %cst_39 {dimension_numbers = #tpu.dot_dimension_numbers<[1], [0], [0], [1], [0, 0, 1, 1], [], []>} : vector<8x32xbf16>, vector<32x128xbf16>, vector<8x128xf32> -> vector<8x128xf32>
    %199 = arith.addf %198, %13 : vector<8x128xf32>
    %200 = vector.extract_strided_slice %199 {offsets = [0, 96], sizes = [8, 16], strides = [1, 1]} : vector<8x128xf32> to vector<8x16xf32>
    %cst_40 = arith.constant 1.000000e+00 : f32
    %201 = vector.broadcast %cst_40 : f32 to vector<8x16xf32>
    %202 = arith.mulf %200, %201 : vector<8x16xf32>
    %cst_41 = arith.constant dense<0xFF800000> : vector<8xf32>
    %203 = vector.multi_reduction <maximumf>, %202, %cst_41 [1] : vector<8x16xf32> to vector<8xf32>
    %204 = vector.shape_cast %203 : vector<8xf32> to vector<8x1xf32>
    %205 = vector.broadcast %204 : vector<8x1xf32> to vector<8x16xf32>
    %206 = arith.subf %202, %205 : vector<8x16xf32>
    %207 = math.exp %206 : vector<8x16xf32>
    %cst_42 = arith.constant dense<0.000000e+00> : vector<8xf32>
    %208 = vector.multi_reduction <add>, %207, %cst_42 [1] : vector<8x16xf32> to vector<8xf32>
    %209 = vector.shape_cast %208 : vector<8xf32> to vector<8x1xf32>
    %210 = tpu.reciprocal %209 {approx = true} : vector<8x1xf32> -> vector<8x1xf32>
    %211 = vector.broadcast %210 : vector<8x1xf32> to vector<8x16xf32>
    %212 = arith.mulf %207, %211 : vector<8x16xf32>
    %213 = arith.truncf %212 : vector<8x16xf32> to vector<8x16xbf16>
    %cst_43 = arith.constant dense<0.000000e+00> : vector<8x128xf32>
    %214 = tpu.matmul %213, %4, %cst_43 {dimension_numbers = #tpu.dot_dimension_numbers<[1], [0], [0], [1], [0, 0, 1, 1], [], []>} : vector<8x16xbf16>, vector<16x128xbf16>, vector<8x128xf32> -> vector<8x128xf32>
    %215 = arith.addf %214, %19 : vector<8x128xf32>
    %216 = vector.extract_strided_slice %215 {offsets = [0, 0], sizes = [8, 32], strides = [1, 1]} : vector<8x128xf32> to vector<8x32xf32>
    %217 = vector.extract_strided_slice %199 {offsets = [0, 0], sizes = [8, 32], strides = [1, 1]} : vector<8x128xf32> to vector<8x32xf32>
    %218 = arith.addf %216, %217 : vector<8x32xf32>
    %219 = arith.negf %218 : vector<8x32xf32>
    %220 = math.exp %219 : vector<8x32xf32>
    %cst_44 = arith.constant 1.000000e+00 : f32
    %221 = vector.broadcast %cst_44 : f32 to vector<8x32xf32>
    %222 = arith.addf %221, %220 : vector<8x32xf32>
    %223 = arith.divf %221, %222 : vector<8x32xf32>
    %224 = vector.extract_strided_slice %215 {offsets = [0, 32], sizes = [8, 32], strides = [1, 1]} : vector<8x128xf32> to vector<8x32xf32>
    %225 = vector.extract_strided_slice %199 {offsets = [0, 32], sizes = [8, 32], strides = [1, 1]} : vector<8x128xf32> to vector<8x32xf32>
    %226 = arith.addf %224, %225 : vector<8x32xf32>
    %227 = arith.negf %226 : vector<8x32xf32>
    %228 = math.exp %227 : vector<8x32xf32>
    %cst_45 = arith.constant 1.000000e+00 : f32
    %229 = vector.broadcast %cst_45 : f32 to vector<8x32xf32>
    %230 = arith.addf %229, %228 : vector<8x32xf32>
    %231 = arith.divf %229, %230 : vector<8x32xf32>
    %232 = vector.extract_strided_slice %215 {offsets = [0, 64], sizes = [8, 32], strides = [1, 1]} : vector<8x128xf32> to vector<8x32xf32>
    %233 = vector.extract_strided_slice %199 {offsets = [0, 64], sizes = [8, 32], strides = [1, 1]} : vector<8x128xf32> to vector<8x32xf32>
    %234 = arith.mulf %223, %233 : vector<8x32xf32>
    %235 = arith.addf %232, %234 : vector<8x32xf32>
    %236 = math.tanh %235 : vector<8x32xf32>
    %cst_46 = arith.constant 1.000000e+00 : f32
    %237 = vector.broadcast %cst_46 : f32 to vector<8x32xf32>
    %238 = arith.subf %237, %231 : vector<8x32xf32>
    %239 = arith.mulf %238, %236 : vector<8x32xf32>
    %240 = arith.mulf %231, %196 : vector<8x32xf32>
    %241 = arith.addf %239, %240 : vector<8x32xf32>
    %242 = arith.truncf %241 : vector<8x32xf32> to vector<8x32xbf16>
    %cst_47 = arith.constant dense<0.000000e+00> : vector<8x128xf32>
    %243 = tpu.matmul %242, %3, %cst_47 {dimension_numbers = #tpu.dot_dimension_numbers<[1], [0], [0], [1], [0, 0, 1, 1], [], []>} : vector<8x32xbf16>, vector<32x128xbf16>, vector<8x128xf32> -> vector<8x128xf32>
    %244 = arith.addf %243, %13 : vector<8x128xf32>
    %245 = vector.extract_strided_slice %244 {offsets = [0, 96], sizes = [8, 16], strides = [1, 1]} : vector<8x128xf32> to vector<8x16xf32>
    %cst_48 = arith.constant 1.000000e+00 : f32
    %246 = vector.broadcast %cst_48 : f32 to vector<8x16xf32>
    %247 = arith.mulf %245, %246 : vector<8x16xf32>
    %cst_49 = arith.constant dense<0xFF800000> : vector<8xf32>
    %248 = vector.multi_reduction <maximumf>, %247, %cst_49 [1] : vector<8x16xf32> to vector<8xf32>
    %249 = vector.shape_cast %248 : vector<8xf32> to vector<8x1xf32>
    %250 = vector.broadcast %249 : vector<8x1xf32> to vector<8x16xf32>
    %251 = arith.subf %247, %250 : vector<8x16xf32>
    %252 = math.exp %251 : vector<8x16xf32>
    %cst_50 = arith.constant dense<0.000000e+00> : vector<8xf32>
    %253 = vector.multi_reduction <add>, %252, %cst_50 [1] : vector<8x16xf32> to vector<8xf32>
    %254 = vector.shape_cast %253 : vector<8xf32> to vector<8x1xf32>
    %255 = tpu.reciprocal %254 {approx = true} : vector<8x1xf32> -> vector<8x1xf32>
    %256 = vector.broadcast %255 : vector<8x1xf32> to vector<8x16xf32>
    %257 = arith.mulf %252, %256 : vector<8x16xf32>
    %258 = arith.truncf %257 : vector<8x16xf32> to vector<8x16xbf16>
    %cst_51 = arith.constant dense<0.000000e+00> : vector<8x128xf32>
    %259 = tpu.matmul %258, %4, %cst_51 {dimension_numbers = #tpu.dot_dimension_numbers<[1], [0], [0], [1], [0, 0, 1, 1], [], []>} : vector<8x16xbf16>, vector<16x128xbf16>, vector<8x128xf32> -> vector<8x128xf32>
    %260 = arith.addf %259, %19 : vector<8x128xf32>
    %261 = vector.extract_strided_slice %260 {offsets = [0, 0], sizes = [8, 32], strides = [1, 1]} : vector<8x128xf32> to vector<8x32xf32>
    %262 = vector.extract_strided_slice %244 {offsets = [0, 0], sizes = [8, 32], strides = [1, 1]} : vector<8x128xf32> to vector<8x32xf32>
    %263 = arith.addf %261, %262 : vector<8x32xf32>
    %264 = arith.negf %263 : vector<8x32xf32>
    %265 = math.exp %264 : vector<8x32xf32>
    %cst_52 = arith.constant 1.000000e+00 : f32
    %266 = vector.broadcast %cst_52 : f32 to vector<8x32xf32>
    %267 = arith.addf %266, %265 : vector<8x32xf32>
    %268 = arith.divf %266, %267 : vector<8x32xf32>
    %269 = vector.extract_strided_slice %260 {offsets = [0, 32], sizes = [8, 32], strides = [1, 1]} : vector<8x128xf32> to vector<8x32xf32>
    %270 = vector.extract_strided_slice %244 {offsets = [0, 32], sizes = [8, 32], strides = [1, 1]} : vector<8x128xf32> to vector<8x32xf32>
    %271 = arith.addf %269, %270 : vector<8x32xf32>
    %272 = arith.negf %271 : vector<8x32xf32>
    %273 = math.exp %272 : vector<8x32xf32>
    %cst_53 = arith.constant 1.000000e+00 : f32
    %274 = vector.broadcast %cst_53 : f32 to vector<8x32xf32>
    %275 = arith.addf %274, %273 : vector<8x32xf32>
    %276 = arith.divf %274, %275 : vector<8x32xf32>
    %277 = vector.extract_strided_slice %260 {offsets = [0, 64], sizes = [8, 32], strides = [1, 1]} : vector<8x128xf32> to vector<8x32xf32>
    %278 = vector.extract_strided_slice %244 {offsets = [0, 64], sizes = [8, 32], strides = [1, 1]} : vector<8x128xf32> to vector<8x32xf32>
    %279 = arith.mulf %268, %278 : vector<8x32xf32>
    %280 = arith.addf %277, %279 : vector<8x32xf32>
    %281 = math.tanh %280 : vector<8x32xf32>
    %cst_54 = arith.constant 1.000000e+00 : f32
    %282 = vector.broadcast %cst_54 : f32 to vector<8x32xf32>
    %283 = arith.subf %282, %276 : vector<8x32xf32>
    %284 = arith.mulf %283, %281 : vector<8x32xf32>
    %285 = arith.mulf %276, %241 : vector<8x32xf32>
    %286 = arith.addf %284, %285 : vector<8x32xf32>
    %287 = arith.truncf %286 : vector<8x32xf32> to vector<8x32xbf16>
    %cst_55 = arith.constant dense<0.000000e+00> : vector<8x128xf32>
    %288 = tpu.matmul %287, %3, %cst_55 {dimension_numbers = #tpu.dot_dimension_numbers<[1], [0], [0], [1], [0, 0, 1, 1], [], []>} : vector<8x32xbf16>, vector<32x128xbf16>, vector<8x128xf32> -> vector<8x128xf32>
    %289 = arith.addf %288, %13 : vector<8x128xf32>
    %290 = vector.extract_strided_slice %289 {offsets = [0, 96], sizes = [8, 16], strides = [1, 1]} : vector<8x128xf32> to vector<8x16xf32>
    %cst_56 = arith.constant 1.000000e+00 : f32
    %291 = vector.broadcast %cst_56 : f32 to vector<8x16xf32>
    %292 = arith.mulf %290, %291 : vector<8x16xf32>
    %cst_57 = arith.constant dense<0xFF800000> : vector<8xf32>
    %293 = vector.multi_reduction <maximumf>, %292, %cst_57 [1] : vector<8x16xf32> to vector<8xf32>
    %294 = vector.shape_cast %293 : vector<8xf32> to vector<8x1xf32>
    %295 = vector.broadcast %294 : vector<8x1xf32> to vector<8x16xf32>
    %296 = arith.subf %292, %295 : vector<8x16xf32>
    %297 = math.exp %296 : vector<8x16xf32>
    %cst_58 = arith.constant dense<0.000000e+00> : vector<8xf32>
    %298 = vector.multi_reduction <add>, %297, %cst_58 [1] : vector<8x16xf32> to vector<8xf32>
    %299 = vector.shape_cast %298 : vector<8xf32> to vector<8x1xf32>
    %300 = tpu.reciprocal %299 {approx = true} : vector<8x1xf32> -> vector<8x1xf32>
    %301 = vector.broadcast %300 : vector<8x1xf32> to vector<8x16xf32>
    %302 = arith.mulf %297, %301 : vector<8x16xf32>
    %303 = tpu.iota {dimensions = array<i32: 1>} : vector<8x16xi32>
    %c0_i32 = arith.constant 0 : i32
    %304 = vector.broadcast %c0_i32 : i32 to vector<8x16xi32>
    %305 = arith.cmpi eq, %303, %304 : vector<8x16xi32>
    %306 = arith.extui %305 : vector<8x16xi1> to vector<8x16xi32>
    %307 = arith.sitofp %306 : vector<8x16xi32> to vector<8x16xf32>
    %cst_59 = arith.constant 0.000000e+00 : f32
    %308 = vector.broadcast %cst_59 : f32 to vector<8x32xf32>
    %cst_60 = arith.constant 1.000000e+00 : f32
    %309 = vector.broadcast %cst_60 : f32 to vector<8x1xf32>
    %cst_61 = arith.constant 0.000000e+00 : f32
    %310 = vector.broadcast %cst_61 : f32 to vector<8x1xf32>
    %cst_62 = arith.constant 0.000000e+00 : f32
    %311 = vector.broadcast %cst_62 : f32 to vector<8x1xf32>
    %cst_63 = arith.constant 0.000000e+00 : f32
    %312 = vector.broadcast %cst_63 : f32 to vector<8x1xf32>
    %cst_64 = arith.constant 0.000000e+00 : f32
    %313 = vector.broadcast %cst_64 : f32 to vector<8x31xf32>
    %314 = vector.extract_strided_slice %1 {offsets = [0, 0], sizes = [8, 1], strides = [1, 1]} : vector<8x7xf32> to vector<8x1xf32>
    %315 = vector.extract_strided_slice %77 {offsets = [0, 0], sizes = [8, 1], strides = [1, 1]} : vector<8x16xf32> to vector<8x1xf32>
    %cst_65 = arith.constant 1.000000e+00 : f32
    %316 = vector.broadcast %cst_65 : f32 to vector<8x1xf32>
    %317 = arith.cmpf one, %315, %316 : vector<8x1xf32>
    %cst_66 = arith.constant 1.000000e+00 : f32
    %cst_67 = arith.constant 0.000000e+00 : f32
    %318 = vector.broadcast %cst_66 : f32 to vector<8x1xf32>
    %319 = vector.broadcast %cst_67 : f32 to vector<8x1xf32>
    %320 = arith.select %317, %318, %319 : vector<8x1xi1>, vector<8x1xf32>
    %321 = arith.mulf %314, %320 : vector<8x1xf32>
    %cst_68 = arith.constant 1.000000e+00 : f32
    %322 = vector.broadcast %cst_68 : f32 to vector<8x1xf32>
    %323 = arith.subf %322, %321 : vector<8x1xf32>
    %324 = vector.broadcast %323 : vector<8x1xf32> to vector<8x16xf32>
    %325 = arith.mulf %77, %324 : vector<8x16xf32>
    %326 = arith.truncf %325 : vector<8x16xf32> to vector<8x16xbf16>
    %cst_69 = arith.constant dense<0.000000e+00> : vector<8x128xf32>
    %327 = tpu.matmul %326, %6, %cst_69 {dimension_numbers = #tpu.dot_dimension_numbers<[1], [0], [0], [1], [0, 0, 1, 1], [], []>} : vector<8x16xbf16>, vector<16x128xbf16>, vector<8x128xf32> -> vector<8x128xf32>
    %328 = vector.broadcast %321 : vector<8x1xf32> to vector<8x128xf32>
    %329 = arith.mulf %328, %28 : vector<8x128xf32>
    %330 = arith.addf %327, %329 : vector<8x128xf32>
    %331 = arith.addf %330, %25 : vector<8x128xf32>
    %332 = vector.extract_strided_slice %331 {offsets = [0, 0], sizes = [8, 32], strides = [1, 1]} : vector<8x128xf32> to vector<8x32xf32>
    %333 = vector.extract_strided_slice %22 {offsets = [0, 0], sizes = [8, 32], strides = [1, 1]} : vector<8x128xf32> to vector<8x32xf32>
    %334 = arith.addf %332, %333 : vector<8x32xf32>
    %335 = arith.negf %334 : vector<8x32xf32>
    %336 = math.exp %335 : vector<8x32xf32>
    %cst_70 = arith.constant 1.000000e+00 : f32
    %337 = vector.broadcast %cst_70 : f32 to vector<8x32xf32>
    %338 = arith.addf %337, %336 : vector<8x32xf32>
    %339 = arith.divf %337, %338 : vector<8x32xf32>
    %340 = vector.extract_strided_slice %331 {offsets = [0, 32], sizes = [8, 32], strides = [1, 1]} : vector<8x128xf32> to vector<8x32xf32>
    %341 = vector.extract_strided_slice %22 {offsets = [0, 32], sizes = [8, 32], strides = [1, 1]} : vector<8x128xf32> to vector<8x32xf32>
    %342 = arith.addf %340, %341 : vector<8x32xf32>
    %343 = arith.negf %342 : vector<8x32xf32>
    %344 = math.exp %343 : vector<8x32xf32>
    %cst_71 = arith.constant 1.000000e+00 : f32
    %345 = vector.broadcast %cst_71 : f32 to vector<8x32xf32>
    %346 = arith.addf %345, %344 : vector<8x32xf32>
    %347 = arith.divf %345, %346 : vector<8x32xf32>
    %348 = vector.extract_strided_slice %331 {offsets = [0, 64], sizes = [8, 32], strides = [1, 1]} : vector<8x128xf32> to vector<8x32xf32>
    %349 = vector.extract_strided_slice %22 {offsets = [0, 64], sizes = [8, 32], strides = [1, 1]} : vector<8x128xf32> to vector<8x32xf32>
    %350 = arith.mulf %339, %349 : vector<8x32xf32>
    %351 = arith.addf %348, %350 : vector<8x32xf32>
    %352 = math.tanh %351 : vector<8x32xf32>
    %cst_72 = arith.constant 1.000000e+00 : f32
    %353 = vector.broadcast %cst_72 : f32 to vector<8x32xf32>
    %354 = arith.subf %353, %347 : vector<8x32xf32>
    %355 = arith.mulf %354, %352 : vector<8x32xf32>
    %356 = arith.mulf %347, %308 : vector<8x32xf32>
    %357 = arith.addf %355, %356 : vector<8x32xf32>
    %358 = arith.truncf %357 : vector<8x32xf32> to vector<8x32xbf16>
    %cst_73 = arith.constant dense<0.000000e+00> : vector<8x128xf32>
    %359 = tpu.matmul %358, %5, %cst_73 {dimension_numbers = #tpu.dot_dimension_numbers<[1], [0], [0], [1], [0, 0, 1, 1], [], []>} : vector<8x32xbf16>, vector<32x128xbf16>, vector<8x128xf32> -> vector<8x128xf32>
    %360 = arith.addf %359, %22 : vector<8x128xf32>
    %361 = vector.extract_strided_slice %360 {offsets = [0, 96], sizes = [8, 16], strides = [1, 1]} : vector<8x128xf32> to vector<8x16xf32>
    %362 = arith.subf %0, %361 : vector<8x16xf32>
    %363 = arith.mulf %362, %362 : vector<8x16xf32>
    %cst_74 = arith.constant dense<0.000000e+00> : vector<8xf32>
    %364 = vector.multi_reduction <add>, %363, %cst_74 [1] : vector<8x16xf32> to vector<8xf32>
    %365 = vector.shape_cast %364 : vector<8xf32> to vector<8x1xf32>
    %cst_75 = arith.constant 6.250000e-02 : f32
    %366 = vector.broadcast %cst_75 : f32 to vector<8x1xf32>
    %367 = arith.mulf %365, %366 : vector<8x1xf32>
    %368 = vector.extract_strided_slice %325 {offsets = [0, 0], sizes = [8, 1], strides = [1, 1]} : vector<8x16xf32> to vector<8x1xf32>
    %369 = arith.mulf %368, %309 : vector<8x1xf32>
    %370 = arith.addf %312, %369 : vector<8x1xf32>
    %cst_76 = arith.constant 0.00999999977 : f32
    %371 = vector.broadcast %cst_76 : f32 to vector<8x1xf32>
    %372 = arith.addf %367, %371 : vector<8x1xf32>
    %373 = arith.mulf %372, %369 : vector<8x1xf32>
    %374 = arith.addf %310, %373 : vector<8x1xf32>
    %cst_77 = arith.constant 1.000000e+00 : f32
    %375 = vector.broadcast %cst_77 : f32 to vector<8x1xf32>
    %376 = arith.mulf %369, %375 : vector<8x1xf32>
    %377 = arith.addf %311, %376 : vector<8x1xf32>
    %cst_78 = arith.constant 1.000000e+00 : f32
    %378 = vector.broadcast %cst_78 : f32 to vector<8x1xf32>
    %379 = arith.subf %378, %368 : vector<8x1xf32>
    %380 = arith.mulf %309, %379 : vector<8x1xf32>
    %381 = tpu.concatenate %325, %321, %361, %313 in 1 : vector<8x16xf32>, vector<8x1xf32>, vector<8x16xf32>, vector<8x31xf32> -> vector<8x64xf32>
    %c0_79 = arith.constant 0 : index
    %c0_80 = arith.constant 0 : index
    %382 = vector.load %arg4[%c0_79, %c0_80] : memref<8x512xf32, #tpu.memory_space<vmem>>, vector<8x64xf32>
    tpu.vector_store %arg4[%c0_79, %c0_80], %381 {strides = array<i32>} : memref<8x512xf32, #tpu.memory_space<vmem>>, vector<8x64xf32>,
    %383 = vector.extract_strided_slice %1 {offsets = [0, 1], sizes = [8, 1], strides = [1, 1]} : vector<8x7xf32> to vector<8x1xf32>
    %384 = vector.extract_strided_slice %122 {offsets = [0, 0], sizes = [8, 1], strides = [1, 1]} : vector<8x16xf32> to vector<8x1xf32>
    %cst_81 = arith.constant 1.000000e+00 : f32
    %385 = vector.broadcast %cst_81 : f32 to vector<8x1xf32>
    %386 = arith.cmpf one, %384, %385 : vector<8x1xf32>
    %cst_82 = arith.constant 1.000000e+00 : f32
    %cst_83 = arith.constant 0.000000e+00 : f32
    %387 = vector.broadcast %cst_82 : f32 to vector<8x1xf32>
    %388 = vector.broadcast %cst_83 : f32 to vector<8x1xf32>
    %389 = arith.select %386, %387, %388 : vector<8x1xi1>, vector<8x1xf32>
    %390 = arith.mulf %383, %389 : vector<8x1xf32>
    %cst_84 = arith.constant 1.000000e+00 : f32
    %391 = vector.broadcast %cst_84 : f32 to vector<8x1xf32>
    %392 = arith.subf %391, %390 : vector<8x1xf32>
    %393 = vector.broadcast %392 : vector<8x1xf32> to vector<8x16xf32>
    %394 = arith.mulf %122, %393 : vector<8x16xf32>
    %395 = arith.truncf %394 : vector<8x16xf32> to vector<8x16xbf16>
    %cst_85 = arith.constant dense<0.000000e+00> : vector<8x128xf32>
    %396 = tpu.matmul %395, %6, %cst_85 {dimension_numbers = #tpu.dot_dimension_numbers<[1], [0], [0], [1], [0, 0, 1, 1], [], []>} : vector<8x16xbf16>, vector<16x128xbf16>, vector<8x128xf32> -> vector<8x128xf32>
    %397 = vector.broadcast %390 : vector<8x1xf32> to vector<8x128xf32>
    %398 = arith.mulf %397, %28 : vector<8x128xf32>
    %399 = arith.addf %396, %398 : vector<8x128xf32>
    %400 = arith.addf %399, %25 : vector<8x128xf32>
    %401 = vector.extract_strided_slice %400 {offsets = [0, 0], sizes = [8, 32], strides = [1, 1]} : vector<8x128xf32> to vector<8x32xf32>
    %402 = vector.extract_strided_slice %360 {offsets = [0, 0], sizes = [8, 32], strides = [1, 1]} : vector<8x128xf32> to vector<8x32xf32>
    %403 = arith.addf %401, %402 : vector<8x32xf32>
    %404 = arith.negf %403 : vector<8x32xf32>
    %405 = math.exp %404 : vector<8x32xf32>
    %cst_86 = arith.constant 1.000000e+00 : f32
    %406 = vector.broadcast %cst_86 : f32 to vector<8x32xf32>
    %407 = arith.addf %406, %405 : vector<8x32xf32>
    %408 = arith.divf %406, %407 : vector<8x32xf32>
    %409 = vector.extract_strided_slice %400 {offsets = [0, 32], sizes = [8, 32], strides = [1, 1]} : vector<8x128xf32> to vector<8x32xf32>
    %410 = vector.extract_strided_slice %360 {offsets = [0, 32], sizes = [8, 32], strides = [1, 1]} : vector<8x128xf32> to vector<8x32xf32>
    %411 = arith.addf %409, %410 : vector<8x32xf32>
    %412 = arith.negf %411 : vector<8x32xf32>
    %413 = math.exp %412 : vector<8x32xf32>
    %cst_87 = arith.constant 1.000000e+00 : f32
    %414 = vector.broadcast %cst_87 : f32 to vector<8x32xf32>
    %415 = arith.addf %414, %413 : vector<8x32xf32>
    %416 = arith.divf %414, %415 : vector<8x32xf32>
    %417 = vector.extract_strided_slice %400 {offsets = [0, 64], sizes = [8, 32], strides = [1, 1]} : vector<8x128xf32> to vector<8x32xf32>
    %418 = vector.extract_strided_slice %360 {offsets = [0, 64], sizes = [8, 32], strides = [1, 1]} : vector<8x128xf32> to vector<8x32xf32>
    %419 = arith.mulf %408, %418 : vector<8x32xf32>
    %420 = arith.addf %417, %419 : vector<8x32xf32>
    %421 = math.tanh %420 : vector<8x32xf32>
    %cst_88 = arith.constant 1.000000e+00 : f32
    %422 = vector.broadcast %cst_88 : f32 to vector<8x32xf32>
    %423 = arith.subf %422, %416 : vector<8x32xf32>
    %424 = arith.mulf %423, %421 : vector<8x32xf32>
    %425 = arith.mulf %416, %357 : vector<8x32xf32>
    %426 = arith.addf %424, %425 : vector<8x32xf32>
    %427 = arith.truncf %426 : vector<8x32xf32> to vector<8x32xbf16>
    %cst_89 = arith.constant dense<0.000000e+00> : vector<8x128xf32>
    %428 = tpu.matmul %427, %5, %cst_89 {dimension_numbers = #tpu.dot_dimension_numbers<[1], [0], [0], [1], [0, 0, 1, 1], [], []>} : vector<8x32xbf16>, vector<32x128xbf16>, vector<8x128xf32> -> vector<8x128xf32>
    %429 = arith.addf %428, %22 : vector<8x128xf32>
    %430 = vector.extract_strided_slice %429 {offsets = [0, 96], sizes = [8, 16], strides = [1, 1]} : vector<8x128xf32> to vector<8x16xf32>
    %431 = arith.subf %0, %430 : vector<8x16xf32>
    %432 = arith.mulf %431, %431 : vector<8x16xf32>
    %cst_90 = arith.constant dense<0.000000e+00> : vector<8xf32>
    %433 = vector.multi_reduction <add>, %432, %cst_90 [1] : vector<8x16xf32> to vector<8xf32>
    %434 = vector.shape_cast %433 : vector<8xf32> to vector<8x1xf32>
    %cst_91 = arith.constant 6.250000e-02 : f32
    %435 = vector.broadcast %cst_91 : f32 to vector<8x1xf32>
    %436 = arith.mulf %434, %435 : vector<8x1xf32>
    %437 = vector.extract_strided_slice %394 {offsets = [0, 0], sizes = [8, 1], strides = [1, 1]} : vector<8x16xf32> to vector<8x1xf32>
    %438 = arith.mulf %437, %380 : vector<8x1xf32>
    %439 = arith.addf %370, %438 : vector<8x1xf32>
    %cst_92 = arith.constant 2.000000e-02 : f32
    %440 = vector.broadcast %cst_92 : f32 to vector<8x1xf32>
    %441 = arith.addf %436, %440 : vector<8x1xf32>
    %442 = arith.mulf %441, %438 : vector<8x1xf32>
    %443 = arith.addf %374, %442 : vector<8x1xf32>
    %cst_93 = arith.constant 2.000000e+00 : f32
    %444 = vector.broadcast %cst_93 : f32 to vector<8x1xf32>
    %445 = arith.mulf %438, %444 : vector<8x1xf32>
    %446 = arith.addf %377, %445 : vector<8x1xf32>
    %cst_94 = arith.constant 1.000000e+00 : f32
    %447 = vector.broadcast %cst_94 : f32 to vector<8x1xf32>
    %448 = arith.subf %447, %437 : vector<8x1xf32>
    %449 = arith.mulf %380, %448 : vector<8x1xf32>
    %450 = tpu.concatenate %394, %390, %430, %313 in 1 : vector<8x16xf32>, vector<8x1xf32>, vector<8x16xf32>, vector<8x31xf32> -> vector<8x64xf32>
    %c0_95 = arith.constant 0 : index
    %c64_96 = arith.constant 64 : index
    %451 = vector.load %arg4[%c0_95, %c64_96] : memref<8x512xf32, #tpu.memory_space<vmem>>, vector<8x64xf32>
    tpu.vector_store %arg4[%c0_95, %c64_96], %450 {strides = array<i32>} : memref<8x512xf32, #tpu.memory_space<vmem>>, vector<8x64xf32>,
    %452 = vector.extract_strided_slice %1 {offsets = [0, 2], sizes = [8, 1], strides = [1, 1]} : vector<8x7xf32> to vector<8x1xf32>
    %453 = vector.extract_strided_slice %167 {offsets = [0, 0], sizes = [8, 1], strides = [1, 1]} : vector<8x16xf32> to vector<8x1xf32>
    %cst_97 = arith.constant 1.000000e+00 : f32
    %454 = vector.broadcast %cst_97 : f32 to vector<8x1xf32>
    %455 = arith.cmpf one, %453, %454 : vector<8x1xf32>
    %cst_98 = arith.constant 1.000000e+00 : f32
    %cst_99 = arith.constant 0.000000e+00 : f32
    %456 = vector.broadcast %cst_98 : f32 to vector<8x1xf32>
    %457 = vector.broadcast %cst_99 : f32 to vector<8x1xf32>
    %458 = arith.select %455, %456, %457 : vector<8x1xi1>, vector<8x1xf32>
    %459 = arith.mulf %452, %458 : vector<8x1xf32>
    %cst_100 = arith.constant 1.000000e+00 : f32
    %460 = vector.broadcast %cst_100 : f32 to vector<8x1xf32>
    %461 = arith.subf %460, %459 : vector<8x1xf32>
    %462 = vector.broadcast %461 : vector<8x1xf32> to vector<8x16xf32>
    %463 = arith.mulf %167, %462 : vector<8x16xf32>
    %464 = arith.truncf %463 : vector<8x16xf32> to vector<8x16xbf16>
    %cst_101 = arith.constant dense<0.000000e+00> : vector<8x128xf32>
    %465 = tpu.matmul %464, %6, %cst_101 {dimension_numbers = #tpu.dot_dimension_numbers<[1], [0], [0], [1], [0, 0, 1, 1], [], []>} : vector<8x16xbf16>, vector<16x128xbf16>, vector<8x128xf32> -> vector<8x128xf32>
    %466 = vector.broadcast %459 : vector<8x1xf32> to vector<8x128xf32>
    %467 = arith.mulf %466, %28 : vector<8x128xf32>
    %468 = arith.addf %465, %467 : vector<8x128xf32>
    %469 = arith.addf %468, %25 : vector<8x128xf32>
    %470 = vector.extract_strided_slice %469 {offsets = [0, 0], sizes = [8, 32], strides = [1, 1]} : vector<8x128xf32> to vector<8x32xf32>
    %471 = vector.extract_strided_slice %429 {offsets = [0, 0], sizes = [8, 32], strides = [1, 1]} : vector<8x128xf32> to vector<8x32xf32>
    %472 = arith.addf %470, %471 : vector<8x32xf32>
    %473 = arith.negf %472 : vector<8x32xf32>
    %474 = math.exp %473 : vector<8x32xf32>
    %cst_102 = arith.constant 1.000000e+00 : f32
    %475 = vector.broadcast %cst_102 : f32 to vector<8x32xf32>
    %476 = arith.addf %475, %474 : vector<8x32xf32>
    %477 = arith.divf %475, %476 : vector<8x32xf32>
    %478 = vector.extract_strided_slice %469 {offsets = [0, 32], sizes = [8, 32], strides = [1, 1]} : vector<8x128xf32> to vector<8x32xf32>
    %479 = vector.extract_strided_slice %429 {offsets = [0, 32], sizes = [8, 32], strides = [1, 1]} : vector<8x128xf32> to vector<8x32xf32>
    %480 = arith.addf %478, %479 : vector<8x32xf32>
    %481 = arith.negf %480 : vector<8x32xf32>
    %482 = math.exp %481 : vector<8x32xf32>
    %cst_103 = arith.constant 1.000000e+00 : f32
    %483 = vector.broadcast %cst_103 : f32 to vector<8x32xf32>
    %484 = arith.addf %483, %482 : vector<8x32xf32>
    %485 = arith.divf %483, %484 : vector<8x32xf32>
    %486 = vector.extract_strided_slice %469 {offsets = [0, 64], sizes = [8, 32], strides = [1, 1]} : vector<8x128xf32> to vector<8x32xf32>
    %487 = vector.extract_strided_slice %429 {offsets = [0, 64], sizes = [8, 32], strides = [1, 1]} : vector<8x128xf32> to vector<8x32xf32>
    %488 = arith.mulf %477, %487 : vector<8x32xf32>
    %489 = arith.addf %486, %488 : vector<8x32xf32>
    %490 = math.tanh %489 : vector<8x32xf32>
    %cst_104 = arith.constant 1.000000e+00 : f32
    %491 = vector.broadcast %cst_104 : f32 to vector<8x32xf32>
    %492 = arith.subf %491, %485 : vector<8x32xf32>
    %493 = arith.mulf %492, %490 : vector<8x32xf32>
    %494 = arith.mulf %485, %426 : vector<8x32xf32>
    %495 = arith.addf %493, %494 : vector<8x32xf32>
    %496 = arith.truncf %495 : vector<8x32xf32> to vector<8x32xbf16>
    %cst_105 = arith.constant dense<0.000000e+00> : vector<8x128xf32>
    %497 = tpu.matmul %496, %5, %cst_105 {dimension_numbers = #tpu.dot_dimension_numbers<[1], [0], [0], [1], [0, 0, 1, 1], [], []>} : vector<8x32xbf16>, vector<32x128xbf16>, vector<8x128xf32> -> vector<8x128xf32>
    %498 = arith.addf %497, %22 : vector<8x128xf32>
    %499 = vector.extract_strided_slice %498 {offsets = [0, 96], sizes = [8, 16], strides = [1, 1]} : vector<8x128xf32> to vector<8x16xf32>
    %500 = arith.subf %0, %499 : vector<8x16xf32>
    %501 = arith.mulf %500, %500 : vector<8x16xf32>
    %cst_106 = arith.constant dense<0.000000e+00> : vector<8xf32>
    %502 = vector.multi_reduction <add>, %501, %cst_106 [1] : vector<8x16xf32> to vector<8xf32>
    %503 = vector.shape_cast %502 : vector<8xf32> to vector<8x1xf32>
    %cst_107 = arith.constant 6.250000e-02 : f32
    %504 = vector.broadcast %cst_107 : f32 to vector<8x1xf32>
    %505 = arith.mulf %503, %504 : vector<8x1xf32>
    %506 = vector.extract_strided_slice %463 {offsets = [0, 0], sizes = [8, 1], strides = [1, 1]} : vector<8x16xf32> to vector<8x1xf32>
    %507 = arith.mulf %506, %449 : vector<8x1xf32>
    %508 = arith.addf %439, %507 : vector<8x1xf32>
    %cst_108 = arith.constant 3.000000e-02 : f32
    %509 = vector.broadcast %cst_108 : f32 to vector<8x1xf32>
    %510 = arith.addf %505, %509 : vector<8x1xf32>
    %511 = arith.mulf %510, %507 : vector<8x1xf32>
    %512 = arith.addf %443, %511 : vector<8x1xf32>
    %cst_109 = arith.constant 3.000000e+00 : f32
    %513 = vector.broadcast %cst_109 : f32 to vector<8x1xf32>
    %514 = arith.mulf %507, %513 : vector<8x1xf32>
    %515 = arith.addf %446, %514 : vector<8x1xf32>
    %cst_110 = arith.constant 1.000000e+00 : f32
    %516 = vector.broadcast %cst_110 : f32 to vector<8x1xf32>
    %517 = arith.subf %516, %506 : vector<8x1xf32>
    %518 = arith.mulf %449, %517 : vector<8x1xf32>
    %519 = tpu.concatenate %463, %459, %499, %313 in 1 : vector<8x16xf32>, vector<8x1xf32>, vector<8x16xf32>, vector<8x31xf32> -> vector<8x64xf32>
    %c0_111 = arith.constant 0 : index
    %c128 = arith.constant 128 : index
    %520 = vector.load %arg4[%c0_111, %c128] : memref<8x512xf32, #tpu.memory_space<vmem>>, vector<8x64xf32>
    tpu.vector_store %arg4[%c0_111, %c128], %519 {strides = array<i32>} : memref<8x512xf32, #tpu.memory_space<vmem>>, vector<8x64xf32>,
    %521 = vector.extract_strided_slice %1 {offsets = [0, 3], sizes = [8, 1], strides = [1, 1]} : vector<8x7xf32> to vector<8x1xf32>
    %522 = vector.extract_strided_slice %212 {offsets = [0, 0], sizes = [8, 1], strides = [1, 1]} : vector<8x16xf32> to vector<8x1xf32>
    %cst_112 = arith.constant 1.000000e+00 : f32
    %523 = vector.broadcast %cst_112 : f32 to vector<8x1xf32>
    %524 = arith.cmpf one, %522, %523 : vector<8x1xf32>
    %cst_113 = arith.constant 1.000000e+00 : f32
    %cst_114 = arith.constant 0.000000e+00 : f32
    %525 = vector.broadcast %cst_113 : f32 to vector<8x1xf32>
    %526 = vector.broadcast %cst_114 : f32 to vector<8x1xf32>
    %527 = arith.select %524, %525, %526 : vector<8x1xi1>, vector<8x1xf32>
    %528 = arith.mulf %521, %527 : vector<8x1xf32>
    %cst_115 = arith.constant 1.000000e+00 : f32
    %529 = vector.broadcast %cst_115 : f32 to vector<8x1xf32>
    %530 = arith.subf %529, %528 : vector<8x1xf32>
    %531 = vector.broadcast %530 : vector<8x1xf32> to vector<8x16xf32>
    %532 = arith.mulf %212, %531 : vector<8x16xf32>
    %533 = arith.truncf %532 : vector<8x16xf32> to vector<8x16xbf16>
    %cst_116 = arith.constant dense<0.000000e+00> : vector<8x128xf32>
    %534 = tpu.matmul %533, %6, %cst_116 {dimension_numbers = #tpu.dot_dimension_numbers<[1], [0], [0], [1], [0, 0, 1, 1], [], []>} : vector<8x16xbf16>, vector<16x128xbf16>, vector<8x128xf32> -> vector<8x128xf32>
    %535 = vector.broadcast %528 : vector<8x1xf32> to vector<8x128xf32>
    %536 = arith.mulf %535, %28 : vector<8x128xf32>
    %537 = arith.addf %534, %536 : vector<8x128xf32>
    %538 = arith.addf %537, %25 : vector<8x128xf32>
    %539 = vector.extract_strided_slice %538 {offsets = [0, 0], sizes = [8, 32], strides = [1, 1]} : vector<8x128xf32> to vector<8x32xf32>
    %540 = vector.extract_strided_slice %498 {offsets = [0, 0], sizes = [8, 32], strides = [1, 1]} : vector<8x128xf32> to vector<8x32xf32>
    %541 = arith.addf %539, %540 : vector<8x32xf32>
    %542 = arith.negf %541 : vector<8x32xf32>
    %543 = math.exp %542 : vector<8x32xf32>
    %cst_117 = arith.constant 1.000000e+00 : f32
    %544 = vector.broadcast %cst_117 : f32 to vector<8x32xf32>
    %545 = arith.addf %544, %543 : vector<8x32xf32>
    %546 = arith.divf %544, %545 : vector<8x32xf32>
    %547 = vector.extract_strided_slice %538 {offsets = [0, 32], sizes = [8, 32], strides = [1, 1]} : vector<8x128xf32> to vector<8x32xf32>
    %548 = vector.extract_strided_slice %498 {offsets = [0, 32], sizes = [8, 32], strides = [1, 1]} : vector<8x128xf32> to vector<8x32xf32>
    %549 = arith.addf %547, %548 : vector<8x32xf32>
    %550 = arith.negf %549 : vector<8x32xf32>
    %551 = math.exp %550 : vector<8x32xf32>
    %cst_118 = arith.constant 1.000000e+00 : f32
    %552 = vector.broadcast %cst_118 : f32 to vector<8x32xf32>
    %553 = arith.addf %552, %551 : vector<8x32xf32>
    %554 = arith.divf %552, %553 : vector<8x32xf32>
    %555 = vector.extract_strided_slice %538 {offsets = [0, 64], sizes = [8, 32], strides = [1, 1]} : vector<8x128xf32> to vector<8x32xf32>
    %556 = vector.extract_strided_slice %498 {offsets = [0, 64], sizes = [8, 32], strides = [1, 1]} : vector<8x128xf32> to vector<8x32xf32>
    %557 = arith.mulf %546, %556 : vector<8x32xf32>
    %558 = arith.addf %555, %557 : vector<8x32xf32>
    %559 = math.tanh %558 : vector<8x32xf32>
    %cst_119 = arith.constant 1.000000e+00 : f32
    %560 = vector.broadcast %cst_119 : f32 to vector<8x32xf32>
    %561 = arith.subf %560, %554 : vector<8x32xf32>
    %562 = arith.mulf %561, %559 : vector<8x32xf32>
    %563 = arith.mulf %554, %495 : vector<8x32xf32>
    %564 = arith.addf %562, %563 : vector<8x32xf32>
    %565 = arith.truncf %564 : vector<8x32xf32> to vector<8x32xbf16>
    %cst_120 = arith.constant dense<0.000000e+00> : vector<8x128xf32>
    %566 = tpu.matmul %565, %5, %cst_120 {dimension_numbers = #tpu.dot_dimension_numbers<[1], [0], [0], [1], [0, 0, 1, 1], [], []>} : vector<8x32xbf16>, vector<32x128xbf16>, vector<8x128xf32> -> vector<8x128xf32>
    %567 = arith.addf %566, %22 : vector<8x128xf32>
    %568 = vector.extract_strided_slice %567 {offsets = [0, 96], sizes = [8, 16], strides = [1, 1]} : vector<8x128xf32> to vector<8x16xf32>
    %569 = arith.subf %0, %568 : vector<8x16xf32>
    %570 = arith.mulf %569, %569 : vector<8x16xf32>
    %cst_121 = arith.constant dense<0.000000e+00> : vector<8xf32>
    %571 = vector.multi_reduction <add>, %570, %cst_121 [1] : vector<8x16xf32> to vector<8xf32>
    %572 = vector.shape_cast %571 : vector<8xf32> to vector<8x1xf32>
    %cst_122 = arith.constant 6.250000e-02 : f32
    %573 = vector.broadcast %cst_122 : f32 to vector<8x1xf32>
    %574 = arith.mulf %572, %573 : vector<8x1xf32>
    %575 = vector.extract_strided_slice %532 {offsets = [0, 0], sizes = [8, 1], strides = [1, 1]} : vector<8x16xf32> to vector<8x1xf32>
    %576 = arith.mulf %575, %518 : vector<8x1xf32>
    %577 = arith.addf %508, %576 : vector<8x1xf32>
    %cst_123 = arith.constant 4.000000e-02 : f32
    %578 = vector.broadcast %cst_123 : f32 to vector<8x1xf32>
    %579 = arith.addf %574, %578 : vector<8x1xf32>
    %580 = arith.mulf %579, %576 : vector<8x1xf32>
    %581 = arith.addf %512, %580 : vector<8x1xf32>
    %cst_124 = arith.constant 4.000000e+00 : f32
    %582 = vector.broadcast %cst_124 : f32 to vector<8x1xf32>
    %583 = arith.mulf %576, %582 : vector<8x1xf32>
    %584 = arith.addf %515, %583 : vector<8x1xf32>
    %cst_125 = arith.constant 1.000000e+00 : f32
    %585 = vector.broadcast %cst_125 : f32 to vector<8x1xf32>
    %586 = arith.subf %585, %575 : vector<8x1xf32>
    %587 = arith.mulf %518, %586 : vector<8x1xf32>
    %588 = tpu.concatenate %532, %528, %568, %313 in 1 : vector<8x16xf32>, vector<8x1xf32>, vector<8x16xf32>, vector<8x31xf32> -> vector<8x64xf32>
    %c0_126 = arith.constant 0 : index
    %c192 = arith.constant 192 : index
    %589 = vector.load %arg4[%c0_126, %c192] : memref<8x512xf32, #tpu.memory_space<vmem>>, vector<8x64xf32>
    tpu.vector_store %arg4[%c0_126, %c192], %588 {strides = array<i32>} : memref<8x512xf32, #tpu.memory_space<vmem>>, vector<8x64xf32>,
    %590 = vector.extract_strided_slice %1 {offsets = [0, 4], sizes = [8, 1], strides = [1, 1]} : vector<8x7xf32> to vector<8x1xf32>
    %591 = vector.extract_strided_slice %257 {offsets = [0, 0], sizes = [8, 1], strides = [1, 1]} : vector<8x16xf32> to vector<8x1xf32>
    %cst_127 = arith.constant 1.000000e+00 : f32
    %592 = vector.broadcast %cst_127 : f32 to vector<8x1xf32>
    %593 = arith.cmpf one, %591, %592 : vector<8x1xf32>
    %cst_128 = arith.constant 1.000000e+00 : f32
    %cst_129 = arith.constant 0.000000e+00 : f32
    %594 = vector.broadcast %cst_128 : f32 to vector<8x1xf32>
    %595 = vector.broadcast %cst_129 : f32 to vector<8x1xf32>
    %596 = arith.select %593, %594, %595 : vector<8x1xi1>, vector<8x1xf32>
    %597 = arith.mulf %590, %596 : vector<8x1xf32>
    %cst_130 = arith.constant 1.000000e+00 : f32
    %598 = vector.broadcast %cst_130 : f32 to vector<8x1xf32>
    %599 = arith.subf %598, %597 : vector<8x1xf32>
    %600 = vector.broadcast %599 : vector<8x1xf32> to vector<8x16xf32>
    %601 = arith.mulf %257, %600 : vector<8x16xf32>
    %602 = arith.truncf %601 : vector<8x16xf32> to vector<8x16xbf16>
    %cst_131 = arith.constant dense<0.000000e+00> : vector<8x128xf32>
    %603 = tpu.matmul %602, %6, %cst_131 {dimension_numbers = #tpu.dot_dimension_numbers<[1], [0], [0], [1], [0, 0, 1, 1], [], []>} : vector<8x16xbf16>, vector<16x128xbf16>, vector<8x128xf32> -> vector<8x128xf32>
    %604 = vector.broadcast %597 : vector<8x1xf32> to vector<8x128xf32>
    %605 = arith.mulf %604, %28 : vector<8x128xf32>
    %606 = arith.addf %603, %605 : vector<8x128xf32>
    %607 = arith.addf %606, %25 : vector<8x128xf32>
    %608 = vector.extract_strided_slice %607 {offsets = [0, 0], sizes = [8, 32], strides = [1, 1]} : vector<8x128xf32> to vector<8x32xf32>
    %609 = vector.extract_strided_slice %567 {offsets = [0, 0], sizes = [8, 32], strides = [1, 1]} : vector<8x128xf32> to vector<8x32xf32>
    %610 = arith.addf %608, %609 : vector<8x32xf32>
    %611 = arith.negf %610 : vector<8x32xf32>
    %612 = math.exp %611 : vector<8x32xf32>
    %cst_132 = arith.constant 1.000000e+00 : f32
    %613 = vector.broadcast %cst_132 : f32 to vector<8x32xf32>
    %614 = arith.addf %613, %612 : vector<8x32xf32>
    %615 = arith.divf %613, %614 : vector<8x32xf32>
    %616 = vector.extract_strided_slice %607 {offsets = [0, 32], sizes = [8, 32], strides = [1, 1]} : vector<8x128xf32> to vector<8x32xf32>
    %617 = vector.extract_strided_slice %567 {offsets = [0, 32], sizes = [8, 32], strides = [1, 1]} : vector<8x128xf32> to vector<8x32xf32>
    %618 = arith.addf %616, %617 : vector<8x32xf32>
    %619 = arith.negf %618 : vector<8x32xf32>
    %620 = math.exp %619 : vector<8x32xf32>
    %cst_133 = arith.constant 1.000000e+00 : f32
    %621 = vector.broadcast %cst_133 : f32 to vector<8x32xf32>
    %622 = arith.addf %621, %620 : vector<8x32xf32>
    %623 = arith.divf %621, %622 : vector<8x32xf32>
    %624 = vector.extract_strided_slice %607 {offsets = [0, 64], sizes = [8, 32], strides = [1, 1]} : vector<8x128xf32> to vector<8x32xf32>
    %625 = vector.extract_strided_slice %567 {offsets = [0, 64], sizes = [8, 32], strides = [1, 1]} : vector<8x128xf32> to vector<8x32xf32>
    %626 = arith.mulf %615, %625 : vector<8x32xf32>
    %627 = arith.addf %624, %626 : vector<8x32xf32>
    %628 = math.tanh %627 : vector<8x32xf32>
    %cst_134 = arith.constant 1.000000e+00 : f32
    %629 = vector.broadcast %cst_134 : f32 to vector<8x32xf32>
    %630 = arith.subf %629, %623 : vector<8x32xf32>
    %631 = arith.mulf %630, %628 : vector<8x32xf32>
    %632 = arith.mulf %623, %564 : vector<8x32xf32>
    %633 = arith.addf %631, %632 : vector<8x32xf32>
    %634 = arith.truncf %633 : vector<8x32xf32> to vector<8x32xbf16>
    %cst_135 = arith.constant dense<0.000000e+00> : vector<8x128xf32>
    %635 = tpu.matmul %634, %5, %cst_135 {dimension_numbers = #tpu.dot_dimension_numbers<[1], [0], [0], [1], [0, 0, 1, 1], [], []>} : vector<8x32xbf16>, vector<32x128xbf16>, vector<8x128xf32> -> vector<8x128xf32>
    %636 = arith.addf %635, %22 : vector<8x128xf32>
    %637 = vector.extract_strided_slice %636 {offsets = [0, 96], sizes = [8, 16], strides = [1, 1]} : vector<8x128xf32> to vector<8x16xf32>
    %638 = arith.subf %0, %637 : vector<8x16xf32>
    %639 = arith.mulf %638, %638 : vector<8x16xf32>
    %cst_136 = arith.constant dense<0.000000e+00> : vector<8xf32>
    %640 = vector.multi_reduction <add>, %639, %cst_136 [1] : vector<8x16xf32> to vector<8xf32>
    %641 = vector.shape_cast %640 : vector<8xf32> to vector<8x1xf32>
    %cst_137 = arith.constant 6.250000e-02 : f32
    %642 = vector.broadcast %cst_137 : f32 to vector<8x1xf32>
    %643 = arith.mulf %641, %642 : vector<8x1xf32>
    %644 = vector.extract_strided_slice %601 {offsets = [0, 0], sizes = [8, 1], strides = [1, 1]} : vector<8x16xf32> to vector<8x1xf32>
    %645 = arith.mulf %644, %587 : vector<8x1xf32>
    %646 = arith.addf %577, %645 : vector<8x1xf32>
    %cst_138 = arith.constant 5.000000e-02 : f32
    %647 = vector.broadcast %cst_138 : f32 to vector<8x1xf32>
    %648 = arith.addf %643, %647 : vector<8x1xf32>
    %649 = arith.mulf %648, %645 : vector<8x1xf32>
    %650 = arith.addf %581, %649 : vector<8x1xf32>
    %cst_139 = arith.constant 5.000000e+00 : f32
    %651 = vector.broadcast %cst_139 : f32 to vector<8x1xf32>
    %652 = arith.mulf %645, %651 : vector<8x1xf32>
    %653 = arith.addf %584, %652 : vector<8x1xf32>
    %cst_140 = arith.constant 1.000000e+00 : f32
    %654 = vector.broadcast %cst_140 : f32 to vector<8x1xf32>
    %655 = arith.subf %654, %644 : vector<8x1xf32>
    %656 = arith.mulf %587, %655 : vector<8x1xf32>
    %657 = tpu.concatenate %601, %597, %637, %313 in 1 : vector<8x16xf32>, vector<8x1xf32>, vector<8x16xf32>, vector<8x31xf32> -> vector<8x64xf32>
    %c0_141 = arith.constant 0 : index
    %c256 = arith.constant 256 : index
    %658 = vector.load %arg4[%c0_141, %c256] : memref<8x512xf32, #tpu.memory_space<vmem>>, vector<8x64xf32>
    tpu.vector_store %arg4[%c0_141, %c256], %657 {strides = array<i32>} : memref<8x512xf32, #tpu.memory_space<vmem>>, vector<8x64xf32>,
    %659 = vector.extract_strided_slice %1 {offsets = [0, 5], sizes = [8, 1], strides = [1, 1]} : vector<8x7xf32> to vector<8x1xf32>
    %660 = vector.extract_strided_slice %302 {offsets = [0, 0], sizes = [8, 1], strides = [1, 1]} : vector<8x16xf32> to vector<8x1xf32>
    %cst_142 = arith.constant 1.000000e+00 : f32
    %661 = vector.broadcast %cst_142 : f32 to vector<8x1xf32>
    %662 = arith.cmpf one, %660, %661 : vector<8x1xf32>
    %cst_143 = arith.constant 1.000000e+00 : f32
    %cst_144 = arith.constant 0.000000e+00 : f32
    %663 = vector.broadcast %cst_143 : f32 to vector<8x1xf32>
    %664 = vector.broadcast %cst_144 : f32 to vector<8x1xf32>
    %665 = arith.select %662, %663, %664 : vector<8x1xi1>, vector<8x1xf32>
    %666 = arith.mulf %659, %665 : vector<8x1xf32>
    %cst_145 = arith.constant 1.000000e+00 : f32
    %667 = vector.broadcast %cst_145 : f32 to vector<8x1xf32>
    %668 = arith.subf %667, %666 : vector<8x1xf32>
    %669 = vector.broadcast %668 : vector<8x1xf32> to vector<8x16xf32>
    %670 = arith.mulf %302, %669 : vector<8x16xf32>
    %671 = arith.truncf %670 : vector<8x16xf32> to vector<8x16xbf16>
    %cst_146 = arith.constant dense<0.000000e+00> : vector<8x128xf32>
    %672 = tpu.matmul %671, %6, %cst_146 {dimension_numbers = #tpu.dot_dimension_numbers<[1], [0], [0], [1], [0, 0, 1, 1], [], []>} : vector<8x16xbf16>, vector<16x128xbf16>, vector<8x128xf32> -> vector<8x128xf32>
    %673 = vector.broadcast %666 : vector<8x1xf32> to vector<8x128xf32>
    %674 = arith.mulf %673, %28 : vector<8x128xf32>
    %675 = arith.addf %672, %674 : vector<8x128xf32>
    %676 = arith.addf %675, %25 : vector<8x128xf32>
    %677 = vector.extract_strided_slice %676 {offsets = [0, 0], sizes = [8, 32], strides = [1, 1]} : vector<8x128xf32> to vector<8x32xf32>
    %678 = vector.extract_strided_slice %636 {offsets = [0, 0], sizes = [8, 32], strides = [1, 1]} : vector<8x128xf32> to vector<8x32xf32>
    %679 = arith.addf %677, %678 : vector<8x32xf32>
    %680 = arith.negf %679 : vector<8x32xf32>
    %681 = math.exp %680 : vector<8x32xf32>
    %cst_147 = arith.constant 1.000000e+00 : f32
    %682 = vector.broadcast %cst_147 : f32 to vector<8x32xf32>
    %683 = arith.addf %682, %681 : vector<8x32xf32>
    %684 = arith.divf %682, %683 : vector<8x32xf32>
    %685 = vector.extract_strided_slice %676 {offsets = [0, 32], sizes = [8, 32], strides = [1, 1]} : vector<8x128xf32> to vector<8x32xf32>
    %686 = vector.extract_strided_slice %636 {offsets = [0, 32], sizes = [8, 32], strides = [1, 1]} : vector<8x128xf32> to vector<8x32xf32>
    %687 = arith.addf %685, %686 : vector<8x32xf32>
    %688 = arith.negf %687 : vector<8x32xf32>
    %689 = math.exp %688 : vector<8x32xf32>
    %cst_148 = arith.constant 1.000000e+00 : f32
    %690 = vector.broadcast %cst_148 : f32 to vector<8x32xf32>
    %691 = arith.addf %690, %689 : vector<8x32xf32>
    %692 = arith.divf %690, %691 : vector<8x32xf32>
    %693 = vector.extract_strided_slice %676 {offsets = [0, 64], sizes = [8, 32], strides = [1, 1]} : vector<8x128xf32> to vector<8x32xf32>
    %694 = vector.extract_strided_slice %636 {offsets = [0, 64], sizes = [8, 32], strides = [1, 1]} : vector<8x128xf32> to vector<8x32xf32>
    %695 = arith.mulf %684, %694 : vector<8x32xf32>
    %696 = arith.addf %693, %695 : vector<8x32xf32>
    %697 = math.tanh %696 : vector<8x32xf32>
    %cst_149 = arith.constant 1.000000e+00 : f32
    %698 = vector.broadcast %cst_149 : f32 to vector<8x32xf32>
    %699 = arith.subf %698, %692 : vector<8x32xf32>
    %700 = arith.mulf %699, %697 : vector<8x32xf32>
    %701 = arith.mulf %692, %633 : vector<8x32xf32>
    %702 = arith.addf %700, %701 : vector<8x32xf32>
    %703 = arith.truncf %702 : vector<8x32xf32> to vector<8x32xbf16>
    %cst_150 = arith.constant dense<0.000000e+00> : vector<8x128xf32>
    %704 = tpu.matmul %703, %5, %cst_150 {dimension_numbers = #tpu.dot_dimension_numbers<[1], [0], [0], [1], [0, 0, 1, 1], [], []>} : vector<8x32xbf16>, vector<32x128xbf16>, vector<8x128xf32> -> vector<8x128xf32>
    %705 = arith.addf %704, %22 : vector<8x128xf32>
    %706 = vector.extract_strided_slice %705 {offsets = [0, 96], sizes = [8, 16], strides = [1, 1]} : vector<8x128xf32> to vector<8x16xf32>
    %707 = arith.subf %0, %706 : vector<8x16xf32>
    %708 = arith.mulf %707, %707 : vector<8x16xf32>
    %cst_151 = arith.constant dense<0.000000e+00> : vector<8xf32>
    %709 = vector.multi_reduction <add>, %708, %cst_151 [1] : vector<8x16xf32> to vector<8xf32>
    %710 = vector.shape_cast %709 : vector<8xf32> to vector<8x1xf32>
    %cst_152 = arith.constant 6.250000e-02 : f32
    %711 = vector.broadcast %cst_152 : f32 to vector<8x1xf32>
    %712 = arith.mulf %710, %711 : vector<8x1xf32>
    %713 = vector.extract_strided_slice %670 {offsets = [0, 0], sizes = [8, 1], strides = [1, 1]} : vector<8x16xf32> to vector<8x1xf32>
    %714 = arith.mulf %713, %656 : vector<8x1xf32>
    %715 = arith.addf %646, %714 : vector<8x1xf32>
    %cst_153 = arith.constant 6.000000e-02 : f32
    %716 = vector.broadcast %cst_153 : f32 to vector<8x1xf32>
    %717 = arith.addf %712, %716 : vector<8x1xf32>
    %718 = arith.mulf %717, %714 : vector<8x1xf32>
    %719 = arith.addf %650, %718 : vector<8x1xf32>
    %cst_154 = arith.constant 6.000000e+00 : f32
    %720 = vector.broadcast %cst_154 : f32 to vector<8x1xf32>
    %721 = arith.mulf %714, %720 : vector<8x1xf32>
    %722 = arith.addf %653, %721 : vector<8x1xf32>
    %cst_155 = arith.constant 1.000000e+00 : f32
    %723 = vector.broadcast %cst_155 : f32 to vector<8x1xf32>
    %724 = arith.subf %723, %713 : vector<8x1xf32>
    %725 = arith.mulf %656, %724 : vector<8x1xf32>
    %726 = tpu.concatenate %670, %666, %706, %313 in 1 : vector<8x16xf32>, vector<8x1xf32>, vector<8x16xf32>, vector<8x31xf32> -> vector<8x64xf32>
    %c0_156 = arith.constant 0 : index
    %c320 = arith.constant 320 : index
    %727 = vector.load %arg4[%c0_156, %c320] : memref<8x512xf32, #tpu.memory_space<vmem>>, vector<8x64xf32>
    tpu.vector_store %arg4[%c0_156, %c320], %726 {strides = array<i32>} : memref<8x512xf32, #tpu.memory_space<vmem>>, vector<8x64xf32>,
    %728 = vector.extract_strided_slice %1 {offsets = [0, 6], sizes = [8, 1], strides = [1, 1]} : vector<8x7xf32> to vector<8x1xf32>
    %729 = vector.extract_strided_slice %307 {offsets = [0, 0], sizes = [8, 1], strides = [1, 1]} : vector<8x16xf32> to vector<8x1xf32>
    %cst_157 = arith.constant 1.000000e+00 : f32
    %730 = vector.broadcast %cst_157 : f32 to vector<8x1xf32>
    %731 = arith.cmpf one, %729, %730 : vector<8x1xf32>
    %cst_158 = arith.constant 1.000000e+00 : f32
    %cst_159 = arith.constant 0.000000e+00 : f32
    %732 = vector.broadcast %cst_158 : f32 to vector<8x1xf32>
    %733 = vector.broadcast %cst_159 : f32 to vector<8x1xf32>
    %734 = arith.select %731, %732, %733 : vector<8x1xi1>, vector<8x1xf32>
    %735 = arith.mulf %728, %734 : vector<8x1xf32>
    %cst_160 = arith.constant 1.000000e+00 : f32
    %736 = vector.broadcast %cst_160 : f32 to vector<8x1xf32>
    %737 = arith.subf %736, %735 : vector<8x1xf32>
    %738 = vector.broadcast %737 : vector<8x1xf32> to vector<8x16xf32>
    %739 = arith.mulf %307, %738 : vector<8x16xf32>
    %740 = arith.truncf %739 : vector<8x16xf32> to vector<8x16xbf16>
    %cst_161 = arith.constant dense<0.000000e+00> : vector<8x128xf32>
    %741 = tpu.matmul %740, %6, %cst_161 {dimension_numbers = #tpu.dot_dimension_numbers<[1], [0], [0], [1], [0, 0, 1, 1], [], []>} : vector<8x16xbf16>, vector<16x128xbf16>, vector<8x128xf32> -> vector<8x128xf32>
    %742 = vector.broadcast %735 : vector<8x1xf32> to vector<8x128xf32>
    %743 = arith.mulf %742, %28 : vector<8x128xf32>
    %744 = arith.addf %741, %743 : vector<8x128xf32>
    %745 = arith.addf %744, %25 : vector<8x128xf32>
    %746 = vector.extract_strided_slice %745 {offsets = [0, 0], sizes = [8, 32], strides = [1, 1]} : vector<8x128xf32> to vector<8x32xf32>
    %747 = vector.extract_strided_slice %705 {offsets = [0, 0], sizes = [8, 32], strides = [1, 1]} : vector<8x128xf32> to vector<8x32xf32>
    %748 = arith.addf %746, %747 : vector<8x32xf32>
    %749 = arith.negf %748 : vector<8x32xf32>
    %750 = math.exp %749 : vector<8x32xf32>
    %cst_162 = arith.constant 1.000000e+00 : f32
    %751 = vector.broadcast %cst_162 : f32 to vector<8x32xf32>
    %752 = arith.addf %751, %750 : vector<8x32xf32>
    %753 = arith.divf %751, %752 : vector<8x32xf32>
    %754 = vector.extract_strided_slice %745 {offsets = [0, 32], sizes = [8, 32], strides = [1, 1]} : vector<8x128xf32> to vector<8x32xf32>
    %755 = vector.extract_strided_slice %705 {offsets = [0, 32], sizes = [8, 32], strides = [1, 1]} : vector<8x128xf32> to vector<8x32xf32>
    %756 = arith.addf %754, %755 : vector<8x32xf32>
    %757 = arith.negf %756 : vector<8x32xf32>
    %758 = math.exp %757 : vector<8x32xf32>
    %cst_163 = arith.constant 1.000000e+00 : f32
    %759 = vector.broadcast %cst_163 : f32 to vector<8x32xf32>
    %760 = arith.addf %759, %758 : vector<8x32xf32>
    %761 = arith.divf %759, %760 : vector<8x32xf32>
    %762 = vector.extract_strided_slice %745 {offsets = [0, 64], sizes = [8, 32], strides = [1, 1]} : vector<8x128xf32> to vector<8x32xf32>
    %763 = vector.extract_strided_slice %705 {offsets = [0, 64], sizes = [8, 32], strides = [1, 1]} : vector<8x128xf32> to vector<8x32xf32>
    %764 = arith.mulf %753, %763 : vector<8x32xf32>
    %765 = arith.addf %762, %764 : vector<8x32xf32>
    %766 = math.tanh %765 : vector<8x32xf32>
    %cst_164 = arith.constant 1.000000e+00 : f32
    %767 = vector.broadcast %cst_164 : f32 to vector<8x32xf32>
    %768 = arith.subf %767, %761 : vector<8x32xf32>
    %769 = arith.mulf %768, %766 : vector<8x32xf32>
    %770 = arith.mulf %761, %702 : vector<8x32xf32>
    %771 = arith.addf %769, %770 : vector<8x32xf32>
    %772 = arith.truncf %771 : vector<8x32xf32> to vector<8x32xbf16>
    %cst_165 = arith.constant dense<0.000000e+00> : vector<8x128xf32>
    %773 = tpu.matmul %772, %5, %cst_165 {dimension_numbers = #tpu.dot_dimension_numbers<[1], [0], [0], [1], [0, 0, 1, 1], [], []>} : vector<8x32xbf16>, vector<32x128xbf16>, vector<8x128xf32> -> vector<8x128xf32>
    %774 = arith.addf %773, %22 : vector<8x128xf32>
    %775 = vector.extract_strided_slice %774 {offsets = [0, 96], sizes = [8, 16], strides = [1, 1]} : vector<8x128xf32> to vector<8x16xf32>
    %776 = arith.subf %0, %775 : vector<8x16xf32>
    %777 = arith.mulf %776, %776 : vector<8x16xf32>
    %cst_166 = arith.constant dense<0.000000e+00> : vector<8xf32>
    %778 = vector.multi_reduction <add>, %777, %cst_166 [1] : vector<8x16xf32> to vector<8xf32>
    %779 = vector.shape_cast %778 : vector<8xf32> to vector<8x1xf32>
    %cst_167 = arith.constant 6.250000e-02 : f32
    %780 = vector.broadcast %cst_167 : f32 to vector<8x1xf32>
    %781 = arith.mulf %779, %780 : vector<8x1xf32>
    %782 = vector.extract_strided_slice %739 {offsets = [0, 0], sizes = [8, 1], strides = [1, 1]} : vector<8x16xf32> to vector<8x1xf32>
    %783 = arith.mulf %782, %725 : vector<8x1xf32>
    %784 = arith.addf %715, %783 : vector<8x1xf32>
    %cst_168 = arith.constant 7.000000e-02 : f32
    %785 = vector.broadcast %cst_168 : f32 to vector<8x1xf32>
    %786 = arith.addf %781, %785 : vector<8x1xf32>
    %787 = arith.mulf %786, %783 : vector<8x1xf32>
    %788 = arith.addf %719, %787 : vector<8x1xf32>
    %cst_169 = arith.constant 7.000000e+00 : f32
    %789 = vector.broadcast %cst_169 : f32 to vector<8x1xf32>
    %790 = arith.mulf %783, %789 : vector<8x1xf32>
    %791 = arith.addf %722, %790 : vector<8x1xf32>
    %cst_170 = arith.constant 1.000000e+00 : f32
    %792 = vector.broadcast %cst_170 : f32 to vector<8x1xf32>
    %793 = arith.subf %792, %782 : vector<8x1xf32>
    %794 = arith.mulf %725, %793 : vector<8x1xf32>
    %795 = tpu.concatenate %739, %735, %775, %313 in 1 : vector<8x16xf32>, vector<8x1xf32>, vector<8x16xf32>, vector<8x31xf32> -> vector<8x64xf32>
    %c0_171 = arith.constant 0 : index
    %c384 = arith.constant 384 : index
    %796 = vector.load %arg4[%c0_171, %c384] : memref<8x512xf32, #tpu.memory_space<vmem>>, vector<8x64xf32>
    tpu.vector_store %arg4[%c0_171, %c384], %795 {strides = array<i32>} : memref<8x512xf32, #tpu.memory_space<vmem>>, vector<8x64xf32>,
    %cst_172 = arith.constant 7.000000e-02 : f32
    %797 = vector.broadcast %cst_172 : f32 to vector<8x1xf32>
    %798 = arith.addf %781, %797 : vector<8x1xf32>
    %799 = arith.mulf %798, %794 : vector<8x1xf32>
    %800 = arith.addf %788, %799 : vector<8x1xf32>
    %cst_173 = arith.constant 7.000000e+00 : f32
    %801 = vector.broadcast %cst_173 : f32 to vector<8x1xf32>
    %802 = arith.mulf %801, %794 : vector<8x1xf32>
    %803 = arith.addf %791, %802 : vector<8x1xf32>
    %804 = arith.addf %784, %794 : vector<8x1xf32>
    %cst_174 = arith.constant 0.000000e+00 : f32
    %805 = vector.broadcast %cst_174 : f32 to vector<8x61xf32>
    %806 = tpu.concatenate %800, %803, %804, %805 in 1 : vector<8x1xf32>, vector<8x1xf32>, vector<8x1xf32>, vector<8x61xf32> -> vector<8x64xf32>
    %c0_175 = arith.constant 0 : index
    %c448 = arith.constant 448 : index
    %807 = vector.load %arg4[%c0_175, %c448] : memref<8x512xf32, #tpu.memory_space<vmem>>, vector<8x64xf32>
    tpu.vector_store %arg4[%c0_175, %c448], %806 {strides = array<i32>} : memref<8x512xf32, #tpu.memory_space<vmem>>, vector<8x64xf32>,
    return
  }
}

</mosaic_0001>

<llo_original>
// kernel: game_forward.1
$region0: #{game_forward.1}
  #allocation0 [shape = 'u32[]', space=smem, size = 0x4, offset = 0x4, fixed_abs, tag = 'smem constant byte address 0x4 - core index']
  #allocation1 [shape = 'u32[144,128]{1,0:T(1,128)}', space=vmem, size = 0x12000, scoped, tag = 'internal scratch']
  %s0 = inlined_call_operand.vmem [shape: f32[8,16], index: 0, kind: input, shape index: {}]
  %s1 = inlined_call_operand.vmem [shape: f32[8,7], index: 1, kind: input, shape index: {}]
  %s2 = inlined_call_operand.vmem [shape: bf16[112,128], index: 2, kind: input, shape index: {}]
  %s3 = inlined_call_operand.hbm [shape: f32[8,128], index: 3, kind: input, shape index: {}]
  %s4 = inlined_call_operand.vmem [shape: f32[8,512], index: 4, kind: output, shape index: {}]
  %s5 = sld [smem:[#allocation0]]
  $region30: #{game_forward.1} parent=0
    _
  %s7 = ssub.s32 1, %s5
  %s8 = scalar_select 0, %s7, %s5
  $region1: #{game_forward.1} parent=0
    #allocation2 [shape = 'u8[4096]{0}', space=vmem, size = 0x1000, scoped, tag = 'input window, operand 3, single buffered']
    #allocation3 [shape = 's32[1]{0}', space=sflag, size = 0x4, scoped, tag = 'scoped memory for game_forward.1']
    %9 = vsyncpa [#allocation3], 0
    // Predicated region
    $region2: #{game_forward.1} parent=1 // pred_check
      _
    $region3: #{game_forward.1} parent=1 // pred_check_branch
      %11 = sbr.rel (0) target = $region5
    $region4: #{game_forward.1} parent=1 // pred_region
      _
    $region5: #{game_forward.1} parent=1 // pred_fallthru
      _
    // Predicated region
    $region6: #{game_forward.1} parent=1 // pred_check
      _
    $region7: #{game_forward.1} parent=1 // pred_check_branch
      %13 = sbr.rel (0) target = $region9
    $region8: #{game_forward.1} parent=1 // pred_region
      _
    $region9: #{game_forward.1} parent=1 // pred_fallthru
      _
    // Predicated region
    $region10: #{game_forward.1} parent=1 // pred_check
      _
    $region11: #{game_forward.1} parent=1 // pred_check_branch
      %15 = sbr.rel (0) target = $region13
    $region12: #{game_forward.1} parent=1 // pred_region
      _
    $region13: #{game_forward.1} parent=1 // pred_fallthru
      _
    // Predicated region
    $region14: #{game_forward.1} parent=1 // pred_check
      _
    $region15: #{game_forward.1} parent=1 // pred_check_branch
      %17 = sbr.rel (0) target = $region17
    $region16: #{game_forward.1} parent=1 // pred_region
      %s19 = ssub.s32 128, 128
      %20 = vsyncadd [#allocation3], %s19
      %s22 = sshll.u32 [#allocation2], 4
      %s23 = int_to_ptr.vmem [resolvable:$true] %s22
      %25 = dma.hbm_to_vmem [thread:$0]  %s3, 128, %s23, [#allocation3]
    $region17: #{game_forward.1} parent=1 // pred_fallthru
      _
    // Predicated region
    $region18: #{game_forward.1} parent=1 // pred_check
      _
    $region19: #{game_forward.1} parent=1 // pred_check_branch
      %27 = sbr.rel (0) target = $region21
    $region20: #{game_forward.1} parent=1 // pred_region
      %28 = dma.done [#allocation3], 128
    $region21: #{game_forward.1} parent=1 // pred_fallthru
      _
    %v30 = vld [vmem:[%s0] sm:$0xff]
    %v31 = vld [vmem:[%s1] sm:$0xff]
    %v32 = vld [vmem:[%s2] sm:$0xf]
    %v33 = vld [vmem:[%s2 + $0x4] sm:$0xf]
    %v34 = vld [vmem:[%s2 + $0x8] sm:$0xf]
    %v35 = vld [vmem:[%s2 + $0xc] sm:$0xf]
    %v36 = vld [vmem:[%s2 + $0x10] sm:$0xf]
    %v37 = vld [vmem:[%s2 + $0x14] sm:$0xf]
    %v38 = vld [vmem:[%s2 + $0x18] sm:$0xf]
    %v39 = vld [vmem:[%s2 + $0x1c] sm:$0xf]
    %v40 = vld [vmem:[%s2 + $0x20] sm:$0xf]
    %v41 = vld [vmem:[%s2 + $0x24] sm:$0xf]
    %v42 = vld [vmem:[%s2 + $0x28] sm:$0xf]
    %v43 = vld [vmem:[%s2 + $0x2c] sm:$0xf]
    %v44 = vld [vmem:[%s2 + $0x30] sm:$0xf]
    %v45 = vld [vmem:[%s2 + $0x34] sm:$0xf]
    %v46 = vld [vmem:[#allocation2] sm:$0xff]
    %v47 = vlaneseq
    %v48 = vshrl.u32 %v47, 7
    %v49 = vsub.s32 0, %v48
    %v50 = vrot.slane %v46, %v49
    %v51 = vlaneseq
    %v52 = vshrl.u32 %v51, 7
    %v53 = vsub.s32 1, %v52
    %v54 = vrot.slane %v46, %v53
    %v55 = vlaneseq
    %v56 = vshrl.u32 %v55, 7
    %v57 = vsub.s32 3, %v56
    %v58 = vrot.slane %v46, %v57
    %v59 = vlaneseq
    %v60 = vshrl.u32 %v59, 7
    %v61 = vsub.s32 4, %v60
    %v62 = vrot.slane %v46, %v61
    %v63 = vlaneseq
    %v64 = vshrl.u32 %v63, 7
    %v65 = vsub.s32 5, %v64
    %v66 = vrot.slane %v46, %v65
    %v67 = vlaneseq
    %v68 = vshrl.u32 %v67, 7
    %v69 = vsub.s32 6, %v68
    %v70 = vrot.slane %v46, %v69
    %v71 = vpack.c.bf16 %v30, %v30
    %v74 = vunpack.c.l.b16 %v32
    %v75 = vunpack.c.l.b16 %v33
    %v76 = vpack.c.b16 %v75, %v74
    %vm78 = vcmask 130048
    %v80 = vsel %vm78, %v71, 0
    %82 = vmatprep.subr.bf16.mxu0 0
    %83 = vmatpush1.bf16.msra.mxu0 %v76
    %84 = vmatprep.subr.bf16.mxu0 0
    %85 = vmatpush1.bf16.msra.mxu0 0
    %86 = vmatprep.subr.bf16.mxu0 0
    %87 = vmatpush1.bf16.msra.mxu0 0
    %88 = vmatprep.subr.bf16.mxu0 0
    %89 = vmatpush1.bf16.msra.mxu0 0
    %90 = vmatprep.subr.bf16.mxu0 0
    %91 = vmatpush1.bf16.msra.mxu0 0
    %92 = vmatprep.subr.bf16.mxu0 0
    %93 = vmatpush1.bf16.msra.mxu0 0
    %94 = vmatprep.subr.bf16.mxu0 0
    %95 = vmatpush1.bf16.msra.mxu0 0
    %96 = vmatprep.subr.bf16.mxu0 0
    %97 = vmatpush1.bf16.msra.mxu0 0
    %98 = vmatprep.subr.bf16.mxu0 0
    %99 = vmatpush1.bf16.msra.mxu0 0
    %100 = vmatprep.subr.bf16.mxu0 0
    %101 = vmatpush1.bf16.msra.mxu0 0
    %102 = vmatprep.subr.bf16.mxu0 0
    %103 = vmatpush1.bf16.msra.mxu0 0
    %104 = vmatprep.subr.bf16.mxu0 0
    %105 = vmatpush1.bf16.msra.mxu0 0
    %106 = vmatprep.subr.bf16.mxu0 0
    %107 = vmatpush1.bf16.msra.mxu0 0
    %108 = vmatprep.subr.bf16.mxu0 0
    %109 = vmatpush1.bf16.msra.mxu0 0
    %110 = vmatprep.subr.bf16.mxu0 0
    %111 = vmatpush1.bf16.msra.mxu0 0
    %112 = vmatprep.subr.bf16.mxu0 0
    %113 = vmatpush1.bf16.msra.mxu0 0
    %114 = vmatprep.mubr.bf16.mxu0 0
    %115 = vmatmul.mubr.bf16.gmra.mrb[0].mxu0 %v80
    %v116 = vpop.f32.mrb[0].mxu0
    %v117 = vadd.f32 %v50, %v116
    %v118 = vpop.f32.mrb[0].mxu0
    %v119 = vpop.f32.mrb[0].mxu0
    %v120 = vpop.f32.mrb[0].mxu0
    %121 = vdwg.mxu0
    %v122 = vpack.c.bf16 %v117, %v117
    %v127 = vunpack.c.l.b16 %v34
    %v128 = vunpack.c.l.b16 %v35
    %v129 = vunpack.c.l.b16 %v36
    %v130 = vunpack.c.l.b16 %v37
    %v131 = vpack.c.b16 %v128, %v127
    %v132 = vpack.c.b16 %v130, %v129
    %vm135 = vcmask 261120
    %v137 = vsel %vm135, %v122, 0
    %139 = vmatprep.subr.bf16.mxu0 0
    %140 = vmatpush1.bf16.msra.mxu0 %v131
    %141 = vmatprep.subr.bf16.mxu0 0
    %142 = vmatpush1.bf16.msra.mxu0 %v132
    %143 = vmatprep.subr.bf16.mxu0 0
    %144 = vmatpush1.bf16.msra.mxu0 0
    %145 = vmatprep.subr.bf16.mxu0 0
    %146 = vmatpush1.bf16.msra.mxu0 0
    %147 = vmatprep.subr.bf16.mxu0 0
    %148 = vmatpush1.bf16.msra.mxu0 0
    %149 = vmatprep.subr.bf16.mxu0 0
    %150 = vmatpush1.bf16.msra.mxu0 0
    %151 = vmatprep.subr.bf16.mxu0 0
    %152 = vmatpush1.bf16.msra.mxu0 0
    %153 = vmatprep.subr.bf16.mxu0 0
    %154 = vmatpush1.bf16.msra.mxu0 0
    %155 = vmatprep.subr.bf16.mxu0 0
    %156 = vmatpush1.bf16.msra.mxu0 0
    %157 = vmatprep.subr.bf16.mxu0 0
    %158 = vmatpush1.bf16.msra.mxu0 0
    %159 = vmatprep.subr.bf16.mxu0 0
    %160 = vmatpush1.bf16.msra.mxu0 0
    %161 = vmatprep.subr.bf16.mxu0 0
    %162 = vmatpush1.bf16.msra.mxu0 0
    %163 = vmatprep.subr.bf16.mxu0 0
    %164 = vmatpush1.bf16.msra.mxu0 0
    %165 = vmatprep.subr.bf16.mxu0 0
    %166 = vmatpush1.bf16.msra.mxu0 0
    %167 = vmatprep.subr.bf16.mxu0 0
    %168 = vmatpush1.bf16.msra.mxu0 0
    %169 = vmatprep.subr.bf16.mxu0 0
    %170 = vmatpush1.bf16.msra.mxu0 0
    %171 = vmatprep.mubr.bf16.mxu0 0
    %172 = vmatmul.mubr.bf16.gmra.mrb[0].mxu0 %v137
    %v173 = vpop.f32.mrb[0].mxu0
    %v174 = vadd.f32 %v54, %v173
    %v175 = vpop.f32.mrb[0].mxu0
    %v176 = vpop.f32.mrb[0].mxu0
    %v177 = vpop.f32.mrb[0].mxu0
    %178 = vdwg.mxu0
    %v179 = vlaneseq
    %v180 = vshrl.u32 %v179, 7
    %v181 = vsub.s32 2, %v180
    %v182 = vrot.slane %v46, %v181
    %v183 = vadd.f32 %v182, %v174
    %v184 = vxor.u32 %v183, 2147483648
    %v185 = vmul.f32 %v184, 1.442695
    %v186 = vpow.pop %v185
    %v187 = vadd.f32 %v186, 1.0
    %v188 = vrcp.pop %v187
    %v189 = vmul.f32 1.0, %v188
    %191 = vrot.lane.b32.xlu0 %v174, 64
    %v192 = vpop.permute.xlu0 %191
    %v194 = vmul.f32 %v189, %v192
    %196 = vrot.lane.b32.xlu0 %v194, 64
    %v197 = vpop.permute.xlu0 %196
    %v199 = vadd.f32 %v182, %v197
    %v200 = vtanh.pop %v199
    %v201 = vsub.f32 1.0, %v189
    %203 = vrot.lane.b32.xlu0 %v200, 96
    %v204 = vpop.permute.xlu0 %203
    %v206 = vmul.f32 %v201, %v204
    %208 = vrot.lane.b32.xlu0 %v117, 32
    %v209 = vpop.permute.xlu0 %208
    %v211 = vmul.f32 %v189, %v209
    %v212 = vadd.f32 %v206, %v211
    %v213 = vpack.c.bf16 %v212, %v212
    %215 = vrot.lane.b32.xlu0 %v213, 96
    %v216 = vpop.permute.xlu0 %215
    %v218 = vsel %vm135, %v216, 0
    %220 = vmatprep.subr.bf16.mxu0 0
    %221 = vmatpush1.bf16.msra.mxu0 %v131
    %222 = vmatprep.subr.bf16.mxu0 0
    %223 = vmatpush1.bf16.msra.mxu0 %v132
    %224 = vmatprep.subr.bf16.mxu0 0
    %225 = vmatpush1.bf16.msra.mxu0 0
    %226 = vmatprep.subr.bf16.mxu0 0
    %227 = vmatpush1.bf16.msra.mxu0 0
    %228 = vmatprep.subr.bf16.mxu0 0
    %229 = vmatpush1.bf16.msra.mxu0 0
    %230 = vmatprep.subr.bf16.mxu0 0
    %231 = vmatpush1.bf16.msra.mxu0 0
    %232 = vmatprep.subr.bf16.mxu0 0
    %233 = vmatpush1.bf16.msra.mxu0 0
    %234 = vmatprep.subr.bf16.mxu0 0
    %235 = vmatpush1.bf16.msra.mxu0 0
    %236 = vmatprep.subr.bf16.mxu0 0
    %237 = vmatpush1.bf16.msra.mxu0 0
    %238 = vmatprep.subr.bf16.mxu0 0
    %239 = vmatpush1.bf16.msra.mxu0 0
    %240 = vmatprep.subr.bf16.mxu0 0
    %241 = vmatpush1.bf16.msra.mxu0 0
    %242 = vmatprep.subr.bf16.mxu0 0
    %243 = vmatpush1.bf16.msra.mxu0 0
    %244 = vmatprep.subr.bf16.mxu0 0
    %245 = vmatpush1.bf16.msra.mxu0 0
    %246 = vmatprep.subr.bf16.mxu0 0
    %247 = vmatpush1.bf16.msra.mxu0 0
    %248 = vmatprep.subr.bf16.mxu0 0
    %249 = vmatpush1.bf16.msra.mxu0 0
    %250 = vmatprep.subr.bf16.mxu0 0
    %251 = vmatpush1.bf16.msra.mxu0 0
    %252 = vmatprep.mubr.bf16.mxu0 0
    %253 = vmatmul.mubr.bf16.gmra.mrb[0].mxu0 %v218
    %v254 = vpop.f32.mrb[0].mxu0
    %v255 = vadd.f32 %v54, %v254
    %v256 = vpop.f32.mrb[0].mxu0
    %v257 = vpop.f32.mrb[0].mxu0
    %v258 = vpop.f32.mrb[0].mxu0
    %259 = vdwg.mxu0
    %vm260 = vcmask 917248
    %v261 = vsel %vm260, %v255, -inf
    %262 = vmax.xlane.f32.xlu0 %v261
    %v263 = vpop.xlane.xlu0 %262
    %v264 = vsub.f32 %v255, %v263
    %v265 = vmul.f32 %v264, 1.442695
    %v266 = vpow.pop %v265
    %268 = vrot.lane.b32.xlu0 %v266, 32
    %v269 = vpop.permute.xlu0 %268
    %v271 = vsel %vm78, %v269, 0.0
    %272 = vadd.xlane.f32.xlu0 %v271
    %v273 = vpop.xlane.xlu0 %272
    %v274 = vrcp.pop %v273
    %v275 = vmul.f32 %v266, %v274
    %v276 = vpack.c.bf16 %v275, %v275
    %278 = vrot.lane.b32.xlu0 %v276, 32
    %v279 = vpop.permute.xlu0 %278
    %v282 = vunpack.c.l.b16 %v38
    %v283 = vunpack.c.l.b16 %v39
    %v284 = vpack.c.b16 %v283, %v282
    %v287 = vsel %vm78, %v279, 0
    %289 = vmatprep.subr.bf16.mxu0 0
    %290 = vmatpush1.bf16.msra.mxu0 %v284
    %291 = vmatprep.subr.bf16.mxu0 0
    %292 = vmatpush1.bf16.msra.mxu0 0
    %293 = vmatprep.subr.bf16.mxu0 0
    %294 = vmatpush1.bf16.msra.mxu0 0
    %295 = vmatprep.subr.bf16.mxu0 0
    %296 = vmatpush1.bf16.msra.mxu0 0
    %297 = vmatprep.subr.bf16.mxu0 0
    %298 = vmatpush1.bf16.msra.mxu0 0
    %299 = vmatprep.subr.bf16.mxu0 0
    %300 = vmatpush1.bf16.msra.mxu0 0
    %301 = vmatprep.subr.bf16.mxu0 0
    %302 = vmatpush1.bf16.msra.mxu0 0
    %303 = vmatprep.subr.bf16.mxu0 0
    %304 = vmatpush1.bf16.msra.mxu0 0
    %305 = vmatprep.subr.bf16.mxu0 0
    %306 = vmatpush1.bf16.msra.mxu0 0
    %307 = vmatprep.subr.bf16.mxu0 0
    %308 = vmatpush1.bf16.msra.mxu0 0
    %309 = vmatprep.subr.bf16.mxu0 0
    %310 = vmatpush1.bf16.msra.mxu0 0
    %311 = vmatprep.subr.bf16.mxu0 0
    %312 = vmatpush1.bf16.msra.mxu0 0
    %313 = vmatprep.subr.bf16.mxu0 0
    %314 = vmatpush1.bf16.msra.mxu0 0
    %315 = vmatprep.subr.bf16.mxu0 0
    %316 = vmatpush1.bf16.msra.mxu0 0
    %317 = vmatprep.subr.bf16.mxu0 0
    %318 = vmatpush1.bf16.msra.mxu0 0
    %319 = vmatprep.subr.bf16.mxu0 0
    %320 = vmatpush1.bf16.msra.mxu0 0
    %321 = vmatprep.mubr.bf16.mxu0 0
    %322 = vmatmul.mubr.bf16.gmra.mrb[0].mxu0 %v287
    %v323 = vpop.f32.mrb[0].mxu0
    %v324 = vadd.f32 %v58, %v323
    %v325 = vpop.f32.mrb[0].mxu0
    %v326 = vpop.f32.mrb[0].mxu0
    %v327 = vpop.f32.mrb[0].mxu0
    %328 = vdwg.mxu0
    %v329 = vadd.f32 %v324, %v255
    %v330 = vxor.u32 %v329, 2147483648
    %v331 = vmul.f32 %v330, 1.442695
    %v332 = vpow.pop %v331
    %v333 = vadd.f32 %v332, 1.0
    %v334 = vrcp.pop %v333
    %v335 = vmul.f32 1.0, %v334
    %337 = vrot.lane.b32.xlu0 %v255, 64
    %v338 = vpop.permute.xlu0 %337
    %v340 = vmul.f32 %v335, %v338
    %342 = vrot.lane.b32.xlu0 %v340, 64
    %v343 = vpop.permute.xlu0 %342
    %v345 = vadd.f32 %v324, %v343
    %v346 = vtanh.pop %v345
    %v347 = vsub.f32 1.0, %v335
    %349 = vrot.lane.b32.xlu0 %v346, 96
    %v350 = vpop.permute.xlu0 %349
    %v352 = vmul.f32 %v347, %v350
    %v353 = vmul.f32 %v335, %v212
    %v354 = vadd.f32 %v352, %v353
    %v355 = vpack.c.bf16 %v354, %v354
    %357 = vrot.lane.b32.xlu0 %v355, 96
    %v358 = vpop.permute.xlu0 %357
    %v360 = vsel %vm135, %v358, 0
    %362 = vmatprep.subr.bf16.mxu0 0
    %363 = vmatpush1.bf16.msra.mxu0 %v131
    %364 = vmatprep.subr.bf16.mxu0 0
    %365 = vmatpush1.bf16.msra.mxu0 %v132
    %366 = vmatprep.subr.bf16.mxu0 0
    %367 = vmatpush1.bf16.msra.mxu0 0
    %368 = vmatprep.subr.bf16.mxu0 0
    %369 = vmatpush1.bf16.msra.mxu0 0
    %370 = vmatprep.subr.bf16.mxu0 0
    %371 = vmatpush1.bf16.msra.mxu0 0
    %372 = vmatprep.subr.bf16.mxu0 0
    %373 = vmatpush1.bf16.msra.mxu0 0
    %374 = vmatprep.subr.bf16.mxu0 0
    %375 = vmatpush1.bf16.msra.mxu0 0
    %376 = vmatprep.subr.bf16.mxu0 0
    %377 = vmatpush1.bf16.msra.mxu0 0
    %378 = vmatprep.subr.bf16.mxu0 0
    %379 = vmatpush1.bf16.msra.mxu0 0
    %380 = vmatprep.subr.bf16.mxu0 0
    %381 = vmatpush1.bf16.msra.mxu0 0
    %382 = vmatprep.subr.bf16.mxu0 0
    %383 = vmatpush1.bf16.msra.mxu0 0
    %384 = vmatprep.subr.bf16.mxu0 0
    %385 = vmatpush1.bf16.msra.mxu0 0
    %386 = vmatprep.subr.bf16.mxu0 0
    %387 = vmatpush1.bf16.msra.mxu0 0
    %388 = vmatprep.subr.bf16.mxu0 0
    %389 = vmatpush1.bf16.msra.mxu0 0
    %390 = vmatprep.subr.bf16.mxu0 0
    %391 = vmatpush1.bf16.msra.mxu0 0
    %392 = vmatprep.subr.bf16.mxu0 0
    %393 = vmatpush1.bf16.msra.mxu0 0
    %394 = vmatprep.mubr.bf16.mxu0 0
    %395 = vmatmul.mubr.bf16.gmra.mrb[0].mxu0 %v360
    %v396 = vpop.f32.mrb[0].mxu0
    %v397 = vadd.f32 %v54, %v396
    %v398 = vpop.f32.mrb[0].mxu0
    %v399 = vpop.f32.mrb[0].mxu0
    %v400 = vpop.f32.mrb[0].mxu0
    %401 = vdwg.mxu0
    %v402 = vsel %vm260, %v397, -inf
    %403 = vmax.xlane.f32.xlu0 %v402
    %v404 = vpop.xlane.xlu0 %403
    %v405 = vsub.f32 %v397, %v404
    %v406 = vmul.f32 %v405, 1.442695
    %v407 = vpow.pop %v406
    %409 = vrot.lane.b32.xlu0 %v407, 32
    %v410 = vpop.permute.xlu0 %409
    %v412 = vsel %vm78, %v410, 0.0
    %413 = vadd.xlane.f32.xlu0 %v412
    %v414 = vpop.xlane.xlu0 %413
    %v415 = vrcp.pop %v414
    %v416 = vmul.f32 %v407, %v415
    %v417 = vpack.c.bf16 %v416, %v416
    %419 = vrot.lane.b32.xlu0 %v417, 32
    %v420 = vpop.permute.xlu0 %419
    %v422 = vsel %vm78, %v420, 0
    %424 = vmatprep.subr.bf16.mxu0 0
    %425 = vmatpush1.bf16.msra.mxu0 %v284
    %426 = vmatprep.subr.bf16.mxu0 0
    %427 = vmatpush1.bf16.msra.mxu0 0
    %428 = vmatprep.subr.bf16.mxu0 0
    %429 = vmatpush1.bf16.msra.mxu0 0
    %430 = vmatprep.subr.bf16.mxu0 0
    %431 = vmatpush1.bf16.msra.mxu0 0
    %432 = vmatprep.subr.bf16.mxu0 0
    %433 = vmatpush1.bf16.msra.mxu0 0
    %434 = vmatprep.subr.bf16.mxu0 0
    %435 = vmatpush1.bf16.msra.mxu0 0
    %436 = vmatprep.subr.bf16.mxu0 0
    %437 = vmatpush1.bf16.msra.mxu0 0
    %438 = vmatprep.subr.bf16.mxu0 0
    %439 = vmatpush1.bf16.msra.mxu0 0
    %440 = vmatprep.subr.bf16.mxu0 0
    %441 = vmatpush1.bf16.msra.mxu0 0
    %442 = vmatprep.subr.bf16.mxu0 0
    %443 = vmatpush1.bf16.msra.mxu0 0
    %444 = vmatprep.subr.bf16.mxu0 0
    %445 = vmatpush1.bf16.msra.mxu0 0
    %446 = vmatprep.subr.bf16.mxu0 0
    %447 = vmatpush1.bf16.msra.mxu0 0
    %448 = vmatprep.subr.bf16.mxu0 0
    %449 = vmatpush1.bf16.msra.mxu0 0
    %450 = vmatprep.subr.bf16.mxu0 0
    %451 = vmatpush1.bf16.msra.mxu0 0
    %452 = vmatprep.subr.bf16.mxu0 0
    %453 = vmatpush1.bf16.msra.mxu0 0
    %454 = vmatprep.subr.bf16.mxu0 0
    %455 = vmatpush1.bf16.msra.mxu0 0
    %456 = vmatprep.mubr.bf16.mxu0 0
    %457 = vmatmul.mubr.bf16.gmra.mrb[0].mxu0 %v422
    %v458 = vpop.f32.mrb[0].mxu0
    %v459 = vadd.f32 %v58, %v458
    %v460 = vpop.f32.mrb[0].mxu0
    %v461 = vpop.f32.mrb[0].mxu0
    %v462 = vpop.f32.mrb[0].mxu0
    %463 = vdwg.mxu0
    %v464 = vadd.f32 %v459, %v397
    %v465 = vxor.u32 %v464, 2147483648
    %v466 = vmul.f32 %v465, 1.442695
    %v467 = vpow.pop %v466
    %v468 = vadd.f32 %v467, 1.0
    %v469 = vrcp.pop %v468
    %v470 = vmul.f32 1.0, %v469
    %472 = vrot.lane.b32.xlu0 %v397, 64
    %v473 = vpop.permute.xlu0 %472
    %v475 = vmul.f32 %v470, %v473
    %477 = vrot.lane.b32.xlu0 %v475, 64
    %v478 = vpop.permute.xlu0 %477
    %v480 = vadd.f32 %v459, %v478
    %v481 = vtanh.pop %v480
    %v482 = vsub.f32 1.0, %v470
    %484 = vrot.lane.b32.xlu0 %v481, 96
    %v485 = vpop.permute.xlu0 %484
    %v487 = vmul.f32 %v482, %v485
    %v488 = vmul.f32 %v470, %v354
    %v489 = vadd.f32 %v487, %v488
    %v490 = vpack.c.bf16 %v489, %v489
    %492 = vrot.lane.b32.xlu0 %v490, 96
    %v493 = vpop.permute.xlu0 %492
    %v495 = vsel %vm135, %v493, 0
    %497 = vmatprep.subr.bf16.mxu0 0
    %498 = vmatpush1.bf16.msra.mxu0 %v131
    %499 = vmatprep.subr.bf16.mxu0 0
    %500 = vmatpush1.bf16.msra.mxu0 %v132
    %501 = vmatprep.subr.bf16.mxu0 0
    %502 = vmatpush1.bf16.msra.mxu0 0
    %503 = vmatprep.subr.bf16.mxu0 0
    %504 = vmatpush1.bf16.msra.mxu0 0
    %505 = vmatprep.subr.bf16.mxu0 0
    %506 = vmatpush1.bf16.msra.mxu0 0
    %507 = vmatprep.subr.bf16.mxu0 0
    %508 = vmatpush1.bf16.msra.mxu0 0
    %509 = vmatprep.subr.bf16.mxu0 0
    %510 = vmatpush1.bf16.msra.mxu0 0
    %511 = vmatprep.subr.bf16.mxu0 0
    %512 = vmatpush1.bf16.msra.mxu0 0
    %513 = vmatprep.subr.bf16.mxu0 0
    %514 = vmatpush1.bf16.msra.mxu0 0
    %515 = vmatprep.subr.bf16.mxu0 0
    %516 = vmatpush1.bf16.msra.mxu0 0
    %517 = vmatprep.subr.bf16.mxu0 0
    %518 = vmatpush1.bf16.msra.mxu0 0
    %519 = vmatprep.subr.bf16.mxu0 0
    %520 = vmatpush1.bf16.msra.mxu0 0
    %521 = vmatprep.subr.bf16.mxu0 0
    %522 = vmatpush1.bf16.msra.mxu0 0
    %523 = vmatprep.subr.bf16.mxu0 0
    %524 = vmatpush1.bf16.msra.mxu0 0
    %525 = vmatprep.subr.bf16.mxu0 0
    %526 = vmatpush1.bf16.msra.mxu0 0
    %527 = vmatprep.subr.bf16.mxu0 0
    %528 = vmatpush1.bf16.msra.mxu0 0
    %529 = vmatprep.mubr.bf16.mxu0 0
    %530 = vmatmul.mubr.bf16.gmra.mrb[0].mxu0 %v495
    %v531 = vpop.f32.mrb[0].mxu0
    %v532 = vadd.f32 %v54, %v531
    %v533 = vpop.f32.mrb[0].mxu0
    %v534 = vpop.f32.mrb[0].mxu0
    %v535 = vpop.f32.mrb[0].mxu0
    %536 = vdwg.mxu0
    %v537 = vsel %vm260, %v532, -inf
    %538 = vmax.xlane.f32.xlu0 %v537
    %v539 = vpop.xlane.xlu0 %538
    %v540 = vsub.f32 %v532, %v539
    %v541 = vmul.f32 %v540, 1.442695
    %v542 = vpow.pop %v541
    %544 = vrot.lane.b32.xlu0 %v542, 32
    %v545 = vpop.permute.xlu0 %544
    %v547 = vsel %vm78, %v545, 0.0
    %548 = vadd.xlane.f32.xlu0 %v547
    %v549 = vpop.xlane.xlu0 %548
    %v550 = vrcp.pop %v549
    %v551 = vmul.f32 %v542, %v550
    %v552 = vpack.c.bf16 %v551, %v551
    %554 = vrot.lane.b32.xlu0 %v552, 32
    %v555 = vpop.permute.xlu0 %554
    %v557 = vsel %vm78, %v555, 0
    %559 = vmatprep.subr.bf16.mxu0 0
    %560 = vmatpush1.bf16.msra.mxu0 %v284
    %561 = vmatprep.subr.bf16.mxu0 0
    %562 = vmatpush1.bf16.msra.mxu0 0
    %563 = vmatprep.subr.bf16.mxu0 0
    %564 = vmatpush1.bf16.msra.mxu0 0
    %565 = vmatprep.subr.bf16.mxu0 0
    %566 = vmatpush1.bf16.msra.mxu0 0
    %567 = vmatprep.subr.bf16.mxu0 0
    %568 = vmatpush1.bf16.msra.mxu0 0
    %569 = vmatprep.subr.bf16.mxu0 0
    %570 = vmatpush1.bf16.msra.mxu0 0
    %571 = vmatprep.subr.bf16.mxu0 0
    %572 = vmatpush1.bf16.msra.mxu0 0
    %573 = vmatprep.subr.bf16.mxu0 0
    %574 = vmatpush1.bf16.msra.mxu0 0
    %575 = vmatprep.subr.bf16.mxu0 0
    %576 = vmatpush1.bf16.msra.mxu0 0
    %577 = vmatprep.subr.bf16.mxu0 0
    %578 = vmatpush1.bf16.msra.mxu0 0
    %579 = vmatprep.subr.bf16.mxu0 0
    %580 = vmatpush1.bf16.msra.mxu0 0
    %581 = vmatprep.subr.bf16.mxu0 0
    %582 = vmatpush1.bf16.msra.mxu0 0
    %583 = vmatprep.subr.bf16.mxu0 0
    %584 = vmatpush1.bf16.msra.mxu0 0
    %585 = vmatprep.subr.bf16.mxu0 0
    %586 = vmatpush1.bf16.msra.mxu0 0
    %587 = vmatprep.subr.bf16.mxu0 0
    %588 = vmatpush1.bf16.msra.mxu0 0
    %589 = vmatprep.subr.bf16.mxu0 0
    %590 = vmatpush1.bf16.msra.mxu0 0
    %591 = vmatprep.mubr.bf16.mxu0 0
    %592 = vmatmul.mubr.bf16.gmra.mrb[0].mxu0 %v557
    %v593 = vpop.f32.mrb[0].mxu0
    %v594 = vadd.f32 %v58, %v593
    %v595 = vpop.f32.mrb[0].mxu0
    %v596 = vpop.f32.mrb[0].mxu0
    %v597 = vpop.f32.mrb[0].mxu0
    %598 = vdwg.mxu0
    %v599 = vadd.f32 %v594, %v532
    %v600 = vxor.u32 %v599, 2147483648
    %v601 = vmul.f32 %v600, 1.442695
    %v602 = vpow.pop %v601
    %v603 = vadd.f32 %v602, 1.0
    %v604 = vrcp.pop %v603
    %v605 = vmul.f32 1.0, %v604
    %607 = vrot.lane.b32.xlu0 %v532, 64
    %v608 = vpop.permute.xlu0 %607
    %v610 = vmul.f32 %v605, %v608
    %612 = vrot.lane.b32.xlu0 %v610, 64
    %v613 = vpop.permute.xlu0 %612
    %v615 = vadd.f32 %v594, %v613
    %v616 = vtanh.pop %v615
    %v617 = vsub.f32 1.0, %v605
    %619 = vrot.lane.b32.xlu0 %v616, 96
    %v620 = vpop.permute.xlu0 %619
    %v622 = vmul.f32 %v617, %v620
    %v623 = vmul.f32 %v605, %v489
    %v624 = vadd.f32 %v622, %v623
    %v625 = vpack.c.bf16 %v624, %v624
    %627 = vrot.lane.b32.xlu0 %v625, 96
    %v628 = vpop.permute.xlu0 %627
    %v630 = vsel %vm135, %v628, 0
    %632 = vmatprep.subr.bf16.mxu0 0
    %633 = vmatpush1.bf16.msra.mxu0 %v131
    %634 = vmatprep.subr.bf16.mxu0 0
    %635 = vmatpush1.bf16.msra.mxu0 %v132
    %636 = vmatprep.subr.bf16.mxu0 0
    %637 = vmatpush1.bf16.msra.mxu0 0
    %638 = vmatprep.subr.bf16.mxu0 0
    %639 = vmatpush1.bf16.msra.mxu0 0
    %640 = vmatprep.subr.bf16.mxu0 0
    %641 = vmatpush1.bf16.msra.mxu0 0
    %642 = vmatprep.subr.bf16.mxu0 0
    %643 = vmatpush1.bf16.msra.mxu0 0
    %644 = vmatprep.subr.bf16.mxu0 0
    %645 = vmatpush1.bf16.msra.mxu0 0
    %646 = vmatprep.subr.bf16.mxu0 0
    %647 = vmatpush1.bf16.msra.mxu0 0
    %648 = vmatprep.subr.bf16.mxu0 0
    %649 = vmatpush1.bf16.msra.mxu0 0
    %650 = vmatprep.subr.bf16.mxu0 0
    %651 = vmatpush1.bf16.msra.mxu0 0
    %652 = vmatprep.subr.bf16.mxu0 0
    %653 = vmatpush1.bf16.msra.mxu0 0
    %654 = vmatprep.subr.bf16.mxu0 0
    %655 = vmatpush1.bf16.msra.mxu0 0
    %656 = vmatprep.subr.bf16.mxu0 0
    %657 = vmatpush1.bf16.msra.mxu0 0
    %658 = vmatprep.subr.bf16.mxu0 0
    %659 = vmatpush1.bf16.msra.mxu0 0
    %660 = vmatprep.subr.bf16.mxu0 0
    %661 = vmatpush1.bf16.msra.mxu0 0
    %662 = vmatprep.subr.bf16.mxu0 0
    %663 = vmatpush1.bf16.msra.mxu0 0
    %664 = vmatprep.mubr.bf16.mxu0 0
    %665 = vmatmul.mubr.bf16.gmra.mrb[0].mxu0 %v630
    %v666 = vpop.f32.mrb[0].mxu0
    %v667 = vadd.f32 %v54, %v666
    %v668 = vpop.f32.mrb[0].mxu0
    %v669 = vpop.f32.mrb[0].mxu0
    %v670 = vpop.f32.mrb[0].mxu0
    %671 = vdwg.mxu0
    %v672 = vsel %vm260, %v667, -inf
    %673 = vmax.xlane.f32.xlu0 %v672
    %v674 = vpop.xlane.xlu0 %673
    %v675 = vsub.f32 %v667, %v674
    %v676 = vmul.f32 %v675, 1.442695
    %v677 = vpow.pop %v676
    %679 = vrot.lane.b32.xlu0 %v677, 32
    %v680 = vpop.permute.xlu0 %679
    %v682 = vsel %vm78, %v680, 0.0
    %683 = vadd.xlane.f32.xlu0 %v682
    %v684 = vpop.xlane.xlu0 %683
    %v685 = vrcp.pop %v684
    %v686 = vmul.f32 %v677, %v685
    %v687 = vpack.c.bf16 %v686, %v686
    %689 = vrot.lane.b32.xlu0 %v687, 32
    %v690 = vpop.permute.xlu0 %689
    %v692 = vsel %vm78, %v690, 0
    %694 = vmatprep.subr.bf16.mxu0 0
    %695 = vmatpush1.bf16.msra.mxu0 %v284
    %696 = vmatprep.subr.bf16.mxu0 0
    %697 = vmatpush1.bf16.msra.mxu0 0
    %698 = vmatprep.subr.bf16.mxu0 0
    %699 = vmatpush1.bf16.msra.mxu0 0
    %700 = vmatprep.subr.bf16.mxu0 0
    %701 = vmatpush1.bf16.msra.mxu0 0
    %702 = vmatprep.subr.bf16.mxu0 0
    %703 = vmatpush1.bf16.msra.mxu0 0
    %704 = vmatprep.subr.bf16.mxu0 0
    %705 = vmatpush1.bf16.msra.mxu0 0
    %706 = vmatprep.subr.bf16.mxu0 0
    %707 = vmatpush1.bf16.msra.mxu0 0
    %708 = vmatprep.subr.bf16.mxu0 0
    %709 = vmatpush1.bf16.msra.mxu0 0
    %710 = vmatprep.subr.bf16.mxu0 0
    %711 = vmatpush1.bf16.msra.mxu0 0
    %712 = vmatprep.subr.bf16.mxu0 0
    %713 = vmatpush1.bf16.msra.mxu0 0
    %714 = vmatprep.subr.bf16.mxu0 0
    %715 = vmatpush1.bf16.msra.mxu0 0
    %716 = vmatprep.subr.bf16.mxu0 0
    %717 = vmatpush1.bf16.msra.mxu0 0
    %718 = vmatprep.subr.bf16.mxu0 0
    %719 = vmatpush1.bf16.msra.mxu0 0
    %720 = vmatprep.subr.bf16.mxu0 0
    %721 = vmatpush1.bf16.msra.mxu0 0
    %722 = vmatprep.subr.bf16.mxu0 0
    %723 = vmatpush1.bf16.msra.mxu0 0
    %724 = vmatprep.subr.bf16.mxu0 0
    %725 = vmatpush1.bf16.msra.mxu0 0
    %726 = vmatprep.mubr.bf16.mxu0 0
    %727 = vmatmul.mubr.bf16.gmra.mrb[0].mxu0 %v692
    %v728 = vpop.f32.mrb[0].mxu0
    %v729 = vadd.f32 %v58, %v728
    %v730 = vpop.f32.mrb[0].mxu0
    %v731 = vpop.f32.mrb[0].mxu0
    %v732 = vpop.f32.mrb[0].mxu0
    %733 = vdwg.mxu0
    %v734 = vadd.f32 %v729, %v667
    %v735 = vxor.u32 %v734, 2147483648
    %v736 = vmul.f32 %v735, 1.442695
    %v737 = vpow.pop %v736
    %v738 = vadd.f32 %v737, 1.0
    %v739 = vrcp.pop %v738
    %v740 = vmul.f32 1.0, %v739
    %742 = vrot.lane.b32.xlu0 %v667, 64
    %v743 = vpop.permute.xlu0 %742
    %v745 = vmul.f32 %v740, %v743
    %747 = vrot.lane.b32.xlu0 %v745, 64
    %v748 = vpop.permute.xlu0 %747
    %v750 = vadd.f32 %v729, %v748
    %v751 = vtanh.pop %v750
    %v752 = vsub.f32 1.0, %v740
    %754 = vrot.lane.b32.xlu0 %v751, 96
    %v755 = vpop.permute.xlu0 %754
    %v757 = vmul.f32 %v752, %v755
    %v758 = vmul.f32 %v740, %v624
    %v759 = vadd.f32 %v757, %v758
    %v760 = vpack.c.bf16 %v759, %v759
    %762 = vrot.lane.b32.xlu0 %v760, 96
    %v763 = vpop.permute.xlu0 %762
    %v765 = vsel %vm135, %v763, 0
    %767 = vmatprep.subr.bf16.mxu0 0
    %768 = vmatpush1.bf16.msra.mxu0 %v131
    %769 = vmatprep.subr.bf16.mxu0 0
    %770 = vmatpush1.bf16.msra.mxu0 %v132
    %771 = vmatprep.subr.bf16.mxu0 0
    %772 = vmatpush1.bf16.msra.mxu0 0
    %773 = vmatprep.subr.bf16.mxu0 0
    %774 = vmatpush1.bf16.msra.mxu0 0
    %775 = vmatprep.subr.bf16.mxu0 0
    %776 = vmatpush1.bf16.msra.mxu0 0
    %777 = vmatprep.subr.bf16.mxu0 0
    %778 = vmatpush1.bf16.msra.mxu0 0
    %779 = vmatprep.subr.bf16.mxu0 0
    %780 = vmatpush1.bf16.msra.mxu0 0
    %781 = vmatprep.subr.bf16.mxu0 0
    %782 = vmatpush1.bf16.msra.mxu0 0
    %783 = vmatprep.subr.bf16.mxu0 0
    %784 = vmatpush1.bf16.msra.mxu0 0
    %785 = vmatprep.subr.bf16.mxu0 0
    %786 = vmatpush1.bf16.msra.mxu0 0
    %787 = vmatprep.subr.bf16.mxu0 0
    %788 = vmatpush1.bf16.msra.mxu0 0
    %789 = vmatprep.subr.bf16.mxu0 0
    %790 = vmatpush1.bf16.msra.mxu0 0
    %791 = vmatprep.subr.bf16.mxu0 0
    %792 = vmatpush1.bf16.msra.mxu0 0
    %793 = vmatprep.subr.bf16.mxu0 0
    %794 = vmatpush1.bf16.msra.mxu0 0
    %795 = vmatprep.subr.bf16.mxu0 0
    %796 = vmatpush1.bf16.msra.mxu0 0
    %797 = vmatprep.subr.bf16.mxu0 0
    %798 = vmatpush1.bf16.msra.mxu0 0
    %799 = vmatprep.mubr.bf16.mxu0 0
    %800 = vmatmul.mubr.bf16.gmra.mrb[0].mxu0 %v765
    %v801 = vpop.f32.mrb[0].mxu0
    %v802 = vadd.f32 %v54, %v801
    %v803 = vpop.f32.mrb[0].mxu0
    %v804 = vpop.f32.mrb[0].mxu0
    %v805 = vpop.f32.mrb[0].mxu0
    %806 = vdwg.mxu0
    %v807 = vsel %vm260, %v802, -inf
    %808 = vmax.xlane.f32.xlu0 %v807
    %v809 = vpop.xlane.xlu0 %808
    %v810 = vsub.f32 %v802, %v809
    %v811 = vmul.f32 %v810, 1.442695
    %v812 = vpow.pop %v811
    %814 = vrot.lane.b32.xlu0 %v812, 32
    %v815 = vpop.permute.xlu0 %814
    %v817 = vsel %vm78, %v815, 0.0
    %818 = vadd.xlane.f32.xlu0 %v817
    %v819 = vpop.xlane.xlu0 %818
    %v820 = vrcp.pop %v819
    %v821 = vmul.f32 %v812, %v820
    %v822 = vpack.c.bf16 %v821, %v821
    %824 = vrot.lane.b32.xlu0 %v822, 32
    %v825 = vpop.permute.xlu0 %824
    %v827 = vsel %vm78, %v825, 0
    %829 = vmatprep.subr.bf16.mxu0 0
    %830 = vmatpush1.bf16.msra.mxu0 %v284
    %831 = vmatprep.subr.bf16.mxu0 0
    %832 = vmatpush1.bf16.msra.mxu0 0
    %833 = vmatprep.subr.bf16.mxu0 0
    %834 = vmatpush1.bf16.msra.mxu0 0
    %835 = vmatprep.subr.bf16.mxu0 0
    %836 = vmatpush1.bf16.msra.mxu0 0
    %837 = vmatprep.subr.bf16.mxu0 0
    %838 = vmatpush1.bf16.msra.mxu0 0
    %839 = vmatprep.subr.bf16.mxu0 0
    %840 = vmatpush1.bf16.msra.mxu0 0
    %841 = vmatprep.subr.bf16.mxu0 0
    %842 = vmatpush1.bf16.msra.mxu0 0
    %843 = vmatprep.subr.bf16.mxu0 0
    %844 = vmatpush1.bf16.msra.mxu0 0
    %845 = vmatprep.subr.bf16.mxu0 0
    %846 = vmatpush1.bf16.msra.mxu0 0
    %847 = vmatprep.subr.bf16.mxu0 0
    %848 = vmatpush1.bf16.msra.mxu0 0
    %849 = vmatprep.subr.bf16.mxu0 0
    %850 = vmatpush1.bf16.msra.mxu0 0
    %851 = vmatprep.subr.bf16.mxu0 0
    %852 = vmatpush1.bf16.msra.mxu0 0
    %853 = vmatprep.subr.bf16.mxu0 0
    %854 = vmatpush1.bf16.msra.mxu0 0
    %855 = vmatprep.subr.bf16.mxu0 0
    %856 = vmatpush1.bf16.msra.mxu0 0
    %857 = vmatprep.subr.bf16.mxu0 0
    %858 = vmatpush1.bf16.msra.mxu0 0
    %859 = vmatprep.subr.bf16.mxu0 0
    %860 = vmatpush1.bf16.msra.mxu0 0
    %861 = vmatprep.mubr.bf16.mxu0 0
    %862 = vmatmul.mubr.bf16.gmra.mrb[0].mxu0 %v827
    %v863 = vpop.f32.mrb[0].mxu0
    %v864 = vadd.f32 %v58, %v863
    %v865 = vpop.f32.mrb[0].mxu0
    %v866 = vpop.f32.mrb[0].mxu0
    %v867 = vpop.f32.mrb[0].mxu0
    %868 = vdwg.mxu0
    %v869 = vadd.f32 %v864, %v802
    %v870 = vxor.u32 %v869, 2147483648
    %v871 = vmul.f32 %v870, 1.442695
    %v872 = vpow.pop %v871
    %v873 = vadd.f32 %v872, 1.0
    %v874 = vrcp.pop %v873
    %v875 = vmul.f32 1.0, %v874
    %877 = vrot.lane.b32.xlu0 %v802, 64
    %v878 = vpop.permute.xlu0 %877
    %v880 = vmul.f32 %v875, %v878
    %882 = vrot.lane.b32.xlu0 %v880, 64
    %v883 = vpop.permute.xlu0 %882
    %v885 = vadd.f32 %v864, %v883
    %v886 = vtanh.pop %v885
    %v887 = vsub.f32 1.0, %v875
    %889 = vrot.lane.b32.xlu0 %v886, 96
    %v890 = vpop.permute.xlu0 %889
    %v892 = vmul.f32 %v887, %v890
    %v893 = vmul.f32 %v875, %v759
    %v894 = vadd.f32 %v892, %v893
    %v895 = vpack.c.bf16 %v894, %v894
    %897 = vrot.lane.b32.xlu0 %v895, 96
    %v898 = vpop.permute.xlu0 %897
    %v900 = vsel %vm135, %v898, 0
    %902 = vmatprep.subr.bf16.mxu0 0
    %903 = vmatpush1.bf16.msra.mxu0 %v131
    %904 = vmatprep.subr.bf16.mxu0 0
    %905 = vmatpush1.bf16.msra.mxu0 %v132
    %906 = vmatprep.subr.bf16.mxu0 0
    %907 = vmatpush1.bf16.msra.mxu0 0
    %908 = vmatprep.subr.bf16.mxu0 0
    %909 = vmatpush1.bf16.msra.mxu0 0
    %910 = vmatprep.subr.bf16.mxu0 0
    %911 = vmatpush1.bf16.msra.mxu0 0
    %912 = vmatprep.subr.bf16.mxu0 0
    %913 = vmatpush1.bf16.msra.mxu0 0
    %914 = vmatprep.subr.bf16.mxu0 0
    %915 = vmatpush1.bf16.msra.mxu0 0
    %916 = vmatprep.subr.bf16.mxu0 0
    %917 = vmatpush1.bf16.msra.mxu0 0
    %918 = vmatprep.subr.bf16.mxu0 0
    %919 = vmatpush1.bf16.msra.mxu0 0
    %920 = vmatprep.subr.bf16.mxu0 0
    %921 = vmatpush1.bf16.msra.mxu0 0
    %922 = vmatprep.subr.bf16.mxu0 0
    %923 = vmatpush1.bf16.msra.mxu0 0
    %924 = vmatprep.subr.bf16.mxu0 0
    %925 = vmatpush1.bf16.msra.mxu0 0
    %926 = vmatprep.subr.bf16.mxu0 0
    %927 = vmatpush1.bf16.msra.mxu0 0
    %928 = vmatprep.subr.bf16.mxu0 0
    %929 = vmatpush1.bf16.msra.mxu0 0
    %930 = vmatprep.subr.bf16.mxu0 0
    %931 = vmatpush1.bf16.msra.mxu0 0
    %932 = vmatprep.subr.bf16.mxu0 0
    %933 = vmatpush1.bf16.msra.mxu0 0
    %934 = vmatprep.mubr.bf16.mxu0 0
    %935 = vmatmul.mubr.bf16.gmra.mrb[0].mxu0 %v900
    %v936 = vpop.f32.mrb[0].mxu0
    %v937 = vadd.f32 %v54, %v936
    %v938 = vpop.f32.mrb[0].mxu0
    %v939 = vpop.f32.mrb[0].mxu0
    %v940 = vpop.f32.mrb[0].mxu0
    %941 = vdwg.mxu0
    %v942 = vsel %vm260, %v937, -inf
    %943 = vmax.xlane.f32.xlu0 %v942
    %v944 = vpop.xlane.xlu0 %943
    %v945 = vsub.f32 %v937, %v944
    %v946 = vmul.f32 %v945, 1.442695
    %v947 = vpow.pop %v946
    %949 = vrot.lane.b32.xlu0 %v947, 32
    %v950 = vpop.permute.xlu0 %949
    %v952 = vsel %vm78, %v950, 0.0
    %953 = vadd.xlane.f32.xlu0 %v952
    %v954 = vpop.xlane.xlu0 %953
    %v955 = vrcp.pop %v954
    %v956 = vmul.f32 %v947, %v955
    %v957 = vlaneseq
    %v958 = vand.u32 %v957, 127
    %vm959 = vcmp.eq.s32.totalorder %v958, 0
    %v960 = vsel %vm959, 1, 0
    %v961 = vcvt.s32.f32 %v960
    %vm962 = vcmp.ne.f32.partialorder %v275, 1.0
    %v963 = vsel %vm962, 1.0, 0.0
    %965 = vrot.lane.b32.xlu0 %v963, 32
    %v966 = vpop.permute.xlu0 %965
    %v968 = vmul.f32 %v31, %v966
    %v969 = vsub.f32 1.0, %v968
    %971 = vset.pattern.permute.xlu0 0
    %972 = vperm.xlu0 %971, %v969
    %v973 = vpop.permute.xlu0 %972
    %v975 = vmul.f32 %v275, %v973
    %v976 = vpack.c.bf16 %v975, %v975
    %978 = vset.pattern.permute.xlu0 0
    %979 = vperm.xlu0 %978, %v968
    %v980 = vpop.permute.xlu0 %979
    %v982 = vmul.f32 %v980, %v70
    %984 = vrot.lane.b32.xlu0 %v976, 32
    %v985 = vpop.permute.xlu0 %984
    %v988 = vunpack.c.l.b16 %v44
    %v989 = vunpack.c.l.b16 %v45
    %v990 = vpack.c.b16 %v989, %v988
    %v993 = vsel %vm78, %v985, 0
    %995 = vmatprep.subr.bf16.mxu0 0
    %996 = vmatpush1.bf16.msra.mxu0 %v990
    %997 = vmatprep.subr.bf16.mxu0 0
    %998 = vmatpush1.bf16.msra.mxu0 0
    %999 = vmatprep.subr.bf16.mxu0 0
    %1000 = vmatpush1.bf16.msra.mxu0 0
    %1001 = vmatprep.subr.bf16.mxu0 0
    %1002 = vmatpush1.bf16.msra.mxu0 0
    %1003 = vmatprep.subr.bf16.mxu0 0
    %1004 = vmatpush1.bf16.msra.mxu0 0
    %1005 = vmatprep.subr.bf16.mxu0 0
    %1006 = vmatpush1.bf16.msra.mxu0 0
    %1007 = vmatprep.subr.bf16.mxu0 0
    %1008 = vmatpush1.bf16.msra.mxu0 0
    %1009 = vmatprep.subr.bf16.mxu0 0
    %1010 = vmatpush1.bf16.msra.mxu0 0
    %1011 = vmatprep.subr.bf16.mxu0 0
    %1012 = vmatpush1.bf16.msra.mxu0 0
    %1013 = vmatprep.subr.bf16.mxu0 0
    %1014 = vmatpush1.bf16.msra.mxu0 0
    %1015 = vmatprep.subr.bf16.mxu0 0
    %1016 = vmatpush1.bf16.msra.mxu0 0
    %1017 = vmatprep.subr.bf16.mxu0 0
    %1018 = vmatpush1.bf16.msra.mxu0 0
    %1019 = vmatprep.subr.bf16.mxu0 0
    %1020 = vmatpush1.bf16.msra.mxu0 0
    %1021 = vmatprep.subr.bf16.mxu0 0
    %1022 = vmatpush1.bf16.msra.mxu0 0
    %1023 = vmatprep.subr.bf16.mxu0 0
    %1024 = vmatpush1.bf16.msra.mxu0 0
    %1025 = vmatprep.subr.bf16.mxu0 0
    %1026 = vmatpush1.bf16.msra.mxu0 0
    %1027 = vmatprep.mubr.bf16.mxu0 0
    %1028 = vmatmul.mubr.bf16.gmra.mrb[0].mxu0 %v993
    %v1029 = vpop.f32.mrb[0].mxu0
    %v1030 = vadd.f32 %v982, %v1029
    %v1031 = vpop.f32.mrb[0].mxu0
    %v1032 = vpop.f32.mrb[0].mxu0
    %v1033 = vpop.f32.mrb[0].mxu0
    %1034 = vdwg.mxu0
    %v1035 = vadd.f32 %v1030, %v66
    %v1036 = vadd.f32 %v1035, %v62
    %v1037 = vxor.u32 %v1036, 2147483648
    %v1038 = vmul.f32 %v1037, 1.442695
    %v1039 = vpow.pop %v1038
    %v1040 = vadd.f32 %v1039, 1.0
    %v1041 = vrcp.pop %v1040
    %v1042 = vmul.f32 1.0, %v1041
    %1044 = vrot.lane.b32.xlu0 %v62, 64
    %v1045 = vpop.permute.xlu0 %1044
    %v1047 = vmul.f32 %v1042, %v1045
    %1049 = vrot.lane.b32.xlu0 %v1047, 64
    %v1050 = vpop.permute.xlu0 %1049
    %v1052 = vadd.f32 %v1035, %v1050
    %v1053 = vtanh.pop %v1052
    %v1054 = vsub.f32 1.0, %v1042
    %1056 = vrot.lane.b32.xlu0 %v1053, 96
    %v1057 = vpop.permute.xlu0 %1056
    %v1059 = vmul.f32 %v1054, %v1057
    %v1060 = vmul.f32 %v1042, 0.0
    %v1061 = vadd.f32 %v1059, %v1060
    %v1062 = vpack.c.bf16 %v1061, %v1061
    %1064 = vrot.lane.b32.xlu0 %v1062, 96
    %v1065 = vpop.permute.xlu0 %1064
    %v1070 = vunpack.c.l.b16 %v40
    %v1071 = vunpack.c.l.b16 %v41
    %v1072 = vunpack.c.l.b16 %v42
    %v1073 = vunpack.c.l.b16 %v43
    %v1074 = vpack.c.b16 %v1071, %v1070
    %v1075 = vpack.c.b16 %v1073, %v1072
    %v1079 = vsel %vm135, %v1065, 0
    %1081 = vmatprep.subr.bf16.mxu0 0
    %1082 = vmatpush1.bf16.msra.mxu0 %v1074
    %1083 = vmatprep.subr.bf16.mxu0 0
    %1084 = vmatpush1.bf16.msra.mxu0 %v1075
    %1085 = vmatprep.subr.bf16.mxu0 0
    %1086 = vmatpush1.bf16.msra.mxu0 0
    %1087 = vmatprep.subr.bf16.mxu0 0
    %1088 = vmatpush1.bf16.msra.mxu0 0
    %1089 = vmatprep.subr.bf16.mxu0 0
    %1090 = vmatpush1.bf16.msra.mxu0 0
    %1091 = vmatprep.subr.bf16.mxu0 0
    %1092 = vmatpush1.bf16.msra.mxu0 0
    %1093 = vmatprep.subr.bf16.mxu0 0
    %1094 = vmatpush1.bf16.msra.mxu0 0
    %1095 = vmatprep.subr.bf16.mxu0 0
    %1096 = vmatpush1.bf16.msra.mxu0 0
    %1097 = vmatprep.subr.bf16.mxu0 0
    %1098 = vmatpush1.bf16.msra.mxu0 0
    %1099 = vmatprep.subr.bf16.mxu0 0
    %1100 = vmatpush1.bf16.msra.mxu0 0
    %1101 = vmatprep.subr.bf16.mxu0 0
    %1102 = vmatpush1.bf16.msra.mxu0 0
    %1103 = vmatprep.subr.bf16.mxu0 0
    %1104 = vmatpush1.bf16.msra.mxu0 0
    %1105 = vmatprep.subr.bf16.mxu0 0
    %1106 = vmatpush1.bf16.msra.mxu0 0
    %1107 = vmatprep.subr.bf16.mxu0 0
    %1108 = vmatpush1.bf16.msra.mxu0 0
    %1109 = vmatprep.subr.bf16.mxu0 0
    %1110 = vmatpush1.bf16.msra.mxu0 0
    %1111 = vmatprep.subr.bf16.mxu0 0
    %1112 = vmatpush1.bf16.msra.mxu0 0
    %1113 = vmatprep.mubr.bf16.mxu0 0
    %1114 = vmatmul.mubr.bf16.gmra.mrb[0].mxu0 %v1079
    %v1115 = vpop.f32.mrb[0].mxu0
    %v1116 = vadd.f32 %v62, %v1115
    %v1117 = vpop.f32.mrb[0].mxu0
    %v1118 = vpop.f32.mrb[0].mxu0
    %v1119 = vpop.f32.mrb[0].mxu0
    %1120 = vdwg.mxu0
    %1122 = vrot.lane.b32.xlu0 %v1116, 32
    %v1123 = vpop.permute.xlu0 %1122
    %v1125 = vsub.f32 %v30, %v1123
    %v1126 = vmul.f32 %v1125, %v1125
    %v1127 = vsel %vm78, %v1126, 0.0
    %1128 = vadd.xlane.f32.xlu0 %v1127
    %v1129 = vpop.xlane.xlu0 %1128
    %v1130 = vmul.f32 %v1129, 0.0625
    %v1131 = vadd.f32 %v975, 0.0
    %v1132 = vadd.f32 %v1130, 0.01
    %v1133 = vmul.f32 %v1132, %v975
    %v1134 = vadd.f32 %v1133, 0.0
    %v1135 = vsub.f32 1.0, %v975
    %1137 = vrot.lane.b32.xlu0 %v975, 32
    %v1138 = vpop.permute.xlu0 %1137
    %1140 = vrot.lane.b32.xlu0 %v968, 16
    %v1141 = vpop.permute.xlu0 %1140
    %1143 = vrot.lane.b32.xlu0 %v1116, 49
    %v1144 = vpop.permute.xlu0 %1143
    %v1146 = vsel %vm78, %v1138, %v1141
    %vm1147 = vcmask 138240
    %v1148 = vsel %vm1147, %v1146, %v1144
    %vm1149 = vcmask 269312
    %v1150 = vsel %vm1149, %v1148, 0.0
    %vm1151 = vcmask 523264
    %1152 = vst.msk [vmem:[%s4] sm:$0xff] %vm1151, %v1150
    %vm1153 = vcmp.ne.f32.partialorder %v416, 1.0
    %v1154 = vsel %vm1153, 1.0, 0.0
    %1156 = vrot.lane.b32.xlu0 %v1154, 33
    %v1157 = vpop.permute.xlu0 %1156
    %v1159 = vmul.f32 %v31, %v1157
    %v1160 = vsub.f32 1.0, %v1159
    %1162 = vset.pattern.permute.xlu0 1
    %1163 = vperm.xlu0 %1162, %v1160
    %v1164 = vpop.permute.xlu0 %1163
    %v1166 = vmul.f32 %v416, %v1164
    %v1167 = vpack.c.bf16 %v1166, %v1166
    %1169 = vset.pattern.permute.xlu0 1
    %1170 = vperm.xlu0 %1169, %v1159
    %v1171 = vpop.permute.xlu0 %1170
    %v1173 = vmul.f32 %v1171, %v70
    %1175 = vrot.lane.b32.xlu0 %v1167, 32
    %v1176 = vpop.permute.xlu0 %1175
    %v1178 = vsel %vm78, %v1176, 0
    %1180 = vmatprep.subr.bf16.mxu0 0
    %1181 = vmatpush1.bf16.msra.mxu0 %v990
    %1182 = vmatprep.subr.bf16.mxu0 0
    %1183 = vmatpush1.bf16.msra.mxu0 0
    %1184 = vmatprep.subr.bf16.mxu0 0
    %1185 = vmatpush1.bf16.msra.mxu0 0
    %1186 = vmatprep.subr.bf16.mxu0 0
    %1187 = vmatpush1.bf16.msra.mxu0 0
    %1188 = vmatprep.subr.bf16.mxu0 0
    %1189 = vmatpush1.bf16.msra.mxu0 0
    %1190 = vmatprep.subr.bf16.mxu0 0
    %1191 = vmatpush1.bf16.msra.mxu0 0
    %1192 = vmatprep.subr.bf16.mxu0 0
    %1193 = vmatpush1.bf16.msra.mxu0 0
    %1194 = vmatprep.subr.bf16.mxu0 0
    %1195 = vmatpush1.bf16.msra.mxu0 0
    %1196 = vmatprep.subr.bf16.mxu0 0
    %1197 = vmatpush1.bf16.msra.mxu0 0
    %1198 = vmatprep.subr.bf16.mxu0 0
    %1199 = vmatpush1.bf16.msra.mxu0 0
    %1200 = vmatprep.subr.bf16.mxu0 0
    %1201 = vmatpush1.bf16.msra.mxu0 0
    %1202 = vmatprep.subr.bf16.mxu0 0
    %1203 = vmatpush1.bf16.msra.mxu0 0
    %1204 = vmatprep.subr.bf16.mxu0 0
    %1205 = vmatpush1.bf16.msra.mxu0 0
    %1206 = vmatprep.subr.bf16.mxu0 0
    %1207 = vmatpush1.bf16.msra.mxu0 0
    %1208 = vmatprep.subr.bf16.mxu0 0
    %1209 = vmatpush1.bf16.msra.mxu0 0
    %1210 = vmatprep.subr.bf16.mxu0 0
    %1211 = vmatpush1.bf16.msra.mxu0 0
    %1212 = vmatprep.mubr.bf16.mxu0 0
    %1213 = vmatmul.mubr.bf16.gmra.mrb[0].mxu0 %v1178
    %v1214 = vpop.f32.mrb[0].mxu0
    %v1215 = vadd.f32 %v1173, %v1214
    %v1216 = vpop.f32.mrb[0].mxu0
    %v1217 = vpop.f32.mrb[0].mxu0
    %v1218 = vpop.f32.mrb[0].mxu0
    %1219 = vdwg.mxu0
    %v1220 = vadd.f32 %v1215, %v66
    %v1221 = vadd.f32 %v1220, %v1116
    %v1222 = vxor.u32 %v1221, 2147483648
    %v1223 = vmul.f32 %v1222, 1.442695
    %v1224 = vpow.pop %v1223
    %v1225 = vadd.f32 %v1224, 1.0
    %v1226 = vrcp.pop %v1225
    %v1227 = vmul.f32 1.0, %v1226
    %1228 = vrot.lane.b32.xlu0 %v1116, 64
    %v1229 = vpop.permute.xlu0 %1228
    %v1231 = vmul.f32 %v1227, %v1229
    %1233 = vrot.lane.b32.xlu0 %v1231, 64
    %v1234 = vpop.permute.xlu0 %1233
    %v1236 = vadd.f32 %v1220, %v1234
    %v1237 = vtanh.pop %v1236
    %v1238 = vsub.f32 1.0, %v1227
    %1240 = vrot.lane.b32.xlu0 %v1237, 96
    %v1241 = vpop.permute.xlu0 %1240
    %v1243 = vmul.f32 %v1238, %v1241
    %v1244 = vmul.f32 %v1227, %v1061
    %v1245 = vadd.f32 %v1243, %v1244
    %v1246 = vpack.c.bf16 %v1245, %v1245
    %1248 = vrot.lane.b32.xlu0 %v1246, 96
    %v1249 = vpop.permute.xlu0 %1248
    %v1251 = vsel %vm135, %v1249, 0
    %1253 = vmatprep.subr.bf16.mxu0 0
    %1254 = vmatpush1.bf16.msra.mxu0 %v1074
    %1255 = vmatprep.subr.bf16.mxu0 0
    %1256 = vmatpush1.bf16.msra.mxu0 %v1075
    %1257 = vmatprep.subr.bf16.mxu0 0
    %1258 = vmatpush1.bf16.msra.mxu0 0
    %1259 = vmatprep.subr.bf16.mxu0 0
    %1260 = vmatpush1.bf16.msra.mxu0 0
    %1261 = vmatprep.subr.bf16.mxu0 0
    %1262 = vmatpush1.bf16.msra.mxu0 0
    %1263 = vmatprep.subr.bf16.mxu0 0
    %1264 = vmatpush1.bf16.msra.mxu0 0
    %1265 = vmatprep.subr.bf16.mxu0 0
    %1266 = vmatpush1.bf16.msra.mxu0 0
    %1267 = vmatprep.subr.bf16.mxu0 0
    %1268 = vmatpush1.bf16.msra.mxu0 0
    %1269 = vmatprep.subr.bf16.mxu0 0
    %1270 = vmatpush1.bf16.msra.mxu0 0
    %1271 = vmatprep.subr.bf16.mxu0 0
    %1272 = vmatpush1.bf16.msra.mxu0 0
    %1273 = vmatprep.subr.bf16.mxu0 0
    %1274 = vmatpush1.bf16.msra.mxu0 0
    %1275 = vmatprep.subr.bf16.mxu0 0
    %1276 = vmatpush1.bf16.msra.mxu0 0
    %1277 = vmatprep.subr.bf16.mxu0 0
    %1278 = vmatpush1.bf16.msra.mxu0 0
    %1279 = vmatprep.subr.bf16.mxu0 0
    %1280 = vmatpush1.bf16.msra.mxu0 0
    %1281 = vmatprep.subr.bf16.mxu0 0
    %1282 = vmatpush1.bf16.msra.mxu0 0
    %1283 = vmatprep.subr.bf16.mxu0 0
    %1284 = vmatpush1.bf16.msra.mxu0 0
    %1285 = vmatprep.mubr.bf16.mxu0 0
    %1286 = vmatmul.mubr.bf16.gmra.mrb[0].mxu0 %v1251
    %v1287 = vpop.f32.mrb[0].mxu0
    %v1288 = vadd.f32 %v62, %v1287
    %v1289 = vpop.f32.mrb[0].mxu0
    %v1290 = vpop.f32.mrb[0].mxu0
    %v1291 = vpop.f32.mrb[0].mxu0
    %1292 = vdwg.mxu0
    %1294 = vrot.lane.b32.xlu0 %v1288, 32
    %v1295 = vpop.permute.xlu0 %1294
    %v1297 = vsub.f32 %v30, %v1295
    %v1298 = vmul.f32 %v1297, %v1297
    %v1299 = vsel %vm78, %v1298, 0.0
    %1300 = vadd.xlane.f32.xlu0 %v1299
    %v1301 = vpop.xlane.xlu0 %1300
    %v1302 = vmul.f32 %v1301, 0.0625
    %v1303 = vmul.f32 %v1166, %v1135
    %v1304 = vadd.f32 %v1131, %v1303
    %v1305 = vadd.f32 %v1302, 0.02
    %v1306 = vmul.f32 %v1305, %v1303
    %v1307 = vadd.f32 %v1134, %v1306
    %v1308 = vmul.f32 %v1303, 2.0
    %v1309 = vadd.f32 %v1131, %v1308
    %v1310 = vsub.f32 1.0, %v1166
    %v1311 = vmul.f32 %v1135, %v1310
    %1313 = vrot.lane.b32.xlu0 %v1166, 32
    %v1314 = vpop.permute.xlu0 %1313
    %1316 = vrot.lane.b32.xlu0 %v1159, 15
    %v1317 = vpop.permute.xlu0 %1316
    %1319 = vrot.lane.b32.xlu0 %v1288, 49
    %v1320 = vpop.permute.xlu0 %1319
    %v1322 = vsel %vm78, %v1314, %v1317
    %v1323 = vsel %vm1147, %v1322, %v1320
    %v1324 = vsel %vm1149, %v1323, 0.0
    %1326 = vrot.lane.b32.xlu0 %v1324, 64
    %v1327 = vpop.permute.xlu0 %1326
    %vm1329 = vcmask 1048064
    %1330 = vst.msk [vmem:[%s4] sm:$0xff] %vm1329, %v1327
    %vm1331 = vcmp.ne.f32.partialorder %v551, 1.0
    %v1332 = vsel %vm1331, 1.0, 0.0
    %1334 = vrot.lane.b32.xlu0 %v1332, 34
    %v1335 = vpop.permute.xlu0 %1334
    %v1337 = vmul.f32 %v31, %v1335
    %v1338 = vsub.f32 1.0, %v1337
    %1340 = vset.pattern.permute.xlu0 2
    %1341 = vperm.xlu0 %1340, %v1338
    %v1342 = vpop.permute.xlu0 %1341
    %v1344 = vmul.f32 %v551, %v1342
    %v1345 = vpack.c.bf16 %v1344, %v1344
    %1347 = vset.pattern.permute.xlu0 2
    %1348 = vperm.xlu0 %1347, %v1337
    %v1349 = vpop.permute.xlu0 %1348
    %v1351 = vmul.f32 %v1349, %v70
    %1353 = vrot.lane.b32.xlu0 %v1345, 32
    %v1354 = vpop.permute.xlu0 %1353
    %v1356 = vsel %vm78, %v1354, 0
    %1358 = vmatprep.subr.bf16.mxu0 0
    %1359 = vmatpush1.bf16.msra.mxu0 %v990
    %1360 = vmatprep.subr.bf16.mxu0 0
    %1361 = vmatpush1.bf16.msra.mxu0 0
    %1362 = vmatprep.subr.bf16.mxu0 0
    %1363 = vmatpush1.bf16.msra.mxu0 0
    %1364 = vmatprep.subr.bf16.mxu0 0
    %1365 = vmatpush1.bf16.msra.mxu0 0
    %1366 = vmatprep.subr.bf16.mxu0 0
    %1367 = vmatpush1.bf16.msra.mxu0 0
    %1368 = vmatprep.subr.bf16.mxu0 0
    %1369 = vmatpush1.bf16.msra.mxu0 0
    %1370 = vmatprep.subr.bf16.mxu0 0
    %1371 = vmatpush1.bf16.msra.mxu0 0
    %1372 = vmatprep.subr.bf16.mxu0 0
    %1373 = vmatpush1.bf16.msra.mxu0 0
    %1374 = vmatprep.subr.bf16.mxu0 0
    %1375 = vmatpush1.bf16.msra.mxu0 0
    %1376 = vmatprep.subr.bf16.mxu0 0
    %1377 = vmatpush1.bf16.msra.mxu0 0
    %1378 = vmatprep.subr.bf16.mxu0 0
    %1379 = vmatpush1.bf16.msra.mxu0 0
    %1380 = vmatprep.subr.bf16.mxu0 0
    %1381 = vmatpush1.bf16.msra.mxu0 0
    %1382 = vmatprep.subr.bf16.mxu0 0
    %1383 = vmatpush1.bf16.msra.mxu0 0
    %1384 = vmatprep.subr.bf16.mxu0 0
    %1385 = vmatpush1.bf16.msra.mxu0 0
    %1386 = vmatprep.subr.bf16.mxu0 0
    %1387 = vmatpush1.bf16.msra.mxu0 0
    %1388 = vmatprep.subr.bf16.mxu0 0
    %1389 = vmatpush1.bf16.msra.mxu0 0
    %1390 = vmatprep.mubr.bf16.mxu0 0
    %1391 = vmatmul.mubr.bf16.gmra.mrb[0].mxu0 %v1356
    %v1392 = vpop.f32.mrb[0].mxu0
    %v1393 = vadd.f32 %v1351, %v1392
    %v1394 = vpop.f32.mrb[0].mxu0
    %v1395 = vpop.f32.mrb[0].mxu0
    %v1396 = vpop.f32.mrb[0].mxu0
    %1397 = vdwg.mxu0
    %v1398 = vadd.f32 %v1393, %v66
    %v1399 = vadd.f32 %v1398, %v1288
    %v1400 = vxor.u32 %v1399, 2147483648
    %v1401 = vmul.f32 %v1400, 1.442695
    %v1402 = vpow.pop %v1401
    %v1403 = vadd.f32 %v1402, 1.0
    %v1404 = vrcp.pop %v1403
    %v1405 = vmul.f32 1.0, %v1404
    %1406 = vrot.lane.b32.xlu0 %v1288, 64
    %v1407 = vpop.permute.xlu0 %1406
    %v1409 = vmul.f32 %v1405, %v1407
    %1411 = vrot.lane.b32.xlu0 %v1409, 64
    %v1412 = vpop.permute.xlu0 %1411
    %v1414 = vadd.f32 %v1398, %v1412
    %v1415 = vtanh.pop %v1414
    %v1416 = vsub.f32 1.0, %v1405
    %1418 = vrot.lane.b32.xlu0 %v1415, 96
    %v1419 = vpop.permute.xlu0 %1418
    %v1421 = vmul.f32 %v1416, %v1419
    %v1422 = vmul.f32 %v1405, %v1245
    %v1423 = vadd.f32 %v1421, %v1422
    %v1424 = vpack.c.bf16 %v1423, %v1423
    %1426 = vrot.lane.b32.xlu0 %v1424, 96
    %v1427 = vpop.permute.xlu0 %1426
    %v1429 = vsel %vm135, %v1427, 0
    %1431 = vmatprep.subr.bf16.mxu0 0
    %1432 = vmatpush1.bf16.msra.mxu0 %v1074
    %1433 = vmatprep.subr.bf16.mxu0 0
    %1434 = vmatpush1.bf16.msra.mxu0 %v1075
    %1435 = vmatprep.subr.bf16.mxu0 0
    %1436 = vmatpush1.bf16.msra.mxu0 0
    %1437 = vmatprep.subr.bf16.mxu0 0
    %1438 = vmatpush1.bf16.msra.mxu0 0
    %1439 = vmatprep.subr.bf16.mxu0 0
    %1440 = vmatpush1.bf16.msra.mxu0 0
    %1441 = vmatprep.subr.bf16.mxu0 0
    %1442 = vmatpush1.bf16.msra.mxu0 0
    %1443 = vmatprep.subr.bf16.mxu0 0
    %1444 = vmatpush1.bf16.msra.mxu0 0
    %1445 = vmatprep.subr.bf16.mxu0 0
    %1446 = vmatpush1.bf16.msra.mxu0 0
    %1447 = vmatprep.subr.bf16.mxu0 0
    %1448 = vmatpush1.bf16.msra.mxu0 0
    %1449 = vmatprep.subr.bf16.mxu0 0
    %1450 = vmatpush1.bf16.msra.mxu0 0
    %1451 = vmatprep.subr.bf16.mxu0 0
    %1452 = vmatpush1.bf16.msra.mxu0 0
    %1453 = vmatprep.subr.bf16.mxu0 0
    %1454 = vmatpush1.bf16.msra.mxu0 0
    %1455 = vmatprep.subr.bf16.mxu0 0
    %1456 = vmatpush1.bf16.msra.mxu0 0
    %1457 = vmatprep.subr.bf16.mxu0 0
    %1458 = vmatpush1.bf16.msra.mxu0 0
    %1459 = vmatprep.subr.bf16.mxu0 0
    %1460 = vmatpush1.bf16.msra.mxu0 0
    %1461 = vmatprep.subr.bf16.mxu0 0
    %1462 = vmatpush1.bf16.msra.mxu0 0
    %1463 = vmatprep.mubr.bf16.mxu0 0
    %1464 = vmatmul.mubr.bf16.gmra.mrb[0].mxu0 %v1429
    %v1465 = vpop.f32.mrb[0].mxu0
    %v1466 = vadd.f32 %v62, %v1465
    %v1467 = vpop.f32.mrb[0].mxu0
    %v1468 = vpop.f32.mrb[0].mxu0
    %v1469 = vpop.f32.mrb[0].mxu0
    %1470 = vdwg.mxu0
    %1472 = vrot.lane.b32.xlu0 %v1466, 32
    %v1473 = vpop.permute.xlu0 %1472
    %v1475 = vsub.f32 %v30, %v1473
    %v1476 = vmul.f32 %v1475, %v1475
    %v1477 = vsel %vm78, %v1476, 0.0
    %1478 = vadd.xlane.f32.xlu0 %v1477
    %v1479 = vpop.xlane.xlu0 %1478
    %v1480 = vmul.f32 %v1479, 0.0625
    %v1481 = vmul.f32 %v1344, %v1311
    %v1482 = vadd.f32 %v1304, %v1481
    %v1483 = vadd.f32 %v1480, 0.03
    %v1484 = vmul.f32 %v1483, %v1481
    %v1485 = vadd.f32 %v1307, %v1484
    %v1486 = vmul.f32 %v1481, 3.0
    %v1487 = vadd.f32 %v1309, %v1486
    %v1488 = vsub.f32 1.0, %v1344
    %v1489 = vmul.f32 %v1311, %v1488
    %1491 = vrot.lane.b32.xlu0 %v1344, 32
    %v1492 = vpop.permute.xlu0 %1491
    %1494 = vrot.lane.b32.xlu0 %v1337, 14
    %v1495 = vpop.permute.xlu0 %1494
    %1497 = vrot.lane.b32.xlu0 %v1466, 49
    %v1498 = vpop.permute.xlu0 %1497
    %v1500 = vsel %vm78, %v1492, %v1495
    %v1501 = vsel %vm1147, %v1500, %v1498
    %v1502 = vsel %vm1149, %v1501, 0.0
    %1503 = vst.msk [vmem:[%s4 + $0x8] sm:$0xff] %vm1151, %v1502
    %vm1504 = vcmp.ne.f32.partialorder %v686, 1.0
    %v1505 = vsel %vm1504, 1.0, 0.0
    %1507 = vrot.lane.b32.xlu0 %v1505, 35
    %v1508 = vpop.permute.xlu0 %1507
    %v1510 = vmul.f32 %v31, %v1508
    %v1511 = vsub.f32 1.0, %v1510
    %1513 = vset.pattern.permute.xlu0 3
    %1514 = vperm.xlu0 %1513, %v1511
    %v1515 = vpop.permute.xlu0 %1514
    %v1517 = vmul.f32 %v686, %v1515
    %v1518 = vpack.c.bf16 %v1517, %v1517
    %1520 = vset.pattern.permute.xlu0 3
    %1521 = vperm.xlu0 %1520, %v1510
    %v1522 = vpop.permute.xlu0 %1521
    %v1524 = vmul.f32 %v1522, %v70
    %1526 = vrot.lane.b32.xlu0 %v1518, 32
    %v1527 = vpop.permute.xlu0 %1526
    %v1529 = vsel %vm78, %v1527, 0
    %1531 = vmatprep.subr.bf16.mxu0 0
    %1532 = vmatpush1.bf16.msra.mxu0 %v990
    %1533 = vmatprep.subr.bf16.mxu0 0
    %1534 = vmatpush1.bf16.msra.mxu0 0
    %1535 = vmatprep.subr.bf16.mxu0 0
    %1536 = vmatpush1.bf16.msra.mxu0 0
    %1537 = vmatprep.subr.bf16.mxu0 0
    %1538 = vmatpush1.bf16.msra.mxu0 0
    %1539 = vmatprep.subr.bf16.mxu0 0
    %1540 = vmatpush1.bf16.msra.mxu0 0
    %1541 = vmatprep.subr.bf16.mxu0 0
    %1542 = vmatpush1.bf16.msra.mxu0 0
    %1543 = vmatprep.subr.bf16.mxu0 0
    %1544 = vmatpush1.bf16.msra.mxu0 0
    %1545 = vmatprep.subr.bf16.mxu0 0
    %1546 = vmatpush1.bf16.msra.mxu0 0
    %1547 = vmatprep.subr.bf16.mxu0 0
    %1548 = vmatpush1.bf16.msra.mxu0 0
    %1549 = vmatprep.subr.bf16.mxu0 0
    %1550 = vmatpush1.bf16.msra.mxu0 0
    %1551 = vmatprep.subr.bf16.mxu0 0
    %1552 = vmatpush1.bf16.msra.mxu0 0
    %1553 = vmatprep.subr.bf16.mxu0 0
    %1554 = vmatpush1.bf16.msra.mxu0 0
    %1555 = vmatprep.subr.bf16.mxu0 0
    %1556 = vmatpush1.bf16.msra.mxu0 0
    %1557 = vmatprep.subr.bf16.mxu0 0
    %1558 = vmatpush1.bf16.msra.mxu0 0
    %1559 = vmatprep.subr.bf16.mxu0 0
    %1560 = vmatpush1.bf16.msra.mxu0 0
    %1561 = vmatprep.subr.bf16.mxu0 0
    %1562 = vmatpush1.bf16.msra.mxu0 0
    %1563 = vmatprep.mubr.bf16.mxu0 0
    %1564 = vmatmul.mubr.bf16.gmra.mrb[0].mxu0 %v1529
    %v1565 = vpop.f32.mrb[0].mxu0
    %v1566 = vadd.f32 %v1524, %v1565
    %v1567 = vpop.f32.mrb[0].mxu0
    %v1568 = vpop.f32.mrb[0].mxu0
    %v1569 = vpop.f32.mrb[0].mxu0
    %1570 = vdwg.mxu0
    %v1571 = vadd.f32 %v1566, %v66
    %v1572 = vadd.f32 %v1571, %v1466
    %v1573 = vxor.u32 %v1572, 2147483648
    %v1574 = vmul.f32 %v1573, 1.442695
    %v1575 = vpow.pop %v1574
    %v1576 = vadd.f32 %v1575, 1.0
    %v1577 = vrcp.pop %v1576
    %v1578 = vmul.f32 1.0, %v1577
    %1579 = vrot.lane.b32.xlu0 %v1466, 64
    %v1580 = vpop.permute.xlu0 %1579
    %v1582 = vmul.f32 %v1578, %v1580
    %1584 = vrot.lane.b32.xlu0 %v1582, 64
    %v1585 = vpop.permute.xlu0 %1584
    %v1587 = vadd.f32 %v1571, %v1585
    %v1588 = vtanh.pop %v1587
    %v1589 = vsub.f32 1.0, %v1578
    %1591 = vrot.lane.b32.xlu0 %v1588, 96
    %v1592 = vpop.permute.xlu0 %1591
    %v1594 = vmul.f32 %v1589, %v1592
    %v1595 = vmul.f32 %v1578, %v1423
    %v1596 = vadd.f32 %v1594, %v1595
    %v1597 = vpack.c.bf16 %v1596, %v1596
    %1599 = vrot.lane.b32.xlu0 %v1597, 96
    %v1600 = vpop.permute.xlu0 %1599
    %v1602 = vsel %vm135, %v1600, 0
    %1604 = vmatprep.subr.bf16.mxu0 0
    %1605 = vmatpush1.bf16.msra.mxu0 %v1074
    %1606 = vmatprep.subr.bf16.mxu0 0
    %1607 = vmatpush1.bf16.msra.mxu0 %v1075
    %1608 = vmatprep.subr.bf16.mxu0 0
    %1609 = vmatpush1.bf16.msra.mxu0 0
    %1610 = vmatprep.subr.bf16.mxu0 0
    %1611 = vmatpush1.bf16.msra.mxu0 0
    %1612 = vmatprep.subr.bf16.mxu0 0
    %1613 = vmatpush1.bf16.msra.mxu0 0
    %1614 = vmatprep.subr.bf16.mxu0 0
    %1615 = vmatpush1.bf16.msra.mxu0 0
    %1616 = vmatprep.subr.bf16.mxu0 0
    %1617 = vmatpush1.bf16.msra.mxu0 0
    %1618 = vmatprep.subr.bf16.mxu0 0
    %1619 = vmatpush1.bf16.msra.mxu0 0
    %1620 = vmatprep.subr.bf16.mxu0 0
    %1621 = vmatpush1.bf16.msra.mxu0 0
    %1622 = vmatprep.subr.bf16.mxu0 0
    %1623 = vmatpush1.bf16.msra.mxu0 0
    %1624 = vmatprep.subr.bf16.mxu0 0
    %1625 = vmatpush1.bf16.msra.mxu0 0
    %1626 = vmatprep.subr.bf16.mxu0 0
    %1627 = vmatpush1.bf16.msra.mxu0 0
    %1628 = vmatprep.subr.bf16.mxu0 0
    %1629 = vmatpush1.bf16.msra.mxu0 0
    %1630 = vmatprep.subr.bf16.mxu0 0
    %1631 = vmatpush1.bf16.msra.mxu0 0
    %1632 = vmatprep.subr.bf16.mxu0 0
    %1633 = vmatpush1.bf16.msra.mxu0 0
    %1634 = vmatprep.subr.bf16.mxu0 0
    %1635 = vmatpush1.bf16.msra.mxu0 0
    %1636 = vmatprep.mubr.bf16.mxu0 0
    %1637 = vmatmul.mubr.bf16.gmra.mrb[0].mxu0 %v1602
    %v1638 = vpop.f32.mrb[0].mxu0
    %v1639 = vadd.f32 %v62, %v1638
    %v1640 = vpop.f32.mrb[0].mxu0
    %v1641 = vpop.f32.mrb[0].mxu0
    %v1642 = vpop.f32.mrb[0].mxu0
    %1643 = vdwg.mxu0
    %1645 = vrot.lane.b32.xlu0 %v1639, 32
    %v1646 = vpop.permute.xlu0 %1645
    %v1648 = vsub.f32 %v30, %v1646
    %v1649 = vmul.f32 %v1648, %v1648
    %v1650 = vsel %vm78, %v1649, 0.0
    %1651 = vadd.xlane.f32.xlu0 %v1650
    %v1652 = vpop.xlane.xlu0 %1651
    %v1653 = vmul.f32 %v1652, 0.0625
    %v1654 = vmul.f32 %v1517, %v1489
    %v1655 = vadd.f32 %v1482, %v1654
    %v1656 = vadd.f32 %v1653, 0.04
    %v1657 = vmul.f32 %v1656, %v1654
    %v1658 = vadd.f32 %v1485, %v1657
    %v1659 = vmul.f32 %v1654, 4.0
    %v1660 = vadd.f32 %v1487, %v1659
    %v1661 = vsub.f32 1.0, %v1517
    %v1662 = vmul.f32 %v1489, %v1661
    %1664 = vrot.lane.b32.xlu0 %v1517, 32
    %v1665 = vpop.permute.xlu0 %1664
    %1667 = vrot.lane.b32.xlu0 %v1510, 13
    %v1668 = vpop.permute.xlu0 %1667
    %1670 = vrot.lane.b32.xlu0 %v1639, 49
    %v1671 = vpop.permute.xlu0 %1670
    %v1673 = vsel %vm78, %v1665, %v1668
    %v1674 = vsel %vm1147, %v1673, %v1671
    %v1675 = vsel %vm1149, %v1674, 0.0
    %1677 = vrot.lane.b32.xlu0 %v1675, 64
    %v1678 = vpop.permute.xlu0 %1677
    %1680 = vst.msk [vmem:[%s4 + $0x8] sm:$0xff] %vm1329, %v1678
    %vm1681 = vcmp.ne.f32.partialorder %v821, 1.0
    %v1682 = vsel %vm1681, 1.0, 0.0
    %1684 = vrot.lane.b32.xlu0 %v1682, 36
    %v1685 = vpop.permute.xlu0 %1684
    %v1687 = vmul.f32 %v31, %v1685
    %v1688 = vsub.f32 1.0, %v1687
    %1690 = vset.pattern.permute.xlu0 4
    %1691 = vperm.xlu0 %1690, %v1688
    %v1692 = vpop.permute.xlu0 %1691
    %v1694 = vmul.f32 %v821, %v1692
    %v1695 = vpack.c.bf16 %v1694, %v1694
    %1697 = vset.pattern.permute.xlu0 4
    %1698 = vperm.xlu0 %1697, %v1687
    %v1699 = vpop.permute.xlu0 %1698
    %v1701 = vmul.f32 %v1699, %v70
    %1703 = vrot.lane.b32.xlu0 %v1695, 32
    %v1704 = vpop.permute.xlu0 %1703
    %v1706 = vsel %vm78, %v1704, 0
    %1708 = vmatprep.subr.bf16.mxu0 0
    %1709 = vmatpush1.bf16.msra.mxu0 %v990
    %1710 = vmatprep.subr.bf16.mxu0 0
    %1711 = vmatpush1.bf16.msra.mxu0 0
    %1712 = vmatprep.subr.bf16.mxu0 0
    %1713 = vmatpush1.bf16.msra.mxu0 0
    %1714 = vmatprep.subr.bf16.mxu0 0
    %1715 = vmatpush1.bf16.msra.mxu0 0
    %1716 = vmatprep.subr.bf16.mxu0 0
    %1717 = vmatpush1.bf16.msra.mxu0 0
    %1718 = vmatprep.subr.bf16.mxu0 0
    %1719 = vmatpush1.bf16.msra.mxu0 0
    %1720 = vmatprep.subr.bf16.mxu0 0
    %1721 = vmatpush1.bf16.msra.mxu0 0
    %1722 = vmatprep.subr.bf16.mxu0 0
    %1723 = vmatpush1.bf16.msra.mxu0 0
    %1724 = vmatprep.subr.bf16.mxu0 0
    %1725 = vmatpush1.bf16.msra.mxu0 0
    %1726 = vmatprep.subr.bf16.mxu0 0
    %1727 = vmatpush1.bf16.msra.mxu0 0
    %1728 = vmatprep.subr.bf16.mxu0 0
    %1729 = vmatpush1.bf16.msra.mxu0 0
    %1730 = vmatprep.subr.bf16.mxu0 0
    %1731 = vmatpush1.bf16.msra.mxu0 0
    %1732 = vmatprep.subr.bf16.mxu0 0
    %1733 = vmatpush1.bf16.msra.mxu0 0
    %1734 = vmatprep.subr.bf16.mxu0 0
    %1735 = vmatpush1.bf16.msra.mxu0 0
    %1736 = vmatprep.subr.bf16.mxu0 0
    %1737 = vmatpush1.bf16.msra.mxu0 0
    %1738 = vmatprep.subr.bf16.mxu0 0
    %1739 = vmatpush1.bf16.msra.mxu0 0
    %1740 = vmatprep.mubr.bf16.mxu0 0
    %1741 = vmatmul.mubr.bf16.gmra.mrb[0].mxu0 %v1706
    %v1742 = vpop.f32.mrb[0].mxu0
    %v1743 = vadd.f32 %v1701, %v1742
    %v1744 = vpop.f32.mrb[0].mxu0
    %v1745 = vpop.f32.mrb[0].mxu0
    %v1746 = vpop.f32.mrb[0].mxu0
    %1747 = vdwg.mxu0
    %v1748 = vadd.f32 %v1743, %v66
    %v1749 = vadd.f32 %v1748, %v1639
    %v1750 = vxor.u32 %v1749, 2147483648
    %v1751 = vmul.f32 %v1750, 1.442695
    %v1752 = vpow.pop %v1751
    %v1753 = vadd.f32 %v1752, 1.0
    %v1754 = vrcp.pop %v1753
    %v1755 = vmul.f32 1.0, %v1754
    %1756 = vrot.lane.b32.xlu0 %v1639, 64
    %v1757 = vpop.permute.xlu0 %1756
    %v1759 = vmul.f32 %v1755, %v1757
    %1761 = vrot.lane.b32.xlu0 %v1759, 64
    %v1762 = vpop.permute.xlu0 %1761
    %v1764 = vadd.f32 %v1748, %v1762
    %v1765 = vtanh.pop %v1764
    %v1766 = vsub.f32 1.0, %v1755
    %1768 = vrot.lane.b32.xlu0 %v1765, 96
    %v1769 = vpop.permute.xlu0 %1768
    %v1771 = vmul.f32 %v1766, %v1769
    %v1772 = vmul.f32 %v1755, %v1596
    %v1773 = vadd.f32 %v1771, %v1772
    %v1774 = vpack.c.bf16 %v1773, %v1773
    %1776 = vrot.lane.b32.xlu0 %v1774, 96
    %v1777 = vpop.permute.xlu0 %1776
    %v1779 = vsel %vm135, %v1777, 0
    %1781 = vmatprep.subr.bf16.mxu0 0
    %1782 = vmatpush1.bf16.msra.mxu0 %v1074
    %1783 = vmatprep.subr.bf16.mxu0 0
    %1784 = vmatpush1.bf16.msra.mxu0 %v1075
    %1785 = vmatprep.subr.bf16.mxu0 0
    %1786 = vmatpush1.bf16.msra.mxu0 0
    %1787 = vmatprep.subr.bf16.mxu0 0
    %1788 = vmatpush1.bf16.msra.mxu0 0
    %1789 = vmatprep.subr.bf16.mxu0 0
    %1790 = vmatpush1.bf16.msra.mxu0 0
    %1791 = vmatprep.subr.bf16.mxu0 0
    %1792 = vmatpush1.bf16.msra.mxu0 0
    %1793 = vmatprep.subr.bf16.mxu0 0
    %1794 = vmatpush1.bf16.msra.mxu0 0
    %1795 = vmatprep.subr.bf16.mxu0 0
    %1796 = vmatpush1.bf16.msra.mxu0 0
    %1797 = vmatprep.subr.bf16.mxu0 0
    %1798 = vmatpush1.bf16.msra.mxu0 0
    %1799 = vmatprep.subr.bf16.mxu0 0
    %1800 = vmatpush1.bf16.msra.mxu0 0
    %1801 = vmatprep.subr.bf16.mxu0 0
    %1802 = vmatpush1.bf16.msra.mxu0 0
    %1803 = vmatprep.subr.bf16.mxu0 0
    %1804 = vmatpush1.bf16.msra.mxu0 0
    %1805 = vmatprep.subr.bf16.mxu0 0
    %1806 = vmatpush1.bf16.msra.mxu0 0
    %1807 = vmatprep.subr.bf16.mxu0 0
    %1808 = vmatpush1.bf16.msra.mxu0 0
    %1809 = vmatprep.subr.bf16.mxu0 0
    %1810 = vmatpush1.bf16.msra.mxu0 0
    %1811 = vmatprep.subr.bf16.mxu0 0
    %1812 = vmatpush1.bf16.msra.mxu0 0
    %1813 = vmatprep.mubr.bf16.mxu0 0
    %1814 = vmatmul.mubr.bf16.gmra.mrb[0].mxu0 %v1779
    %v1815 = vpop.f32.mrb[0].mxu0
    %v1816 = vadd.f32 %v62, %v1815
    %v1817 = vpop.f32.mrb[0].mxu0
    %v1818 = vpop.f32.mrb[0].mxu0
    %v1819 = vpop.f32.mrb[0].mxu0
    %1820 = vdwg.mxu0
    %1822 = vrot.lane.b32.xlu0 %v1816, 32
    %v1823 = vpop.permute.xlu0 %1822
    %v1825 = vsub.f32 %v30, %v1823
    %v1826 = vmul.f32 %v1825, %v1825
    %v1827 = vsel %vm78, %v1826, 0.0
    %1828 = vadd.xlane.f32.xlu0 %v1827
    %v1829 = vpop.xlane.xlu0 %1828
    %v1830 = vmul.f32 %v1829, 0.0625
    %v1831 = vmul.f32 %v1694, %v1662
    %v1832 = vadd.f32 %v1655, %v1831
    %v1833 = vadd.f32 %v1830, 0.05
    %v1834 = vmul.f32 %v1833, %v1831
    %v1835 = vadd.f32 %v1658, %v1834
    %v1836 = vmul.f32 %v1831, 5.0
    %v1837 = vadd.f32 %v1660, %v1836
    %v1838 = vsub.f32 1.0, %v1694
    %v1839 = vmul.f32 %v1662, %v1838
    %1841 = vrot.lane.b32.xlu0 %v1694, 32
    %v1842 = vpop.permute.xlu0 %1841
    %1844 = vrot.lane.b32.xlu0 %v1687, 12
    %v1845 = vpop.permute.xlu0 %1844
    %1847 = vrot.lane.b32.xlu0 %v1816, 49
    %v1848 = vpop.permute.xlu0 %1847
    %v1850 = vsel %vm78, %v1842, %v1845
    %v1851 = vsel %vm1147, %v1850, %v1848
    %v1852 = vsel %vm1149, %v1851, 0.0
    %1853 = vst.msk [vmem:[%s4 + $0x10] sm:$0xff] %vm1151, %v1852
    %vm1854 = vcmp.ne.f32.partialorder %v956, 1.0
    %v1855 = vsel %vm1854, 1.0, 0.0
    %1857 = vrot.lane.b32.xlu0 %v1855, 37
    %v1858 = vpop.permute.xlu0 %1857
    %v1860 = vmul.f32 %v31, %v1858
    %v1861 = vsub.f32 1.0, %v1860
    %1863 = vset.pattern.permute.xlu0 5
    %1864 = vperm.xlu0 %1863, %v1861
    %v1865 = vpop.permute.xlu0 %1864
    %v1867 = vmul.f32 %v956, %v1865
    %v1868 = vpack.c.bf16 %v1867, %v1867
    %1870 = vset.pattern.permute.xlu0 5
    %1871 = vperm.xlu0 %1870, %v1860
    %v1872 = vpop.permute.xlu0 %1871
    %v1874 = vmul.f32 %v1872, %v70
    %1876 = vrot.lane.b32.xlu0 %v1868, 32
    %v1877 = vpop.permute.xlu0 %1876
    %v1879 = vsel %vm78, %v1877, 0
    %1881 = vmatprep.subr.bf16.mxu0 0
    %1882 = vmatpush1.bf16.msra.mxu0 %v990
    %1883 = vmatprep.subr.bf16.mxu0 0
    %1884 = vmatpush1.bf16.msra.mxu0 0
    %1885 = vmatprep.subr.bf16.mxu0 0
    %1886 = vmatpush1.bf16.msra.mxu0 0
    %1887 = vmatprep.subr.bf16.mxu0 0
    %1888 = vmatpush1.bf16.msra.mxu0 0
    %1889 = vmatprep.subr.bf16.mxu0 0
    %1890 = vmatpush1.bf16.msra.mxu0 0
    %1891 = vmatprep.subr.bf16.mxu0 0
    %1892 = vmatpush1.bf16.msra.mxu0 0
    %1893 = vmatprep.subr.bf16.mxu0 0
    %1894 = vmatpush1.bf16.msra.mxu0 0
    %1895 = vmatprep.subr.bf16.mxu0 0
    %1896 = vmatpush1.bf16.msra.mxu0 0
    %1897 = vmatprep.subr.bf16.mxu0 0
    %1898 = vmatpush1.bf16.msra.mxu0 0
    %1899 = vmatprep.subr.bf16.mxu0 0
    %1900 = vmatpush1.bf16.msra.mxu0 0
    %1901 = vmatprep.subr.bf16.mxu0 0
    %1902 = vmatpush1.bf16.msra.mxu0 0
    %1903 = vmatprep.subr.bf16.mxu0 0
    %1904 = vmatpush1.bf16.msra.mxu0 0
    %1905 = vmatprep.subr.bf16.mxu0 0
    %1906 = vmatpush1.bf16.msra.mxu0 0
    %1907 = vmatprep.subr.bf16.mxu0 0
    %1908 = vmatpush1.bf16.msra.mxu0 0
    %1909 = vmatprep.subr.bf16.mxu0 0
    %1910 = vmatpush1.bf16.msra.mxu0 0
    %1911 = vmatprep.subr.bf16.mxu0 0
    %1912 = vmatpush1.bf16.msra.mxu0 0
    %1913 = vmatprep.mubr.bf16.mxu0 0
    %1914 = vmatmul.mubr.bf16.gmra.mrb[0].mxu0 %v1879
    %v1915 = vpop.f32.mrb[0].mxu0
    %v1916 = vadd.f32 %v1874, %v1915
    %v1917 = vpop.f32.mrb[0].mxu0
    %v1918 = vpop.f32.mrb[0].mxu0
    %v1919 = vpop.f32.mrb[0].mxu0
    %1920 = vdwg.mxu0
    %v1921 = vadd.f32 %v1916, %v66
    %v1922 = vadd.f32 %v1921, %v1816
    %v1923 = vxor.u32 %v1922, 2147483648
    %v1924 = vmul.f32 %v1923, 1.442695
    %v1925 = vpow.pop %v1924
    %v1926 = vadd.f32 %v1925, 1.0
    %v1927 = vrcp.pop %v1926
    %v1928 = vmul.f32 1.0, %v1927
    %1929 = vrot.lane.b32.xlu0 %v1816, 64
    %v1930 = vpop.permute.xlu0 %1929
    %v1932 = vmul.f32 %v1928, %v1930
    %1934 = vrot.lane.b32.xlu0 %v1932, 64
    %v1935 = vpop.permute.xlu0 %1934
    %v1937 = vadd.f32 %v1921, %v1935
    %v1938 = vtanh.pop %v1937
    %v1939 = vsub.f32 1.0, %v1928
    %1941 = vrot.lane.b32.xlu0 %v1938, 96
    %v1942 = vpop.permute.xlu0 %1941
    %v1944 = vmul.f32 %v1939, %v1942
    %v1945 = vmul.f32 %v1928, %v1773
    %v1946 = vadd.f32 %v1944, %v1945
    %v1947 = vpack.c.bf16 %v1946, %v1946
    %1949 = vrot.lane.b32.xlu0 %v1947, 96
    %v1950 = vpop.permute.xlu0 %1949
    %v1952 = vsel %vm135, %v1950, 0
    %1954 = vmatprep.subr.bf16.mxu0 0
    %1955 = vmatpush1.bf16.msra.mxu0 %v1074
    %1956 = vmatprep.subr.bf16.mxu0 0
    %1957 = vmatpush1.bf16.msra.mxu0 %v1075
    %1958 = vmatprep.subr.bf16.mxu0 0
    %1959 = vmatpush1.bf16.msra.mxu0 0
    %1960 = vmatprep.subr.bf16.mxu0 0
    %1961 = vmatpush1.bf16.msra.mxu0 0
    %1962 = vmatprep.subr.bf16.mxu0 0
    %1963 = vmatpush1.bf16.msra.mxu0 0
    %1964 = vmatprep.subr.bf16.mxu0 0
    %1965 = vmatpush1.bf16.msra.mxu0 0
    %1966 = vmatprep.subr.bf16.mxu0 0
    %1967 = vmatpush1.bf16.msra.mxu0 0
    %1968 = vmatprep.subr.bf16.mxu0 0
    %1969 = vmatpush1.bf16.msra.mxu0 0
    %1970 = vmatprep.subr.bf16.mxu0 0
    %1971 = vmatpush1.bf16.msra.mxu0 0
    %1972 = vmatprep.subr.bf16.mxu0 0
    %1973 = vmatpush1.bf16.msra.mxu0 0
    %1974 = vmatprep.subr.bf16.mxu0 0
    %1975 = vmatpush1.bf16.msra.mxu0 0
    %1976 = vmatprep.subr.bf16.mxu0 0
    %1977 = vmatpush1.bf16.msra.mxu0 0
    %1978 = vmatprep.subr.bf16.mxu0 0
    %1979 = vmatpush1.bf16.msra.mxu0 0
    %1980 = vmatprep.subr.bf16.mxu0 0
    %1981 = vmatpush1.bf16.msra.mxu0 0
    %1982 = vmatprep.subr.bf16.mxu0 0
    %1983 = vmatpush1.bf16.msra.mxu0 0
    %1984 = vmatprep.subr.bf16.mxu0 0
    %1985 = vmatpush1.bf16.msra.mxu0 0
    %1986 = vmatprep.mubr.bf16.mxu0 0
    %1987 = vmatmul.mubr.bf16.gmra.mrb[0].mxu0 %v1952
    %v1988 = vpop.f32.mrb[0].mxu0
    %v1989 = vadd.f32 %v62, %v1988
    %v1990 = vpop.f32.mrb[0].mxu0
    %v1991 = vpop.f32.mrb[0].mxu0
    %v1992 = vpop.f32.mrb[0].mxu0
    %1993 = vdwg.mxu0
    %1995 = vrot.lane.b32.xlu0 %v1989, 32
    %v1996 = vpop.permute.xlu0 %1995
    %v1998 = vsub.f32 %v30, %v1996
    %v1999 = vmul.f32 %v1998, %v1998
    %v2000 = vsel %vm78, %v1999, 0.0
    %2001 = vadd.xlane.f32.xlu0 %v2000
    %v2002 = vpop.xlane.xlu0 %2001
    %v2003 = vmul.f32 %v2002, 0.0625
    %v2004 = vmul.f32 %v1867, %v1839
    %v2005 = vadd.f32 %v1832, %v2004
    %v2006 = vadd.f32 %v2003, 0.06
    %v2007 = vmul.f32 %v2006, %v2004
    %v2008 = vadd.f32 %v1835, %v2007
    %v2009 = vmul.f32 %v2004, 6.0
    %v2010 = vadd.f32 %v1837, %v2009
    %v2011 = vsub.f32 1.0, %v1867
    %v2012 = vmul.f32 %v1839, %v2011
    %2014 = vrot.lane.b32.xlu0 %v1867, 32
    %v2015 = vpop.permute.xlu0 %2014
    %2017 = vrot.lane.b32.xlu0 %v1860, 11
    %v2018 = vpop.permute.xlu0 %2017
    %2020 = vrot.lane.b32.xlu0 %v1989, 49
    %v2021 = vpop.permute.xlu0 %2020
    %v2023 = vsel %vm78, %v2015, %v2018
    %v2024 = vsel %vm1147, %v2023, %v2021
    %v2025 = vsel %vm1149, %v2024, 0.0
    %2027 = vrot.lane.b32.xlu0 %v2025, 64
    %v2028 = vpop.permute.xlu0 %2027
    %2030 = vst.msk [vmem:[%s4 + $0x10] sm:$0xff] %vm1329, %v2028
    %vm2031 = vcmp.ne.f32.partialorder %v961, 1.0
    %v2032 = vsel %vm2031, 1.0, 0.0
    %2034 = vrot.lane.b32.xlu0 %v2032, 6
    %v2035 = vpop.permute.xlu0 %2034
    %v2037 = vmul.f32 %v31, %v2035
    %v2038 = vsub.f32 1.0, %v2037
    %2040 = vset.pattern.permute.xlu0 6
    %2041 = vperm.xlu0 %2040, %v2038
    %v2042 = vpop.permute.xlu0 %2041
    %v2044 = vmul.f32 %v961, %v2042
    %v2045 = vpack.c.bf16 %v2044, %v2044
    %2047 = vset.pattern.permute.xlu0 6
    %2048 = vperm.xlu0 %2047, %v2037
    %v2049 = vpop.permute.xlu0 %2048
    %v2051 = vmul.f32 %v2049, %v70
    %v2053 = vsel %vm78, %v2045, 0
    %2055 = vmatprep.subr.bf16.mxu0 0
    %2056 = vmatpush1.bf16.msra.mxu0 %v990
    %2057 = vmatprep.subr.bf16.mxu0 0
    %2058 = vmatpush1.bf16.msra.mxu0 0
    %2059 = vmatprep.subr.bf16.mxu0 0
    %2060 = vmatpush1.bf16.msra.mxu0 0
    %2061 = vmatprep.subr.bf16.mxu0 0
    %2062 = vmatpush1.bf16.msra.mxu0 0
    %2063 = vmatprep.subr.bf16.mxu0 0
    %2064 = vmatpush1.bf16.msra.mxu0 0
    %2065 = vmatprep.subr.bf16.mxu0 0
    %2066 = vmatpush1.bf16.msra.mxu0 0
    %2067 = vmatprep.subr.bf16.mxu0 0
    %2068 = vmatpush1.bf16.msra.mxu0 0
    %2069 = vmatprep.subr.bf16.mxu0 0
    %2070 = vmatpush1.bf16.msra.mxu0 0
    %2071 = vmatprep.subr.bf16.mxu0 0
    %2072 = vmatpush1.bf16.msra.mxu0 0
    %2073 = vmatprep.subr.bf16.mxu0 0
    %2074 = vmatpush1.bf16.msra.mxu0 0
    %2075 = vmatprep.subr.bf16.mxu0 0
    %2076 = vmatpush1.bf16.msra.mxu0 0
    %2077 = vmatprep.subr.bf16.mxu0 0
    %2078 = vmatpush1.bf16.msra.mxu0 0
    %2079 = vmatprep.subr.bf16.mxu0 0
    %2080 = vmatpush1.bf16.msra.mxu0 0
    %2081 = vmatprep.subr.bf16.mxu0 0
    %2082 = vmatpush1.bf16.msra.mxu0 0
    %2083 = vmatprep.subr.bf16.mxu0 0
    %2084 = vmatpush1.bf16.msra.mxu0 0
    %2085 = vmatprep.subr.bf16.mxu0 0
    %2086 = vmatpush1.bf16.msra.mxu0 0
    %2087 = vmatprep.mubr.bf16.mxu0 0
    %2088 = vmatmul.mubr.bf16.gmra.mrb[0].mxu0 %v2053
    %v2089 = vpop.f32.mrb[0].mxu0
    %v2090 = vadd.f32 %v2051, %v2089
    %v2091 = vpop.f32.mrb[0].mxu0
    %v2092 = vpop.f32.mrb[0].mxu0
    %v2093 = vpop.f32.mrb[0].mxu0
    %2094 = vdwg.mxu0
    %v2095 = vadd.f32 %v2090, %v66
    %v2096 = vadd.f32 %v2095, %v1989
    %v2097 = vxor.u32 %v2096, 2147483648
    %v2098 = vmul.f32 %v2097, 1.442695
    %v2099 = vpow.pop %v2098
    %v2100 = vadd.f32 %v2099, 1.0
    %v2101 = vrcp.pop %v2100
    %v2102 = vmul.f32 1.0, %v2101
    %2103 = vrot.lane.b32.xlu0 %v1989, 64
    %v2104 = vpop.permute.xlu0 %2103
    %v2106 = vmul.f32 %v2102, %v2104
    %2108 = vrot.lane.b32.xlu0 %v2106, 64
    %v2109 = vpop.permute.xlu0 %2108
    %v2111 = vadd.f32 %v2095, %v2109
    %v2112 = vtanh.pop %v2111
    %v2113 = vsub.f32 1.0, %v2102
    %2115 = vrot.lane.b32.xlu0 %v2112, 96
    %v2116 = vpop.permute.xlu0 %2115
    %v2118 = vmul.f32 %v2113, %v2116
    %v2119 = vmul.f32 %v2102, %v1946
    %v2120 = vadd.f32 %v2118, %v2119
    %v2121 = vpack.c.bf16 %v2120, %v2120
    %2123 = vrot.lane.b32.xlu0 %v2121, 96
    %v2124 = vpop.permute.xlu0 %2123
    %v2126 = vsel %vm135, %v2124, 0
    %2128 = vmatprep.subr.bf16.mxu0 0
    %2129 = vmatpush1.bf16.msra.mxu0 %v1074
    %2130 = vmatprep.subr.bf16.mxu0 0
    %2131 = vmatpush1.bf16.msra.mxu0 %v1075
    %2132 = vmatprep.subr.bf16.mxu0 0
    %2133 = vmatpush1.bf16.msra.mxu0 0
    %2134 = vmatprep.subr.bf16.mxu0 0
    %2135 = vmatpush1.bf16.msra.mxu0 0
    %2136 = vmatprep.subr.bf16.mxu0 0
    %2137 = vmatpush1.bf16.msra.mxu0 0
    %2138 = vmatprep.subr.bf16.mxu0 0
    %2139 = vmatpush1.bf16.msra.mxu0 0
    %2140 = vmatprep.subr.bf16.mxu0 0
    %2141 = vmatpush1.bf16.msra.mxu0 0
    %2142 = vmatprep.subr.bf16.mxu0 0
    %2143 = vmatpush1.bf16.msra.mxu0 0
    %2144 = vmatprep.subr.bf16.mxu0 0
    %2145 = vmatpush1.bf16.msra.mxu0 0
    %2146 = vmatprep.subr.bf16.mxu0 0
    %2147 = vmatpush1.bf16.msra.mxu0 0
    %2148 = vmatprep.subr.bf16.mxu0 0
    %2149 = vmatpush1.bf16.msra.mxu0 0
    %2150 = vmatprep.subr.bf16.mxu0 0
    %2151 = vmatpush1.bf16.msra.mxu0 0
    %2152 = vmatprep.subr.bf16.mxu0 0
    %2153 = vmatpush1.bf16.msra.mxu0 0
    %2154 = vmatprep.subr.bf16.mxu0 0
    %2155 = vmatpush1.bf16.msra.mxu0 0
    %2156 = vmatprep.subr.bf16.mxu0 0
    %2157 = vmatpush1.bf16.msra.mxu0 0
    %2158 = vmatprep.subr.bf16.mxu0 0
    %2159 = vmatpush1.bf16.msra.mxu0 0
    %2160 = vmatprep.mubr.bf16.mxu0 0
    %2161 = vmatmul.mubr.bf16.gmra.mrb[0].mxu0 %v2126
    %v2162 = vpop.f32.mrb[0].mxu0
    %v2163 = vadd.f32 %v62, %v2162
    %v2164 = vpop.f32.mrb[0].mxu0
    %v2165 = vpop.f32.mrb[0].mxu0
    %v2166 = vpop.f32.mrb[0].mxu0
    %2167 = vdwg.mxu0
    %2169 = vrot.lane.b32.xlu0 %v2163, 32
    %v2170 = vpop.permute.xlu0 %2169
    %v2172 = vsub.f32 %v30, %v2170
    %v2173 = vmul.f32 %v2172, %v2172
    %v2174 = vsel %vm78, %v2173, 0.0
    %2175 = vadd.xlane.f32.xlu0 %v2174
    %v2176 = vpop.xlane.xlu0 %2175
    %v2177 = vmul.f32 %v2176, 0.0625
    %2179 = vrot.lane.b32.xlu0 %v2012, 32
    %v2180 = vpop.permute.xlu0 %2179
    %v2182 = vmul.f32 %v2044, %v2180
    %2184 = vrot.lane.b32.xlu0 %v2182, 96
    %v2185 = vpop.permute.xlu0 %2184
    %v2187 = vadd.f32 %v2005, %v2185
    %v2188 = vadd.f32 %v2177, 0.07
    %v2189 = vmul.f32 %v2188, %v2182
    %2191 = vrot.lane.b32.xlu0 %v2189, 96
    %v2192 = vpop.permute.xlu0 %2191
    %v2194 = vadd.f32 %v2008, %v2192
    %v2195 = vmul.f32 %v2182, 7.0
    %2197 = vrot.lane.b32.xlu0 %v2195, 96
    %v2198 = vpop.permute.xlu0 %2197
    %v2200 = vadd.f32 %v2010, %v2198
    %v2201 = vsub.f32 1.0, %v2044
    %2203 = vrot.lane.b32.xlu0 %v2201, 96
    %v2204 = vpop.permute.xlu0 %2203
    %v2206 = vmul.f32 %v2012, %v2204
    %2207 = vrot.lane.b32.xlu0 %v2037, 10
    %v2208 = vpop.permute.xlu0 %2207
    %2210 = vrot.lane.b32.xlu0 %v2163, 49
    %v2211 = vpop.permute.xlu0 %2210
    %v2213 = vsel %vm78, %v2044, %v2208
    %v2214 = vsel %vm1147, %v2213, %v2211
    %v2215 = vsel %vm1149, %v2214, 0.0
    %2216 = vst.msk [vmem:[%s4 + $0x18] sm:$0xff] %vm1151, %v2215
    %v2217 = vmul.f32 %v2188, %v2206
    %v2218 = vadd.f32 %v2194, %v2217
    %v2219 = vmul.f32 %v2206, 7.0
    %v2220 = vadd.f32 %v2200, %v2219
    %v2221 = vadd.f32 %v2187, %v2206
    %2223 = vrot.lane.b32.xlu0 %v2218, 32
    %v2224 = vpop.permute.xlu0 %2223
    %2227 = vrot.lane.b32.xlu0 %v2220, 33
    %v2228 = vpop.permute.xlu0 %2227
    %2231 = vrot.lane.b32.xlu0 %v2221, 34
    %v2232 = vpop.permute.xlu0 %2231
    %vm2234 = vcmask 7168
    %v2235 = vsel %vm2234, %v2224, %v2228
    %vm2236 = vcmask 15360
    %v2237 = vsel %vm2236, %v2235, %v2232
    %vm2238 = vcmask 23552
    %v2239 = vsel %vm2238, %v2237, 0.0
    %2241 = vrot.lane.b32.xlu0 %v2239, 64
    %v2242 = vpop.permute.xlu0 %2241
    %2244 = vst.msk [vmem:[%s4 + $0x18] sm:$0xff] %vm1329, %v2242
    // Predicated region
    $region22: #{game_forward.1} parent=1 // pred_check
      _
    $region23: #{game_forward.1} parent=1 // pred_check_branch
      %2246 = sbr.rel (0) target = $region25
    $region24: #{game_forward.1} parent=1 // pred_region
      _
    $region25: #{game_forward.1} parent=1 // pred_fallthru
      _
    // Predicated region
    $region26: #{game_forward.1} parent=1 // pred_check
      _
    $region27: #{game_forward.1} parent=1 // pred_check_branch
      %2248 = sbr.rel (0) target = $region29
    $region28: #{game_forward.1} parent=1 // pred_region
      _
    $region29: #{game_forward.1} parent=1 // pred_fallthru
      _
    %2249 = vsyncpa [#allocation3], 1

</llo_original>
